<compile_context>
chip_gen: v5e
topology: v5e:2x2
jax: 0.10.0
libtpu: 0.0.40
codegen_flags: <defaults>
</compile_context>

<pallas_src>
import functools

import numpy as np
import jax
import jax.numpy as jnp
from jax.experimental import pallas as pl
from jax.experimental.pallas import tpu as pltpu


# ----------------------------------------------------------------------------
# Fused Pallas kernel (B images per grid step)
# ----------------------------------------------------------------------------
def lenet_kernel(p_ref, w1_ref, b1_ref, w2_ref, b2_ref,
                 af1_ref, bf1_ref, wf2_ref, bf2_ref, wf3_ref, bf3_ref,
                 act1_ref, act2_ref, logit_ref):
    """Whole LeNet32 forward for a block of B images (BW = B*256 lanes).

    p_ref    : (4, 75, BW) bf16  conv1 im2col patches; dim0 = pool tap (dy*2+dx),
                                 lane = b*256 + 14*i + j (i,j < 14; lanes with
                                 14*i+j >= 196 are zero padding)
    w1_ref   : (6, 75)     bf16  conv1 weight, cols = ci*25 + ky*5 + kx
    b1_ref   : (6, 1)      f32
    w2_ref   : (5, 16, 30) bf16  conv2 weight per ky; cols = kx*6 + cin
    b2_ref   : (16, 1)     f32
    af1_ref  : (2048, 120) bf16  FC1 weight on pool2 lanes (row = o*128+28u+2v),
                                 zeros on non-pooled lanes
    bf1_ref  : (1, 120)    f32
    wf2_ref  : (120, 84)   bf16 ; bf2_ref (1, 84)  f32
    wf3_ref  : (84, 128)   bf16 (cols zero-padded) ; bf3_ref (1, 128) f32
    act1_ref : (4, 6, BW)  f32   post-ReLU conv1 (pool-tap blocked lanes)
    act2_ref : (16, BW)    f32   post-ReLU conv2 (lane = b*256 + 14a + c)
    logit_ref: (1, B, 128) f32   logits, lane-padded to 128
    """
    BW = p_ref.shape[2]
    B = BW // 256

    # ---- conv1 + bias + ReLU: one (6,75)@(75,BW) dot per pooling tap ---------
    pooled = None
    for t in range(4):
        y = jnp.dot(w1_ref[...], p_ref[t], preferred_element_type=jnp.float32)
        y = jnp.maximum(y + b1_ref[...], 0.0)                       # (6, BW) f32
        act1_ref[t] = y.astype(act1_ref.dtype)
        pooled = y if pooled is None else jnp.maximum(pooled, y)    # maxpool1

    # 128-lane zero tail so conv2's shifted slices stay in range for the last
    # image; cast once to bf16 for the MXU.
    p1 = jnp.concatenate(
        [pooled.astype(jnp.bfloat16), jnp.zeros((6, 128), jnp.bfloat16)], axis=1)

    # ---- conv2: 5 dots (16,30)@(30,BW); the 5 kx taps of each kernel row are
    #      stacked on sublanes, all B images batched on lanes.  Partial results
    #      are summed at the end (no serial accumulate chain between matmuls). --
    parts = []
    for ky in range(5):
        base = 14 * ky
        rhs = jnp.concatenate(
            [p1[:, base + kx: base + kx + BW] for kx in range(5)], axis=0)  # (30,BW)
        parts.append(jnp.dot(w2_ref[ky], rhs, preferred_element_type=jnp.float32))
    y2 = parts[0] + parts[1] + parts[2] + parts[3] + parts[4] + b2_ref[...]
    y2 = jnp.maximum(y2, 0.0)                                       # (16, BW) f32
    # NOTE: per-image lanes with column>=10 / 14a+c>=140 hold finite garbage;
    # they are sliced away XLA-side and zeroed in FC1 by the expanded weight.
    act2_ref[...] = y2.astype(act2_ref.dtype)

    # ---- maxpool2: max of 4 shifted views; pooled (u,v) -> lane b*256+28u+2v --
    wm = BW - 128
    m2 = jnp.maximum(jnp.maximum(y2[:, 0:wm], y2[:, 1:wm + 1]),
                     jnp.maximum(y2[:, 14:wm + 14], y2[:, 15:wm + 15]))  # (16, wm)

    # ---- FC head (M = B): build the (B, 2048) left operand; row b is image b's
    #      16x128 pooled tile laid out channel-major.  Only aligned slices and
    #      concats are used (no reshape across the tiled dims).
    rows = []
    for b in range(B):
        base = b * 256
        rows.append(jnp.concatenate(
            [m2[o:o + 1, base:base + 128] for o in range(16)], axis=1))  # (1,2048)
    lhs = jnp.concatenate(rows, axis=0).astype(jnp.bfloat16)             # (B,2048)

    h = jnp.dot(lhs, af1_ref[...], preferred_element_type=jnp.float32) + bf1_ref[...]
    h = jnp.maximum(h, 0.0).astype(jnp.bfloat16)
    h = jnp.dot(h, wf2_ref[...], preferred_element_type=jnp.float32) + bf2_ref[...]
    h = jnp.maximum(h, 0.0).astype(jnp.bfloat16)
    out = jnp.dot(h, wf3_ref[...], preferred_element_type=jnp.float32) + bf3_ref[...]
    logit_ref[0] = out.astype(logit_ref.dtype)                           # (B,128)


# ----------------------------------------------------------------------------
# JAX-side prep (static weight permutations + conv1 patch matrix)
# ----------------------------------------------------------------------------
def _build_patches(x, k=5):
    """x: (N,3,32,32) -> (4, 75, N*256) pool-tap-blocked conv1 im2col.

    out[dy*2+dx, ci*25+ky*5+kx, n*256 + 14*i + j] = x[n, ci, 2i+dy+ky, 2j+dx+kx]
    (columns with 14*i+j >= 196 are zero).
    """
    n, c, h, w = x.shape
    oh, ow = h - k + 1, w - k + 1            # 28, 28
    ph, pw = oh // 2, ow // 2                # 14, 14
    wins = jnp.stack([x[:, :, ky:ky + oh, kx:kx + ow]
                      for ky in range(k) for kx in range(k)], axis=2)  # (N,C,25,28,28)
    wins = wins.reshape(n, c * k * k, ph, 2, pw, 2)                    # (N,75,i,dy,j,dx)
    wins = wins.transpose(3, 5, 1, 0, 2, 4)                            # (dy,dx,75,N,i,j)
    wins = wins.reshape(4, c * k * k, n, ph * pw)                      # (4,75,N,196)
    wins = jnp.pad(wins, ((0, 0), (0, 0), (0, 0), (0, 256 - ph * pw)))
    return wins.reshape(4, c * k * k, n * 256)                         # (4,75,N*256)


def _build_expanded_fc1(w_f1):
    """(120, 400) -> (2048, 120): FC1 weight scattered onto pool2 lanes.

    Row index = o*128 + 28u + 2v holds w_f1[:, o*25 + 5u + v]; other rows zero.
    """
    a = w_f1.reshape(120, 16, 5, 5).transpose(1, 2, 3, 0)   # (16,5,5,120) [o,u,v,k]
    u = jnp.arange(5)
    v = jnp.arange(5)
    lanes = (28 * u[:, None] + 2 * v[None, :]).reshape(25)  # distinct, all < 128
    out = jnp.zeros((16, 128, 120), w_f1.dtype)
    out = out.at[:, lanes, :].set(a.reshape(16, 25, 120))
    return out.reshape(16 * 128, 120)


def _lenet32_pallas(patches, w1, b1, w2g, b2, af1, bf1, wf2, bf2, wf3, bf3, block_b):
    lanes = patches.shape[2]
    n_pad = lanes // 256
    steps = n_pad // block_b
    bw = block_b * 256
    return pl.pallas_call(
        lenet_kernel,
        out_shape=(
            jax.ShapeDtypeStruct((4, 6, lanes), jnp.float32),
            jax.ShapeDtypeStruct((16, lanes), jnp.float32),
            jax.ShapeDtypeStruct((steps, block_b, 128), jnp.float32),
        ),
        grid_spec=pltpu.PrefetchScalarGridSpec(
            num_scalar_prefetch=0,
            grid=(steps,),
            in_specs=[
                pl.BlockSpec((4, 75, bw), lambda s: (0, 0, s)),       # patches (per block)
                pl.BlockSpec((6, 75), lambda s: (0, 0)),              # conv1 W (resident)
                pl.BlockSpec((6, 1), lambda s: (0, 0)),
                pl.BlockSpec((5, 16, 30), lambda s: (0, 0, 0)),       # conv2 W (resident)
                pl.BlockSpec((16, 1), lambda s: (0, 0)),
                pl.BlockSpec((2048, 120), lambda s: (0, 0)),          # expanded FC1 W
                pl.BlockSpec((1, 120), lambda s: (0, 0)),
                pl.BlockSpec((120, 84), lambda s: (0, 0)),
                pl.BlockSpec((1, 84), lambda s: (0, 0)),
                pl.BlockSpec((84, 128), lambda s: (0, 0)),
                pl.BlockSpec((1, 128), lambda s: (0, 0)),
            ],
            out_specs=[
                pl.BlockSpec((4, 6, bw), lambda s: (0, 0, s)),
                pl.BlockSpec((16, bw), lambda s: (0, s)),
                pl.BlockSpec((1, block_b, 128), lambda s: (s, 0, 0)),
            ],
        ),
        compiler_params=pltpu.CompilerParams(
            dimension_semantics=("parallel",),
            vmem_limit_bytes=32 * 1024 * 1024,   # per-step working set is ~5 MB
        ),
    )(patches, w1, b1, w2g, b2, af1, bf1, wf2, bf2, wf3, bf3)


def lenet32_forward(x, params, block_b=8):
    """x: (N, 3, 32, 32) float32.  Returns (logits, activation1, activation2)."""
    n = x.shape[0]
    (w_c1, b_c1, w_c2, b_c2, w_f1, b_f1, w_f2, b_f2, w_f3, b_f3) = params
    n_classes = w_f3.shape[0]
    assert n_classes <= 128

    n_pad = ((n + block_b - 1) // block_b) * block_b
    if n_pad != n:
        x = jnp.pad(x, ((0, n_pad - n), (0, 0), (0, 0), (0, 0)))

    # bf16 at the kernel boundary (halves patch DMA, 2x MXU); f32 accumulation
    # and f32 biases inside the kernel.
    patches = _build_patches(x, 5).astype(jnp.bfloat16)               # (4,75,n_pad*256)
    w1 = w_c1.reshape(6, 75).astype(jnp.bfloat16)
    b1 = b_c1.reshape(6, 1).astype(jnp.float32)
    w2g = jnp.transpose(w_c2, (2, 0, 3, 1)).reshape(5, 16, 30).astype(jnp.bfloat16)
    b2 = b_c2.reshape(16, 1).astype(jnp.float32)
    af1 = _build_expanded_fc1(w_f1).astype(jnp.bfloat16)              # (2048,120)
    bf1 = b_f1.reshape(1, -1).astype(jnp.float32)
    wf2 = w_f2.T.astype(jnp.bfloat16)
    bf2 = b_f2.reshape(1, -1).astype(jnp.float32)
    wf3 = jnp.pad(w_f3.T, ((0, 0), (0, 128 - n_classes))).astype(jnp.bfloat16)
    bf3 = jnp.pad(b_f3.reshape(1, -1),
                  ((0, 0), (0, 128 - n_classes))).astype(jnp.float32)

    act1_raw, act2_raw, logits_raw = _lenet32_pallas(
        patches, w1, b1, w2g, b2, af1, bf1, wf2, bf2, wf3, bf3, block_b)

    # activation1: (4,6,n_pad*256) pool-tap-blocked -> NCHW (N,6,28,28)
    a1 = act1_raw.reshape(4, 6, n_pad, 256)[:, :, :n, :196]
    a1 = a1.reshape(2, 2, 6, n, 14, 14).transpose(3, 2, 4, 0, 5, 1)   # (N,6,i,dy,j,dx)
    activation1 = a1.reshape(n, 6, 28, 28)

    # activation2: (16,n_pad*256) lanes (=14a+c) -> NCHW (N,16,10,10)
    a2 = act2_raw.reshape(16, n_pad, 256)[:, :n, :140]
    activation2 = a2.reshape(16, n, 10, 14)[:, :, :, :10].transpose(1, 0, 2, 3)

    logits = logits_raw.reshape(n_pad, 128)[:n, :n_classes]
    return logits, activation1, activation2


# ----------------------------------------------------------------------------
# Pure-JAX reference (numerical sanity check)
# ----------------------------------------------------------------------------
def lenet32_reference(x, params):
    (w_c1, b_c1, w_c2, b_c2, w_f1, b_f1, w_f2, b_f2, w_f3, b_f3) = params
    hp = jax.lax.Precision.HIGHEST

    def conv(t, w, b):
        y = jax.lax.conv_general_dilated(
            t, w, (1, 1), "VALID",
            dimension_numbers=("NCHW", "OIHW", "NCHW"), precision=hp)
        return y + b.reshape(1, -1, 1, 1)

    def maxpool(t):
        return jax.lax.reduce_window(t, -jnp.inf, jax.lax.max,
                                     (1, 1, 2, 2), (1, 1, 2, 2), "VALID")

    a1 = jax.nn.relu(conv(x, w_c1, b_c1))
    p1 = maxpool(a1)
    a2 = jax.nn.relu(conv(p1, w_c2, b_c2))
    p2 = maxpool(a2)
    flat = p2.reshape(x.shape[0], -1)
    h = jax.nn.relu(jnp.dot(flat, w_f1.T, precision=hp) + b_f1)
    h = jax.nn.relu(jnp.dot(h, w_f2.T, precision=hp) + b_f2)
    logits = jnp.dot(h, w_f3.T, precision=hp) + b_f3
    return logits, a1, a2


def init_params(key, n_classes):
    ks = jax.random.split(key, 10)

    def rnd(k, shape, scale):
        return jax.random.normal(k, shape, dtype=jnp.float32) * scale

    w_c1 = rnd(ks[0], (6, 3, 5, 5), 0.1);     b_c1 = rnd(ks[1], (6,), 0.05)
    w_c2 = rnd(ks[2], (16, 6, 5, 5), 0.1);    b_c2 = rnd(ks[3], (16,), 0.05)
    w_f1 = rnd(ks[4], (120, 400), 0.05);      b_f1 = rnd(ks[5], (120,), 0.05)
    w_f2 = rnd(ks[6], (84, 120), 0.05);       b_f2 = rnd(ks[7], (84,), 0.05)
    w_f3 = rnd(ks[8], (n_classes, 84), 0.05); b_f3 = rnd(ks[9], (n_classes,), 0.05)
    return (w_c1, b_c1, w_c2, b_c2, w_f1, b_f1, w_f2, b_f2, w_f3, b_f3)


if __name__ == "__main__":
    n_classes = 10
    batch = 6        # exercises batch padding (6 -> 8) and a 2-step grid
    block_b = 4      # images per grid step

    key = jax.random.PRNGKey(0)
    k_x, k_p = jax.random.split(key)
    x = jax.random.normal(k_x, (batch, 3, 32, 32), dtype=jnp.float32)
    params = init_params(k_p, n_classes)

    fwd = jax.jit(functools.partial(lenet32_forward, block_b=block_b))
    logits, act1, act2 = fwd(x, params)
    jax.block_until_ready((logits, act1, act2))

    assert logits.shape == (batch, n_classes)
    assert act1.shape == (batch, 6, 28, 28)
    assert act2.shape == (batch, 16, 10, 10)

    ref_logits, ref_a1, ref_a2 = jax.jit(lenet32_reference)(x, params)
    np.testing.assert_allclose(np.asarray(act1), np.asarray(ref_a1), rtol=5e-2, atol=5e-2)
    np.testing.assert_allclose(np.asarray(act2), np.asarray(ref_a2), rtol=5e-2, atol=5e-2)
    np.testing.assert_allclose(np.asarray(logits), np.asarray(ref_logits), rtol=5e-2, atol=5e-2)

    print("KERNEL_OK")
</pallas_src>

<mosaic_0001>
module attributes {stable_mosaic.version = 11 : i64} {
  func.func @lenet_kernel(%arg0: i32, %arg1: memref<4x75x1024xbf16, #tpu.memory_space<vmem>>, %arg2: memref<6x75xbf16, #tpu.memory_space<vmem>>, %arg3: memref<6x1xf32, #tpu.memory_space<vmem>>, %arg4: memref<5x16x30xbf16, #tpu.memory_space<vmem>>, %arg5: memref<16x1xf32, #tpu.memory_space<vmem>>, %arg6: memref<2048x120xbf16, #tpu.memory_space<vmem>>, %arg7: memref<1x120xf32, #tpu.memory_space<vmem>>, %arg8: memref<120x84xbf16, #tpu.memory_space<vmem>>, %arg9: memref<1x84xf32, #tpu.memory_space<vmem>>, %arg10: memref<84x128xbf16, #tpu.memory_space<vmem>>, %arg11: memref<1x128xf32, #tpu.memory_space<vmem>>, %arg12: memref<4x6x1024xf32, #tpu.memory_space<vmem>>, %arg13: memref<16x1024xf32, #tpu.memory_space<vmem>>, %arg14: memref<1x4x128xf32, #tpu.memory_space<vmem>>) attributes {dimension_semantics = [#tpu.dimension_semantics<parallel>], iteration_bounds = array<i64: 2>, scalar_prefetch = 0 : i64, scratch_operands = 0 : i64, tpu.core_type = #tpu.core_type<tc>, window_params = [{transform_indices = @transform_0, window_bounds = array<i64: 4, 75, 1024>}, {pipeline_mode = #tpu.pipeline_mode<synchronous>, transform_indices = @transform_1, window_bounds = array<i64: 6, 75>}, {pipeline_mode = #tpu.pipeline_mode<synchronous>, transform_indices = @transform_2, window_bounds = array<i64: 6, 1>}, {pipeline_mode = #tpu.pipeline_mode<synchronous>, transform_indices = @transform_3, window_bounds = array<i64: 5, 16, 30>}, {pipeline_mode = #tpu.pipeline_mode<synchronous>, transform_indices = @transform_4, window_bounds = array<i64: 16, 1>}, {pipeline_mode = #tpu.pipeline_mode<synchronous>, transform_indices = @transform_5, window_bounds = array<i64: 2048, 120>}, {pipeline_mode = #tpu.pipeline_mode<synchronous>, transform_indices = @transform_6, window_bounds = array<i64: 1, 120>}, {pipeline_mode = #tpu.pipeline_mode<synchronous>, transform_indices = @transform_7, window_bounds = array<i64: 120, 84>}, {pipeline_mode = #tpu.pipeline_mode<synchronous>, transform_indices = @transform_8, window_bounds = array<i64: 1, 84>}, {pipeline_mode = #tpu.pipeline_mode<synchronous>, transform_indices = @transform_9, window_bounds = array<i64: 84, 128>}, {pipeline_mode = #tpu.pipeline_mode<synchronous>, transform_indices = @transform_10, window_bounds = array<i64: 1, 128>}, {transform_indices = @transform_11, window_bounds = array<i64: 4, 6, 1024>}, {transform_indices = @transform_12, window_bounds = array<i64: 16, 1024>}, {transform_indices = @transform_13, window_bounds = array<i64: 1, 4, 128>}]} {
    %c0 = arith.constant 0 : index
    %c0_0 = arith.constant 0 : index
    %0 = vector.load %arg2[%c0, %c0_0] : memref<6x75xbf16, #tpu.memory_space<vmem>>, vector<6x75xbf16>
    %c0_1 = arith.constant 0 : index
    %c0_2 = arith.constant 0 : index
    %c0_3 = arith.constant 0 : index
    %1 = vector.load %arg1[%c0_1, %c0_2, %c0_3] : memref<4x75x1024xbf16, #tpu.memory_space<vmem>>, vector<1x75x1024xbf16>
    %2 = vector.shape_cast %1 : vector<1x75x1024xbf16> to vector<75x1024xbf16>
    %cst = arith.constant dense<0.000000e+00> : vector<6x1024xf32>
    %3 = tpu.matmul %0, %2, %cst {dimension_numbers = #tpu.dot_dimension_numbers<[1], [0], [0], [1], [0, 0, 1, 1], [], []>} : vector<6x75xbf16>, vector<75x1024xbf16>, vector<6x1024xf32> -> vector<6x1024xf32>
    %c0_4 = arith.constant 0 : index
    %c0_5 = arith.constant 0 : index
    %4 = vector.load %arg3[%c0_4, %c0_5] : memref<6x1xf32, #tpu.memory_space<vmem>>, vector<6x1xf32>
    %5 = vector.broadcast %4 : vector<6x1xf32> to vector<6x1024xf32>
    %6 = arith.addf %3, %5 : vector<6x1024xf32>
    %cst_6 = arith.constant 0.000000e+00 : f32
    %7 = vector.broadcast %cst_6 : f32 to vector<6x1024xf32>
    %8 = arith.maximumf %6, %7 : vector<6x1024xf32>
    %c0_7 = arith.constant 0 : index
    %c0_8 = arith.constant 0 : index
    %c0_9 = arith.constant 0 : index
    %9 = vector.load %arg12[%c0_7, %c0_8, %c0_9] : memref<4x6x1024xf32, #tpu.memory_space<vmem>>, vector<1x6x1024xf32>
    %10 = vector.shape_cast %9 : vector<1x6x1024xf32> to vector<6x1024xf32>
    %11 = vector.shape_cast %8 : vector<6x1024xf32> to vector<1x6x1024xf32>
    tpu.vector_store %arg12[%c0_7, %c0_8, %c0_9], %11 {strides = array<i32>} : memref<4x6x1024xf32, #tpu.memory_space<vmem>>, vector<1x6x1024xf32>,
    %c0_10 = arith.constant 0 : index
    %c0_11 = arith.constant 0 : index
    %12 = vector.load %arg2[%c0_10, %c0_11] : memref<6x75xbf16, #tpu.memory_space<vmem>>, vector<6x75xbf16>
    %c1 = arith.constant 1 : index
    %c0_12 = arith.constant 0 : index
    %c0_13 = arith.constant 0 : index
    %13 = vector.load %arg1[%c1, %c0_12, %c0_13] : memref<4x75x1024xbf16, #tpu.memory_space<vmem>>, vector<1x75x1024xbf16>
    %14 = vector.shape_cast %13 : vector<1x75x1024xbf16> to vector<75x1024xbf16>
    %cst_14 = arith.constant dense<0.000000e+00> : vector<6x1024xf32>
    %15 = tpu.matmul %12, %14, %cst_14 {dimension_numbers = #tpu.dot_dimension_numbers<[1], [0], [0], [1], [0, 0, 1, 1], [], []>} : vector<6x75xbf16>, vector<75x1024xbf16>, vector<6x1024xf32> -> vector<6x1024xf32>
    %c0_15 = arith.constant 0 : index
    %c0_16 = arith.constant 0 : index
    %16 = vector.load %arg3[%c0_15, %c0_16] : memref<6x1xf32, #tpu.memory_space<vmem>>, vector<6x1xf32>
    %17 = vector.broadcast %16 : vector<6x1xf32> to vector<6x1024xf32>
    %18 = arith.addf %15, %17 : vector<6x1024xf32>
    %cst_17 = arith.constant 0.000000e+00 : f32
    %19 = vector.broadcast %cst_17 : f32 to vector<6x1024xf32>
    %20 = arith.maximumf %18, %19 : vector<6x1024xf32>
    %c1_18 = arith.constant 1 : index
    %c0_19 = arith.constant 0 : index
    %c0_20 = arith.constant 0 : index
    %21 = vector.load %arg12[%c1_18, %c0_19, %c0_20] : memref<4x6x1024xf32, #tpu.memory_space<vmem>>, vector<1x6x1024xf32>
    %22 = vector.shape_cast %21 : vector<1x6x1024xf32> to vector<6x1024xf32>
    %23 = vector.shape_cast %20 : vector<6x1024xf32> to vector<1x6x1024xf32>
    tpu.vector_store %arg12[%c1_18, %c0_19, %c0_20], %23 {strides = array<i32>} : memref<4x6x1024xf32, #tpu.memory_space<vmem>>, vector<1x6x1024xf32>,
    %24 = arith.maximumf %8, %20 : vector<6x1024xf32>
    %c0_21 = arith.constant 0 : index
    %c0_22 = arith.constant 0 : index
    %25 = vector.load %arg2[%c0_21, %c0_22] : memref<6x75xbf16, #tpu.memory_space<vmem>>, vector<6x75xbf16>
    %c2 = arith.constant 2 : index
    %c0_23 = arith.constant 0 : index
    %c0_24 = arith.constant 0 : index
    %26 = vector.load %arg1[%c2, %c0_23, %c0_24] : memref<4x75x1024xbf16, #tpu.memory_space<vmem>>, vector<1x75x1024xbf16>
    %27 = vector.shape_cast %26 : vector<1x75x1024xbf16> to vector<75x1024xbf16>
    %cst_25 = arith.constant dense<0.000000e+00> : vector<6x1024xf32>
    %28 = tpu.matmul %25, %27, %cst_25 {dimension_numbers = #tpu.dot_dimension_numbers<[1], [0], [0], [1], [0, 0, 1, 1], [], []>} : vector<6x75xbf16>, vector<75x1024xbf16>, vector<6x1024xf32> -> vector<6x1024xf32>
    %c0_26 = arith.constant 0 : index
    %c0_27 = arith.constant 0 : index
    %29 = vector.load %arg3[%c0_26, %c0_27] : memref<6x1xf32, #tpu.memory_space<vmem>>, vector<6x1xf32>
    %30 = vector.broadcast %29 : vector<6x1xf32> to vector<6x1024xf32>
    %31 = arith.addf %28, %30 : vector<6x1024xf32>
    %cst_28 = arith.constant 0.000000e+00 : f32
    %32 = vector.broadcast %cst_28 : f32 to vector<6x1024xf32>
    %33 = arith.maximumf %31, %32 : vector<6x1024xf32>
    %c2_29 = arith.constant 2 : index
    %c0_30 = arith.constant 0 : index
    %c0_31 = arith.constant 0 : index
    %34 = vector.load %arg12[%c2_29, %c0_30, %c0_31] : memref<4x6x1024xf32, #tpu.memory_space<vmem>>, vector<1x6x1024xf32>
    %35 = vector.shape_cast %34 : vector<1x6x1024xf32> to vector<6x1024xf32>
    %36 = vector.shape_cast %33 : vector<6x1024xf32> to vector<1x6x1024xf32>
    tpu.vector_store %arg12[%c2_29, %c0_30, %c0_31], %36 {strides = array<i32>} : memref<4x6x1024xf32, #tpu.memory_space<vmem>>, vector<1x6x1024xf32>,
    %37 = arith.maximumf %24, %33 : vector<6x1024xf32>
    %c0_32 = arith.constant 0 : index
    %c0_33 = arith.constant 0 : index
    %38 = vector.load %arg2[%c0_32, %c0_33] : memref<6x75xbf16, #tpu.memory_space<vmem>>, vector<6x75xbf16>
    %c3 = arith.constant 3 : index
    %c0_34 = arith.constant 0 : index
    %c0_35 = arith.constant 0 : index
    %39 = vector.load %arg1[%c3, %c0_34, %c0_35] : memref<4x75x1024xbf16, #tpu.memory_space<vmem>>, vector<1x75x1024xbf16>
    %40 = vector.shape_cast %39 : vector<1x75x1024xbf16> to vector<75x1024xbf16>
    %cst_36 = arith.constant dense<0.000000e+00> : vector<6x1024xf32>
    %41 = tpu.matmul %38, %40, %cst_36 {dimension_numbers = #tpu.dot_dimension_numbers<[1], [0], [0], [1], [0, 0, 1, 1], [], []>} : vector<6x75xbf16>, vector<75x1024xbf16>, vector<6x1024xf32> -> vector<6x1024xf32>
    %c0_37 = arith.constant 0 : index
    %c0_38 = arith.constant 0 : index
    %42 = vector.load %arg3[%c0_37, %c0_38] : memref<6x1xf32, #tpu.memory_space<vmem>>, vector<6x1xf32>
    %43 = vector.broadcast %42 : vector<6x1xf32> to vector<6x1024xf32>
    %44 = arith.addf %41, %43 : vector<6x1024xf32>
    %cst_39 = arith.constant 0.000000e+00 : f32
    %45 = vector.broadcast %cst_39 : f32 to vector<6x1024xf32>
    %46 = arith.maximumf %44, %45 : vector<6x1024xf32>
    %c3_40 = arith.constant 3 : index
    %c0_41 = arith.constant 0 : index
    %c0_42 = arith.constant 0 : index
    %47 = vector.load %arg12[%c3_40, %c0_41, %c0_42] : memref<4x6x1024xf32, #tpu.memory_space<vmem>>, vector<1x6x1024xf32>
    %48 = vector.shape_cast %47 : vector<1x6x1024xf32> to vector<6x1024xf32>
    %49 = vector.shape_cast %46 : vector<6x1024xf32> to vector<1x6x1024xf32>
    tpu.vector_store %arg12[%c3_40, %c0_41, %c0_42], %49 {strides = array<i32>} : memref<4x6x1024xf32, #tpu.memory_space<vmem>>, vector<1x6x1024xf32>,
    %50 = arith.maximumf %37, %46 : vector<6x1024xf32>
    %51 = arith.truncf %50 : vector<6x1024xf32> to vector<6x1024xbf16>
    %cst_43 = arith.constant 0.000000e+00 : bf16
    %52 = vector.broadcast %cst_43 : bf16 to vector<6x128xbf16>
    %53 = tpu.concatenate %51, %52 in 1 : vector<6x1024xbf16>, vector<6x128xbf16> -> vector<6x1152xbf16>
    %54 = vector.extract_strided_slice %53 {offsets = [0, 0], sizes = [6, 1024], strides = [1, 1]} : vector<6x1152xbf16> to vector<6x1024xbf16>
    %55 = vector.extract_strided_slice %53 {offsets = [0, 1], sizes = [6, 1024], strides = [1, 1]} : vector<6x1152xbf16> to vector<6x1024xbf16>
    %56 = vector.extract_strided_slice %53 {offsets = [0, 2], sizes = [6, 1024], strides = [1, 1]} : vector<6x1152xbf16> to vector<6x1024xbf16>
    %57 = vector.extract_strided_slice %53 {offsets = [0, 3], sizes = [6, 1024], strides = [1, 1]} : vector<6x1152xbf16> to vector<6x1024xbf16>
    %58 = vector.extract_strided_slice %53 {offsets = [0, 4], sizes = [6, 1024], strides = [1, 1]} : vector<6x1152xbf16> to vector<6x1024xbf16>
    %59 = tpu.concatenate %54, %55, %56, %57, %58 in 0 : vector<6x1024xbf16>, vector<6x1024xbf16>, vector<6x1024xbf16>, vector<6x1024xbf16>, vector<6x1024xbf16> -> vector<30x1024xbf16>
    %c0_44 = arith.constant 0 : index
    %c0_45 = arith.constant 0 : index
    %c0_46 = arith.constant 0 : index
    %60 = vector.load %arg4[%c0_44, %c0_45, %c0_46] : memref<5x16x30xbf16, #tpu.memory_space<vmem>>, vector<1x16x30xbf16>
    %61 = vector.shape_cast %60 : vector<1x16x30xbf16> to vector<16x30xbf16>
    %cst_47 = arith.constant dense<0.000000e+00> : vector<16x1024xf32>
    %62 = tpu.matmul %61, %59, %cst_47 {dimension_numbers = #tpu.dot_dimension_numbers<[1], [0], [0], [1], [0, 0, 1, 1], [], []>} : vector<16x30xbf16>, vector<30x1024xbf16>, vector<16x1024xf32> -> vector<16x1024xf32>
    %63 = vector.extract_strided_slice %53 {offsets = [0, 14], sizes = [6, 1024], strides = [1, 1]} : vector<6x1152xbf16> to vector<6x1024xbf16>
    %64 = vector.extract_strided_slice %53 {offsets = [0, 15], sizes = [6, 1024], strides = [1, 1]} : vector<6x1152xbf16> to vector<6x1024xbf16>
    %65 = vector.extract_strided_slice %53 {offsets = [0, 16], sizes = [6, 1024], strides = [1, 1]} : vector<6x1152xbf16> to vector<6x1024xbf16>
    %66 = vector.extract_strided_slice %53 {offsets = [0, 17], sizes = [6, 1024], strides = [1, 1]} : vector<6x1152xbf16> to vector<6x1024xbf16>
    %67 = vector.extract_strided_slice %53 {offsets = [0, 18], sizes = [6, 1024], strides = [1, 1]} : vector<6x1152xbf16> to vector<6x1024xbf16>
    %68 = tpu.concatenate %63, %64, %65, %66, %67 in 0 : vector<6x1024xbf16>, vector<6x1024xbf16>, vector<6x1024xbf16>, vector<6x1024xbf16>, vector<6x1024xbf16> -> vector<30x1024xbf16>
    %c1_48 = arith.constant 1 : index
    %c0_49 = arith.constant 0 : index
    %c0_50 = arith.constant 0 : index
    %69 = vector.load %arg4[%c1_48, %c0_49, %c0_50] : memref<5x16x30xbf16, #tpu.memory_space<vmem>>, vector<1x16x30xbf16>
    %70 = vector.shape_cast %69 : vector<1x16x30xbf16> to vector<16x30xbf16>
    %cst_51 = arith.constant dense<0.000000e+00> : vector<16x1024xf32>
    %71 = tpu.matmul %70, %68, %cst_51 {dimension_numbers = #tpu.dot_dimension_numbers<[1], [0], [0], [1], [0, 0, 1, 1], [], []>} : vector<16x30xbf16>, vector<30x1024xbf16>, vector<16x1024xf32> -> vector<16x1024xf32>
    %72 = vector.extract_strided_slice %53 {offsets = [0, 28], sizes = [6, 1024], strides = [1, 1]} : vector<6x1152xbf16> to vector<6x1024xbf16>
    %73 = vector.extract_strided_slice %53 {offsets = [0, 29], sizes = [6, 1024], strides = [1, 1]} : vector<6x1152xbf16> to vector<6x1024xbf16>
    %74 = vector.extract_strided_slice %53 {offsets = [0, 30], sizes = [6, 1024], strides = [1, 1]} : vector<6x1152xbf16> to vector<6x1024xbf16>
    %75 = vector.extract_strided_slice %53 {offsets = [0, 31], sizes = [6, 1024], strides = [1, 1]} : vector<6x1152xbf16> to vector<6x1024xbf16>
    %76 = vector.extract_strided_slice %53 {offsets = [0, 32], sizes = [6, 1024], strides = [1, 1]} : vector<6x1152xbf16> to vector<6x1024xbf16>
    %77 = tpu.concatenate %72, %73, %74, %75, %76 in 0 : vector<6x1024xbf16>, vector<6x1024xbf16>, vector<6x1024xbf16>, vector<6x1024xbf16>, vector<6x1024xbf16> -> vector<30x1024xbf16>
    %c2_52 = arith.constant 2 : index
    %c0_53 = arith.constant 0 : index
    %c0_54 = arith.constant 0 : index
    %78 = vector.load %arg4[%c2_52, %c0_53, %c0_54] : memref<5x16x30xbf16, #tpu.memory_space<vmem>>, vector<1x16x30xbf16>
    %79 = vector.shape_cast %78 : vector<1x16x30xbf16> to vector<16x30xbf16>
    %cst_55 = arith.constant dense<0.000000e+00> : vector<16x1024xf32>
    %80 = tpu.matmul %79, %77, %cst_55 {dimension_numbers = #tpu.dot_dimension_numbers<[1], [0], [0], [1], [0, 0, 1, 1], [], []>} : vector<16x30xbf16>, vector<30x1024xbf16>, vector<16x1024xf32> -> vector<16x1024xf32>
    %81 = vector.extract_strided_slice %53 {offsets = [0, 42], sizes = [6, 1024], strides = [1, 1]} : vector<6x1152xbf16> to vector<6x1024xbf16>
    %82 = vector.extract_strided_slice %53 {offsets = [0, 43], sizes = [6, 1024], strides = [1, 1]} : vector<6x1152xbf16> to vector<6x1024xbf16>
    %83 = vector.extract_strided_slice %53 {offsets = [0, 44], sizes = [6, 1024], strides = [1, 1]} : vector<6x1152xbf16> to vector<6x1024xbf16>
    %84 = vector.extract_strided_slice %53 {offsets = [0, 45], sizes = [6, 1024], strides = [1, 1]} : vector<6x1152xbf16> to vector<6x1024xbf16>
    %85 = vector.extract_strided_slice %53 {offsets = [0, 46], sizes = [6, 1024], strides = [1, 1]} : vector<6x1152xbf16> to vector<6x1024xbf16>
    %86 = tpu.concatenate %81, %82, %83, %84, %85 in 0 : vector<6x1024xbf16>, vector<6x1024xbf16>, vector<6x1024xbf16>, vector<6x1024xbf16>, vector<6x1024xbf16> -> vector<30x1024xbf16>
    %c3_56 = arith.constant 3 : index
    %c0_57 = arith.constant 0 : index
    %c0_58 = arith.constant 0 : index
    %87 = vector.load %arg4[%c3_56, %c0_57, %c0_58] : memref<5x16x30xbf16, #tpu.memory_space<vmem>>, vector<1x16x30xbf16>
    %88 = vector.shape_cast %87 : vector<1x16x30xbf16> to vector<16x30xbf16>
    %cst_59 = arith.constant dense<0.000000e+00> : vector<16x1024xf32>
    %89 = tpu.matmul %88, %86, %cst_59 {dimension_numbers = #tpu.dot_dimension_numbers<[1], [0], [0], [1], [0, 0, 1, 1], [], []>} : vector<16x30xbf16>, vector<30x1024xbf16>, vector<16x1024xf32> -> vector<16x1024xf32>
    %90 = vector.extract_strided_slice %53 {offsets = [0, 56], sizes = [6, 1024], strides = [1, 1]} : vector<6x1152xbf16> to vector<6x1024xbf16>
    %91 = vector.extract_strided_slice %53 {offsets = [0, 57], sizes = [6, 1024], strides = [1, 1]} : vector<6x1152xbf16> to vector<6x1024xbf16>
    %92 = vector.extract_strided_slice %53 {offsets = [0, 58], sizes = [6, 1024], strides = [1, 1]} : vector<6x1152xbf16> to vector<6x1024xbf16>
    %93 = vector.extract_strided_slice %53 {offsets = [0, 59], sizes = [6, 1024], strides = [1, 1]} : vector<6x1152xbf16> to vector<6x1024xbf16>
    %94 = vector.extract_strided_slice %53 {offsets = [0, 60], sizes = [6, 1024], strides = [1, 1]} : vector<6x1152xbf16> to vector<6x1024xbf16>
    %95 = tpu.concatenate %90, %91, %92, %93, %94 in 0 : vector<6x1024xbf16>, vector<6x1024xbf16>, vector<6x1024xbf16>, vector<6x1024xbf16>, vector<6x1024xbf16> -> vector<30x1024xbf16>
    %c4 = arith.constant 4 : index
    %c0_60 = arith.constant 0 : index
    %c0_61 = arith.constant 0 : index
    %96 = vector.load %arg4[%c4, %c0_60, %c0_61] : memref<5x16x30xbf16, #tpu.memory_space<vmem>>, vector<1x16x30xbf16>
    %97 = vector.shape_cast %96 : vector<1x16x30xbf16> to vector<16x30xbf16>
    %cst_62 = arith.constant dense<0.000000e+00> : vector<16x1024xf32>
    %98 = tpu.matmul %97, %95, %cst_62 {dimension_numbers = #tpu.dot_dimension_numbers<[1], [0], [0], [1], [0, 0, 1, 1], [], []>} : vector<16x30xbf16>, vector<30x1024xbf16>, vector<16x1024xf32> -> vector<16x1024xf32>
    %99 = arith.addf %62, %71 : vector<16x1024xf32>
    %100 = arith.addf %99, %80 : vector<16x1024xf32>
    %101 = arith.addf %100, %89 : vector<16x1024xf32>
    %102 = arith.addf %101, %98 : vector<16x1024xf32>
    %c0_63 = arith.constant 0 : index
    %c0_64 = arith.constant 0 : index
    %103 = vector.load %arg5[%c0_63, %c0_64] : memref<16x1xf32, #tpu.memory_space<vmem>>, vector<16x1xf32>
    %104 = vector.broadcast %103 : vector<16x1xf32> to vector<16x1024xf32>
    %105 = arith.addf %102, %104 : vector<16x1024xf32>
    %cst_65 = arith.constant 0.000000e+00 : f32
    %106 = vector.broadcast %cst_65 : f32 to vector<16x1024xf32>
    %107 = arith.maximumf %105, %106 : vector<16x1024xf32>
    %c0_66 = arith.constant 0 : index
    %c0_67 = arith.constant 0 : index
    %108 = vector.load %arg13[%c0_66, %c0_67] : memref<16x1024xf32, #tpu.memory_space<vmem>>, vector<16x1024xf32>
    tpu.vector_store %arg13[%c0_66, %c0_67], %107 {strides = array<i32>} : memref<16x1024xf32, #tpu.memory_space<vmem>>, vector<16x1024xf32>,
    %109 = vector.extract_strided_slice %107 {offsets = [0, 0], sizes = [16, 896], strides = [1, 1]} : vector<16x1024xf32> to vector<16x896xf32>
    %110 = vector.extract_strided_slice %107 {offsets = [0, 1], sizes = [16, 896], strides = [1, 1]} : vector<16x1024xf32> to vector<16x896xf32>
    %111 = arith.maximumf %109, %110 : vector<16x896xf32>
    %112 = vector.extract_strided_slice %107 {offsets = [0, 14], sizes = [16, 896], strides = [1, 1]} : vector<16x1024xf32> to vector<16x896xf32>
    %113 = vector.extract_strided_slice %107 {offsets = [0, 15], sizes = [16, 896], strides = [1, 1]} : vector<16x1024xf32> to vector<16x896xf32>
    %114 = arith.maximumf %112, %113 : vector<16x896xf32>
    %115 = arith.maximumf %111, %114 : vector<16x896xf32>
    %116 = vector.extract_strided_slice %115 {offsets = [0, 0], sizes = [1, 128], strides = [1, 1]} : vector<16x896xf32> to vector<1x128xf32>
    %117 = vector.extract_strided_slice %115 {offsets = [1, 0], sizes = [1, 128], strides = [1, 1]} : vector<16x896xf32> to vector<1x128xf32>
    %118 = vector.extract_strided_slice %115 {offsets = [2, 0], sizes = [1, 128], strides = [1, 1]} : vector<16x896xf32> to vector<1x128xf32>
    %119 = vector.extract_strided_slice %115 {offsets = [3, 0], sizes = [1, 128], strides = [1, 1]} : vector<16x896xf32> to vector<1x128xf32>
    %120 = vector.extract_strided_slice %115 {offsets = [4, 0], sizes = [1, 128], strides = [1, 1]} : vector<16x896xf32> to vector<1x128xf32>
    %121 = vector.extract_strided_slice %115 {offsets = [5, 0], sizes = [1, 128], strides = [1, 1]} : vector<16x896xf32> to vector<1x128xf32>
    %122 = vector.extract_strided_slice %115 {offsets = [6, 0], sizes = [1, 128], strides = [1, 1]} : vector<16x896xf32> to vector<1x128xf32>
    %123 = vector.extract_strided_slice %115 {offsets = [7, 0], sizes = [1, 128], strides = [1, 1]} : vector<16x896xf32> to vector<1x128xf32>
    %124 = vector.extract_strided_slice %115 {offsets = [8, 0], sizes = [1, 128], strides = [1, 1]} : vector<16x896xf32> to vector<1x128xf32>
    %125 = vector.extract_strided_slice %115 {offsets = [9, 0], sizes = [1, 128], strides = [1, 1]} : vector<16x896xf32> to vector<1x128xf32>
    %126 = vector.extract_strided_slice %115 {offsets = [10, 0], sizes = [1, 128], strides = [1, 1]} : vector<16x896xf32> to vector<1x128xf32>
    %127 = vector.extract_strided_slice %115 {offsets = [11, 0], sizes = [1, 128], strides = [1, 1]} : vector<16x896xf32> to vector<1x128xf32>
    %128 = vector.extract_strided_slice %115 {offsets = [12, 0], sizes = [1, 128], strides = [1, 1]} : vector<16x896xf32> to vector<1x128xf32>
    %129 = vector.extract_strided_slice %115 {offsets = [13, 0], sizes = [1, 128], strides = [1, 1]} : vector<16x896xf32> to vector<1x128xf32>
    %130 = vector.extract_strided_slice %115 {offsets = [14, 0], sizes = [1, 128], strides = [1, 1]} : vector<16x896xf32> to vector<1x128xf32>
    %131 = vector.extract_strided_slice %115 {offsets = [15, 0], sizes = [1, 128], strides = [1, 1]} : vector<16x896xf32> to vector<1x128xf32>
    %132 = tpu.concatenate %116, %117, %118, %119, %120, %121, %122, %123, %124, %125, %126, %127, %128, %129, %130, %131 in 1 : vector<1x128xf32>, vector<1x128xf32>, vector<1x128xf32>, vector<1x128xf32>, vector<1x128xf32>, vector<1x128xf32>, vector<1x128xf32>, vector<1x128xf32>, vector<1x128xf32>, vector<1x128xf32>, vector<1x128xf32>, vector<1x128xf32>, vector<1x128xf32>, vector<1x128xf32>, vector<1x128xf32>, vector<1x128xf32> -> vector<1x2048xf32>
    %133 = vector.extract_strided_slice %115 {offsets = [0, 256], sizes = [1, 128], strides = [1, 1]} : vector<16x896xf32> to vector<1x128xf32>
    %134 = vector.extract_strided_slice %115 {offsets = [1, 256], sizes = [1, 128], strides = [1, 1]} : vector<16x896xf32> to vector<1x128xf32>
    %135 = vector.extract_strided_slice %115 {offsets = [2, 256], sizes = [1, 128], strides = [1, 1]} : vector<16x896xf32> to vector<1x128xf32>
    %136 = vector.extract_strided_slice %115 {offsets = [3, 256], sizes = [1, 128], strides = [1, 1]} : vector<16x896xf32> to vector<1x128xf32>
    %137 = vector.extract_strided_slice %115 {offsets = [4, 256], sizes = [1, 128], strides = [1, 1]} : vector<16x896xf32> to vector<1x128xf32>
    %138 = vector.extract_strided_slice %115 {offsets = [5, 256], sizes = [1, 128], strides = [1, 1]} : vector<16x896xf32> to vector<1x128xf32>
    %139 = vector.extract_strided_slice %115 {offsets = [6, 256], sizes = [1, 128], strides = [1, 1]} : vector<16x896xf32> to vector<1x128xf32>
    %140 = vector.extract_strided_slice %115 {offsets = [7, 256], sizes = [1, 128], strides = [1, 1]} : vector<16x896xf32> to vector<1x128xf32>
    %141 = vector.extract_strided_slice %115 {offsets = [8, 256], sizes = [1, 128], strides = [1, 1]} : vector<16x896xf32> to vector<1x128xf32>
    %142 = vector.extract_strided_slice %115 {offsets = [9, 256], sizes = [1, 128], strides = [1, 1]} : vector<16x896xf32> to vector<1x128xf32>
    %143 = vector.extract_strided_slice %115 {offsets = [10, 256], sizes = [1, 128], strides = [1, 1]} : vector<16x896xf32> to vector<1x128xf32>
    %144 = vector.extract_strided_slice %115 {offsets = [11, 256], sizes = [1, 128], strides = [1, 1]} : vector<16x896xf32> to vector<1x128xf32>
    %145 = vector.extract_strided_slice %115 {offsets = [12, 256], sizes = [1, 128], strides = [1, 1]} : vector<16x896xf32> to vector<1x128xf32>
    %146 = vector.extract_strided_slice %115 {offsets = [13, 256], sizes = [1, 128], strides = [1, 1]} : vector<16x896xf32> to vector<1x128xf32>
    %147 = vector.extract_strided_slice %115 {offsets = [14, 256], sizes = [1, 128], strides = [1, 1]} : vector<16x896xf32> to vector<1x128xf32>
    %148 = vector.extract_strided_slice %115 {offsets = [15, 256], sizes = [1, 128], strides = [1, 1]} : vector<16x896xf32> to vector<1x128xf32>
    %149 = tpu.concatenate %133, %134, %135, %136, %137, %138, %139, %140, %141, %142, %143, %144, %145, %146, %147, %148 in 1 : vector<1x128xf32>, vector<1x128xf32>, vector<1x128xf32>, vector<1x128xf32>, vector<1x128xf32>, vector<1x128xf32>, vector<1x128xf32>, vector<1x128xf32>, vector<1x128xf32>, vector<1x128xf32>, vector<1x128xf32>, vector<1x128xf32>, vector<1x128xf32>, vector<1x128xf32>, vector<1x128xf32>, vector<1x128xf32> -> vector<1x2048xf32>
    %150 = vector.extract_strided_slice %115 {offsets = [0, 512], sizes = [1, 128], strides = [1, 1]} : vector<16x896xf32> to vector<1x128xf32>
    %151 = vector.extract_strided_slice %115 {offsets = [1, 512], sizes = [1, 128], strides = [1, 1]} : vector<16x896xf32> to vector<1x128xf32>
    %152 = vector.extract_strided_slice %115 {offsets = [2, 512], sizes = [1, 128], strides = [1, 1]} : vector<16x896xf32> to vector<1x128xf32>
    %153 = vector.extract_strided_slice %115 {offsets = [3, 512], sizes = [1, 128], strides = [1, 1]} : vector<16x896xf32> to vector<1x128xf32>
    %154 = vector.extract_strided_slice %115 {offsets = [4, 512], sizes = [1, 128], strides = [1, 1]} : vector<16x896xf32> to vector<1x128xf32>
    %155 = vector.extract_strided_slice %115 {offsets = [5, 512], sizes = [1, 128], strides = [1, 1]} : vector<16x896xf32> to vector<1x128xf32>
    %156 = vector.extract_strided_slice %115 {offsets = [6, 512], sizes = [1, 128], strides = [1, 1]} : vector<16x896xf32> to vector<1x128xf32>
    %157 = vector.extract_strided_slice %115 {offsets = [7, 512], sizes = [1, 128], strides = [1, 1]} : vector<16x896xf32> to vector<1x128xf32>
    %158 = vector.extract_strided_slice %115 {offsets = [8, 512], sizes = [1, 128], strides = [1, 1]} : vector<16x896xf32> to vector<1x128xf32>
    %159 = vector.extract_strided_slice %115 {offsets = [9, 512], sizes = [1, 128], strides = [1, 1]} : vector<16x896xf32> to vector<1x128xf32>
    %160 = vector.extract_strided_slice %115 {offsets = [10, 512], sizes = [1, 128], strides = [1, 1]} : vector<16x896xf32> to vector<1x128xf32>
    %161 = vector.extract_strided_slice %115 {offsets = [11, 512], sizes = [1, 128], strides = [1, 1]} : vector<16x896xf32> to vector<1x128xf32>
    %162 = vector.extract_strided_slice %115 {offsets = [12, 512], sizes = [1, 128], strides = [1, 1]} : vector<16x896xf32> to vector<1x128xf32>
    %163 = vector.extract_strided_slice %115 {offsets = [13, 512], sizes = [1, 128], strides = [1, 1]} : vector<16x896xf32> to vector<1x128xf32>
    %164 = vector.extract_strided_slice %115 {offsets = [14, 512], sizes = [1, 128], strides = [1, 1]} : vector<16x896xf32> to vector<1x128xf32>
    %165 = vector.extract_strided_slice %115 {offsets = [15, 512], sizes = [1, 128], strides = [1, 1]} : vector<16x896xf32> to vector<1x128xf32>
    %166 = tpu.concatenate %150, %151, %152, %153, %154, %155, %156, %157, %158, %159, %160, %161, %162, %163, %164, %165 in 1 : vector<1x128xf32>, vector<1x128xf32>, vector<1x128xf32>, vector<1x128xf32>, vector<1x128xf32>, vector<1x128xf32>, vector<1x128xf32>, vector<1x128xf32>, vector<1x128xf32>, vector<1x128xf32>, vector<1x128xf32>, vector<1x128xf32>, vector<1x128xf32>, vector<1x128xf32>, vector<1x128xf32>, vector<1x128xf32> -> vector<1x2048xf32>
    %167 = vector.extract_strided_slice %115 {offsets = [0, 768], sizes = [1, 128], strides = [1, 1]} : vector<16x896xf32> to vector<1x128xf32>
    %168 = vector.extract_strided_slice %115 {offsets = [1, 768], sizes = [1, 128], strides = [1, 1]} : vector<16x896xf32> to vector<1x128xf32>
    %169 = vector.extract_strided_slice %115 {offsets = [2, 768], sizes = [1, 128], strides = [1, 1]} : vector<16x896xf32> to vector<1x128xf32>
    %170 = vector.extract_strided_slice %115 {offsets = [3, 768], sizes = [1, 128], strides = [1, 1]} : vector<16x896xf32> to vector<1x128xf32>
    %171 = vector.extract_strided_slice %115 {offsets = [4, 768], sizes = [1, 128], strides = [1, 1]} : vector<16x896xf32> to vector<1x128xf32>
    %172 = vector.extract_strided_slice %115 {offsets = [5, 768], sizes = [1, 128], strides = [1, 1]} : vector<16x896xf32> to vector<1x128xf32>
    %173 = vector.extract_strided_slice %115 {offsets = [6, 768], sizes = [1, 128], strides = [1, 1]} : vector<16x896xf32> to vector<1x128xf32>
    %174 = vector.extract_strided_slice %115 {offsets = [7, 768], sizes = [1, 128], strides = [1, 1]} : vector<16x896xf32> to vector<1x128xf32>
    %175 = vector.extract_strided_slice %115 {offsets = [8, 768], sizes = [1, 128], strides = [1, 1]} : vector<16x896xf32> to vector<1x128xf32>
    %176 = vector.extract_strided_slice %115 {offsets = [9, 768], sizes = [1, 128], strides = [1, 1]} : vector<16x896xf32> to vector<1x128xf32>
    %177 = vector.extract_strided_slice %115 {offsets = [10, 768], sizes = [1, 128], strides = [1, 1]} : vector<16x896xf32> to vector<1x128xf32>
    %178 = vector.extract_strided_slice %115 {offsets = [11, 768], sizes = [1, 128], strides = [1, 1]} : vector<16x896xf32> to vector<1x128xf32>
    %179 = vector.extract_strided_slice %115 {offsets = [12, 768], sizes = [1, 128], strides = [1, 1]} : vector<16x896xf32> to vector<1x128xf32>
    %180 = vector.extract_strided_slice %115 {offsets = [13, 768], sizes = [1, 128], strides = [1, 1]} : vector<16x896xf32> to vector<1x128xf32>
    %181 = vector.extract_strided_slice %115 {offsets = [14, 768], sizes = [1, 128], strides = [1, 1]} : vector<16x896xf32> to vector<1x128xf32>
    %182 = vector.extract_strided_slice %115 {offsets = [15, 768], sizes = [1, 128], strides = [1, 1]} : vector<16x896xf32> to vector<1x128xf32>
    %183 = tpu.concatenate %167, %168, %169, %170, %171, %172, %173, %174, %175, %176, %177, %178, %179, %180, %181, %182 in 1 : vector<1x128xf32>, vector<1x128xf32>, vector<1x128xf32>, vector<1x128xf32>, vector<1x128xf32>, vector<1x128xf32>, vector<1x128xf32>, vector<1x128xf32>, vector<1x128xf32>, vector<1x128xf32>, vector<1x128xf32>, vector<1x128xf32>, vector<1x128xf32>, vector<1x128xf32>, vector<1x128xf32>, vector<1x128xf32> -> vector<1x2048xf32>
    %184 = tpu.concatenate %132, %149, %166, %183 in 0 : vector<1x2048xf32>, vector<1x2048xf32>, vector<1x2048xf32>, vector<1x2048xf32> -> vector<4x2048xf32>
    %185 = arith.truncf %184 : vector<4x2048xf32> to vector<4x2048xbf16>
    %c0_68 = arith.constant 0 : index
    %c0_69 = arith.constant 0 : index
    %186 = vector.load %arg6[%c0_68, %c0_69] : memref<2048x120xbf16, #tpu.memory_space<vmem>>, vector<2048x120xbf16>
    %cst_70 = arith.constant dense<0.000000e+00> : vector<4x120xf32>
    %187 = tpu.matmul %185, %186, %cst_70 {dimension_numbers = #tpu.dot_dimension_numbers<[1], [0], [0], [1], [0, 0, 1, 1], [], []>} : vector<4x2048xbf16>, vector<2048x120xbf16>, vector<4x120xf32> -> vector<4x120xf32>
    %c0_71 = arith.constant 0 : index
    %c0_72 = arith.constant 0 : index
    %188 = vector.load %arg7[%c0_71, %c0_72] : memref<1x120xf32, #tpu.memory_space<vmem>>, vector<1x120xf32>
    %189 = vector.broadcast %188 : vector<1x120xf32> to vector<4x120xf32>
    %190 = arith.addf %187, %189 : vector<4x120xf32>
    %cst_73 = arith.constant 0.000000e+00 : f32
    %191 = vector.broadcast %cst_73 : f32 to vector<4x120xf32>
    %192 = arith.maximumf %190, %191 : vector<4x120xf32>
    %193 = arith.truncf %192 : vector<4x120xf32> to vector<4x120xbf16>
    %c0_74 = arith.constant 0 : index
    %c0_75 = arith.constant 0 : index
    %194 = vector.load %arg8[%c0_74, %c0_75] : memref<120x84xbf16, #tpu.memory_space<vmem>>, vector<120x84xbf16>
    %cst_76 = arith.constant dense<0.000000e+00> : vector<4x84xf32>
    %195 = tpu.matmul %193, %194, %cst_76 {dimension_numbers = #tpu.dot_dimension_numbers<[1], [0], [0], [1], [0, 0, 1, 1], [], []>} : vector<4x120xbf16>, vector<120x84xbf16>, vector<4x84xf32> -> vector<4x84xf32>
    %c0_77 = arith.constant 0 : index
    %c0_78 = arith.constant 0 : index
    %196 = vector.load %arg9[%c0_77, %c0_78] : memref<1x84xf32, #tpu.memory_space<vmem>>, vector<1x84xf32>
    %197 = vector.broadcast %196 : vector<1x84xf32> to vector<4x84xf32>
    %198 = arith.addf %195, %197 : vector<4x84xf32>
    %cst_79 = arith.constant 0.000000e+00 : f32
    %199 = vector.broadcast %cst_79 : f32 to vector<4x84xf32>
    %200 = arith.maximumf %198, %199 : vector<4x84xf32>
    %201 = arith.truncf %200 : vector<4x84xf32> to vector<4x84xbf16>
    %c0_80 = arith.constant 0 : index
    %c0_81 = arith.constant 0 : index
    %202 = vector.load %arg10[%c0_80, %c0_81] : memref<84x128xbf16, #tpu.memory_space<vmem>>, vector<84x128xbf16>
    %cst_82 = arith.constant dense<0.000000e+00> : vector<4x128xf32>
    %203 = tpu.matmul %201, %202, %cst_82 {dimension_numbers = #tpu.dot_dimension_numbers<[1], [0], [0], [1], [0, 0, 1, 1], [], []>} : vector<4x84xbf16>, vector<84x128xbf16>, vector<4x128xf32> -> vector<4x128xf32>
    %c0_83 = arith.constant 0 : index
    %c0_84 = arith.constant 0 : index
    %204 = vector.load %arg11[%c0_83, %c0_84] : memref<1x128xf32, #tpu.memory_space<vmem>>, vector<1x128xf32>
    %205 = vector.broadcast %204 : vector<1x128xf32> to vector<4x128xf32>
    %206 = arith.addf %203, %205 : vector<4x128xf32>
    %c0_85 = arith.constant 0 : index
    %c0_86 = arith.constant 0 : index
    %c0_87 = arith.constant 0 : index
    %207 = vector.load %arg14[%c0_85, %c0_86, %c0_87] : memref<1x4x128xf32, #tpu.memory_space<vmem>>, vector<1x4x128xf32>
    %208 = vector.shape_cast %207 : vector<1x4x128xf32> to vector<4x128xf32>
    %209 = vector.shape_cast %206 : vector<4x128xf32> to vector<1x4x128xf32>
    tpu.vector_store %arg14[%c0_85, %c0_86, %c0_87], %209 {strides = array<i32>} : memref<1x4x128xf32, #tpu.memory_space<vmem>>, vector<1x4x128xf32>,
    return
  }
  func.func @transform_0(%arg0: i32) -> (i32, i32, i32) {
    %c0_i32 = arith.constant 0 : i32
    %c0_i32_0 = arith.constant 0 : i32
    %c0_i32_1 = arith.constant 0 : i32
    return %c0_i32, %c0_i32_0, %arg0 : i32, i32, i32
  }
  func.func @transform_1(%arg0: i32) -> (i32, i32) {
    %c0_i32 = arith.constant 0 : i32
    %c0_i32_0 = arith.constant 0 : i32
    %c0_i32_1 = arith.constant 0 : i32
    return %c0_i32, %c0_i32_0 : i32, i32
  }
  func.func @transform_2(%arg0: i32) -> (i32, i32) {
    %c0_i32 = arith.constant 0 : i32
    %c0_i32_0 = arith.constant 0 : i32
    %c0_i32_1 = arith.constant 0 : i32
    return %c0_i32, %c0_i32_0 : i32, i32
  }
  func.func @transform_3(%arg0: i32) -> (i32, i32, i32) {
    %c0_i32 = arith.constant 0 : i32
    %c0_i32_0 = arith.constant 0 : i32
    %c0_i32_1 = arith.constant 0 : i32
    %c0_i32_2 = arith.constant 0 : i32
    return %c0_i32, %c0_i32_0, %c0_i32_1 : i32, i32, i32
  }
  func.func @transform_4(%arg0: i32) -> (i32, i32) {
    %c0_i32 = arith.constant 0 : i32
    %c0_i32_0 = arith.constant 0 : i32
    %c0_i32_1 = arith.constant 0 : i32
    return %c0_i32, %c0_i32_0 : i32, i32
  }
  func.func @transform_5(%arg0: i32) -> (i32, i32) {
    %c0_i32 = arith.constant 0 : i32
    %c0_i32_0 = arith.constant 0 : i32
    %c0_i32_1 = arith.constant 0 : i32
    return %c0_i32, %c0_i32_0 : i32, i32
  }
  func.func @transform_6(%arg0: i32) -> (i32, i32) {
    %c0_i32 = arith.constant 0 : i32
    %c0_i32_0 = arith.constant 0 : i32
    %c0_i32_1 = arith.constant 0 : i32
    return %c0_i32, %c0_i32_0 : i32, i32
  }
  func.func @transform_7(%arg0: i32) -> (i32, i32) {
    %c0_i32 = arith.constant 0 : i32
    %c0_i32_0 = arith.constant 0 : i32
    %c0_i32_1 = arith.constant 0 : i32
    return %c0_i32, %c0_i32_0 : i32, i32
  }
  func.func @transform_8(%arg0: i32) -> (i32, i32) {
    %c0_i32 = arith.constant 0 : i32
    %c0_i32_0 = arith.constant 0 : i32
    %c0_i32_1 = arith.constant 0 : i32
    return %c0_i32, %c0_i32_0 : i32, i32
  }
  func.func @transform_9(%arg0: i32) -> (i32, i32) {
    %c0_i32 = arith.constant 0 : i32
    %c0_i32_0 = arith.constant 0 : i32
    %c0_i32_1 = arith.constant 0 : i32
    return %c0_i32, %c0_i32_0 : i32, i32
  }
  func.func @transform_10(%arg0: i32) -> (i32, i32) {
    %c0_i32 = arith.constant 0 : i32
    %c0_i32_0 = arith.constant 0 : i32
    %c0_i32_1 = arith.constant 0 : i32
    return %c0_i32, %c0_i32_0 : i32, i32
  }
  func.func @transform_11(%arg0: i32) -> (i32, i32, i32) {
    %c0_i32 = arith.constant 0 : i32
    %c0_i32_0 = arith.constant 0 : i32
    %c0_i32_1 = arith.constant 0 : i32
    return %c0_i32, %c0_i32_0, %arg0 : i32, i32, i32
  }
  func.func @transform_12(%arg0: i32) -> (i32, i32) {
    %c0_i32 = arith.constant 0 : i32
    %c0_i32_0 = arith.constant 0 : i32
    return %c0_i32, %arg0 : i32, i32
  }
  func.func @transform_13(%arg0: i32) -> (i32, i32, i32) {
    %c0_i32 = arith.constant 0 : i32
    %c0_i32_0 = arith.constant 0 : i32
    %c0_i32_1 = arith.constant 0 : i32
    return %arg0, %c0_i32, %c0_i32_0 : i32, i32, i32
  }
}

</mosaic_0001>

<llo_original>
// kernel: lenet32_forward.1
$region0: #{lenet32_forward.1}
  #allocation0 [shape = 'u32[]', space=smem, size = 0x4, offset = 0x4, fixed_abs, tag = 'smem constant byte address 0x4 - core index']
  #allocation1 [shape = 'u32[72,128]{1,0:T(1,128)}', space=vmem, size = 0x9000, scoped, tag = 'internal scratch']
  %s0 = inlined_call_operand.vmem [shape: bf16[4,75,2048], index: 0, kind: input, shape index: {}]
  %s1 = inlined_call_operand.vmem [shape: bf16[6,75], index: 1, kind: input, shape index: {}]
  %s2 = inlined_call_operand.vmem [shape: f32[6,1], index: 2, kind: input, shape index: {}]
  %s3 = inlined_call_operand.vmem [shape: bf16[5,16,30], index: 3, kind: input, shape index: {}]
  %s4 = inlined_call_operand.vmem [shape: f32[16,1], index: 4, kind: input, shape index: {}]
  %s5 = inlined_call_operand.vmem [shape: bf16[2048,120], index: 5, kind: input, shape index: {}]
  %s6 = inlined_call_operand.vmem [shape: f32[1,120], index: 6, kind: input, shape index: {}]
  %s7 = inlined_call_operand.vmem [shape: bf16[120,84], index: 7, kind: input, shape index: {}]
  %s8 = inlined_call_operand.vmem [shape: f32[1,84], index: 8, kind: input, shape index: {}]
  %s9 = inlined_call_operand.vmem [shape: bf16[84,128], index: 9, kind: input, shape index: {}]
  %s10 = inlined_call_operand.vmem [shape: f32[1,128], index: 10, kind: input, shape index: {}]
  %s11 = inlined_call_operand.vmem [shape: f32[4,6,2048], index: 11, kind: output, shape index: {0}]
  %s12 = inlined_call_operand.vmem [shape: f32[16,2048], index: 12, kind: output, shape index: {1}]
  %s13 = inlined_call_operand.hbm [shape: f32[2,4,128], index: 13, kind: output, shape index: {2}]
  %14 = xla_tuple %s11, %s12, %s13
  %s15 = sld [smem:[#allocation0]]
  $region154: #{lenet32_forward.1} parent=0
    _
  %s17 = ssub.s32 1, %s15
  %s18 = scalar_select 0, %s17, %s15
  $region1: #{lenet32_forward.1} parent=0
    #allocation2 [shape = 'u8[1310720]{0}', space=vmem, size = 0x140000, scoped, tag = 'input window, operand 0']
    #allocation3 [shape = 'u8[262144]{0}', space=vmem, size = 0x40000, scoped, tag = 'output window, operand 0']
    #allocation4 [shape = 'u8[131072]{0}', space=vmem, size = 0x20000, scoped, tag = 'output window, operand 1']
    #allocation5 [shape = 'u8[4096]{0}', space=vmem, size = 0x1000, scoped, tag = 'output window, operand 2']
    #allocation6 [shape = 's32[2]{0}', space=sflag, size = 0x8, scoped, tag = 'scoped memory for lenet32_forward.1']
    %19 = vsyncpa [#allocation6], 0
    %s20 = scalar_lea.sflag [#allocation6], 1
    %21 = vsyncpa %s20, 0
    loop: start=0, step=1, limit=4
    $region2: #{lenet32_forward.1} parent=1 // loop_pre_header
      _
    $region3: #{lenet32_forward.1} parent=1 // loop_header
      %s23 = sphi 0, %s27
      %p24 = scmp.ge.s32.totalorder %s23, 4
      %s33 = sphi 0, %s35
      %s36 = sphi 0, %s33
      %s37 = sphi 0, %s36
      %s53 = sphi 0, %s37
      %s57 = sphi 0, %s57
      %s59 = sphi 0, %s57
      %s60 = sphi 0, %s59
      %s74 = sphi 0, %s60
      %s78 = sphi 0, %s78
      %s80 = sphi 0, %s78
      %s81 = sphi 0, %s80
      %s95 = sphi 0, %s81
      %s99 = sphi 0, %s99
      %s101 = sphi 0, %s99
      %s102 = sphi 0, %s101
      %s116 = sphi 0, %s102
      %s120 = sphi 0, %s120
      %s122 = sphi 0, %s120
      %s123 = sphi 0, %s122
      %s137 = sphi 0, %s123
      %s141 = sphi 0, %s141
      %s143 = sphi 0, %s141
      %s144 = sphi 0, %s143
      %s158 = sphi 0, %s144
      %s162 = sphi 0, %s162
      %s164 = sphi 0, %s162
      %s165 = sphi 0, %s164
      %s179 = sphi 0, %s165
      %s183 = sphi 0, %s183
      %s185 = sphi 0, %s183
      %s186 = sphi 0, %s185
      %s200 = sphi 0, %s186
      %s204 = sphi 0, %s204
      %s206 = sphi 0, %s204
      %s207 = sphi 0, %s206
      %s221 = sphi 0, %s207
      %s225 = sphi 0, %s225
      %s227 = sphi 0, %s225
      %s228 = sphi 0, %s227
      %s242 = sphi 0, %s228
      %s246 = sphi 0, %s246
      %s248 = sphi 0, %s246
      %s249 = sphi 0, %s248
      %s263 = sphi 0, %s249
      %s269 = sphi 0, %s271
      %s272 = sphi 0, %s269
      %s273 = sphi 0, %s272
      %s289 = sphi 0, %s273
      %s295 = sphi 0, %s297
      %s298 = sphi 0, %s295
      %s299 = sphi 0, %s298
      %s315 = sphi 0, %s299
      %s321 = sphi 0, %s323
      %s324 = sphi 0, %s321
      %s325 = sphi 0, %s324
      %s341 = sphi 0, %s325
    $region4: #{lenet32_forward.1} parent=1 // loop_header_branch
      %26 = sbr.rel (%p24) target = $region8
    $region5: #{lenet32_forward.1} parent=1 // loop_body
      %s28 = ssub.s32 %s23, 1
      %s29 = ssub.s32 %s23, 2
      %s30 = sadd.s32 %s23, 1
      %s31 = ssub.s32 %s23, %s30
      %p32 = scmp.eq.s32.totalorder %s31, 0
      %s34 = sadd.s32 %s33, 1
      %s35 = scalar_select %p32, %s33, %s34
      %p38 = pneg %p32
      %p39 = scmp.eq.s32.totalorder %s23, 1
      %p40 = por %p38, %p39
      %p41 = scmp.ne.s32.totalorder %s33, %s36
      %p42 = scmp.eq.s32.totalorder %s23, 0
      %p43 = por %p41, %p42
      %p44 = scmp.ne.s32.totalorder %s33, %s36
      %p45 = scmp.eq.s32.totalorder %s28, 1
      %p46 = por %p44, %p45
      %p47 = scmp.ne.s32.totalorder %s36, %s37
      %p48 = scmp.eq.s32.totalorder %s28, 0
      %p49 = por %p47, %p48
      %p50 = scmp.ne.s32.totalorder %s36, %s37
      %p51 = scmp.eq.s32.totalorder %s29, 1
      %p52 = por %p50, %p51
      %p54 = scmp.ne.s32.totalorder %s37, %s53
      %p55 = scmp.eq.s32.totalorder %s29, 0
      %p56 = por %p54, %p55
      %s58 = sadd.s32 %s57, 1
      %p61 = scmp.eq.s32.totalorder %s23, 1
      %p62 = scmp.ne.s32.totalorder %s57, %s59
      %p63 = scmp.eq.s32.totalorder %s23, 0
      %p64 = por %p62, %p63
      %p65 = scmp.ne.s32.totalorder %s57, %s59
      %p66 = scmp.eq.s32.totalorder %s28, 1
      %p67 = por %p65, %p66
      %p68 = scmp.ne.s32.totalorder %s59, %s60
      %p69 = scmp.eq.s32.totalorder %s28, 0
      %p70 = por %p68, %p69
      %p71 = scmp.ne.s32.totalorder %s59, %s60
      %p72 = scmp.eq.s32.totalorder %s29, 1
      %p73 = por %p71, %p72
      %p75 = scmp.ne.s32.totalorder %s60, %s74
      %p76 = scmp.eq.s32.totalorder %s29, 0
      %p77 = por %p75, %p76
      %s79 = sadd.s32 %s78, 1
      %p82 = scmp.eq.s32.totalorder %s23, 1
      %p83 = scmp.ne.s32.totalorder %s78, %s80
      %p84 = scmp.eq.s32.totalorder %s23, 0
      %p85 = por %p83, %p84
      %p86 = scmp.ne.s32.totalorder %s78, %s80
      %p87 = scmp.eq.s32.totalorder %s28, 1
      %p88 = por %p86, %p87
      %p89 = scmp.ne.s32.totalorder %s80, %s81
      %p90 = scmp.eq.s32.totalorder %s28, 0
      %p91 = por %p89, %p90
      %p92 = scmp.ne.s32.totalorder %s80, %s81
      %p93 = scmp.eq.s32.totalorder %s29, 1
      %p94 = por %p92, %p93
      %p96 = scmp.ne.s32.totalorder %s81, %s95
      %p97 = scmp.eq.s32.totalorder %s29, 0
      %p98 = por %p96, %p97
      %s100 = sadd.s32 %s99, 1
      %p103 = scmp.eq.s32.totalorder %s23, 1
      %p104 = scmp.ne.s32.totalorder %s99, %s101
      %p105 = scmp.eq.s32.totalorder %s23, 0
      %p106 = por %p104, %p105
      %p107 = scmp.ne.s32.totalorder %s99, %s101
      %p108 = scmp.eq.s32.totalorder %s28, 1
      %p109 = por %p107, %p108
      %p110 = scmp.ne.s32.totalorder %s101, %s102
      %p111 = scmp.eq.s32.totalorder %s28, 0
      %p112 = por %p110, %p111
      %p113 = scmp.ne.s32.totalorder %s101, %s102
      %p114 = scmp.eq.s32.totalorder %s29, 1
      %p115 = por %p113, %p114
      %p117 = scmp.ne.s32.totalorder %s102, %s116
      %p118 = scmp.eq.s32.totalorder %s29, 0
      %p119 = por %p117, %p118
      %s121 = sadd.s32 %s120, 1
      %p124 = scmp.eq.s32.totalorder %s23, 1
      %p125 = scmp.ne.s32.totalorder %s120, %s122
      %p126 = scmp.eq.s32.totalorder %s23, 0
      %p127 = por %p125, %p126
      %p128 = scmp.ne.s32.totalorder %s120, %s122
      %p129 = scmp.eq.s32.totalorder %s28, 1
      %p130 = por %p128, %p129
      %p131 = scmp.ne.s32.totalorder %s122, %s123
      %p132 = scmp.eq.s32.totalorder %s28, 0
      %p133 = por %p131, %p132
      %p134 = scmp.ne.s32.totalorder %s122, %s123
      %p135 = scmp.eq.s32.totalorder %s29, 1
      %p136 = por %p134, %p135
      %p138 = scmp.ne.s32.totalorder %s123, %s137
      %p139 = scmp.eq.s32.totalorder %s29, 0
      %p140 = por %p138, %p139
      %s142 = sadd.s32 %s141, 1
      %p145 = scmp.eq.s32.totalorder %s23, 1
      %p146 = scmp.ne.s32.totalorder %s141, %s143
      %p147 = scmp.eq.s32.totalorder %s23, 0
      %p148 = por %p146, %p147
      %p149 = scmp.ne.s32.totalorder %s141, %s143
      %p150 = scmp.eq.s32.totalorder %s28, 1
      %p151 = por %p149, %p150
      %p152 = scmp.ne.s32.totalorder %s143, %s144
      %p153 = scmp.eq.s32.totalorder %s28, 0
      %p154 = por %p152, %p153
      %p155 = scmp.ne.s32.totalorder %s143, %s144
      %p156 = scmp.eq.s32.totalorder %s29, 1
      %p157 = por %p155, %p156
      %p159 = scmp.ne.s32.totalorder %s144, %s158
      %p160 = scmp.eq.s32.totalorder %s29, 0
      %p161 = por %p159, %p160
      %s163 = sadd.s32 %s162, 1
      %p166 = scmp.eq.s32.totalorder %s23, 1
      %p167 = scmp.ne.s32.totalorder %s162, %s164
      %p168 = scmp.eq.s32.totalorder %s23, 0
      %p169 = por %p167, %p168
      %p170 = scmp.ne.s32.totalorder %s162, %s164
      %p171 = scmp.eq.s32.totalorder %s28, 1
      %p172 = por %p170, %p171
      %p173 = scmp.ne.s32.totalorder %s164, %s165
      %p174 = scmp.eq.s32.totalorder %s28, 0
      %p175 = por %p173, %p174
      %p176 = scmp.ne.s32.totalorder %s164, %s165
      %p177 = scmp.eq.s32.totalorder %s29, 1
      %p178 = por %p176, %p177
      %p180 = scmp.ne.s32.totalorder %s165, %s179
      %p181 = scmp.eq.s32.totalorder %s29, 0
      %p182 = por %p180, %p181
      %s184 = sadd.s32 %s183, 1
      %p187 = scmp.eq.s32.totalorder %s23, 1
      %p188 = scmp.ne.s32.totalorder %s183, %s185
      %p189 = scmp.eq.s32.totalorder %s23, 0
      %p190 = por %p188, %p189
      %p191 = scmp.ne.s32.totalorder %s183, %s185
      %p192 = scmp.eq.s32.totalorder %s28, 1
      %p193 = por %p191, %p192
      %p194 = scmp.ne.s32.totalorder %s185, %s186
      %p195 = scmp.eq.s32.totalorder %s28, 0
      %p196 = por %p194, %p195
      %p197 = scmp.ne.s32.totalorder %s185, %s186
      %p198 = scmp.eq.s32.totalorder %s29, 1
      %p199 = por %p197, %p198
      %p201 = scmp.ne.s32.totalorder %s186, %s200
      %p202 = scmp.eq.s32.totalorder %s29, 0
      %p203 = por %p201, %p202
      %s205 = sadd.s32 %s204, 1
      %p208 = scmp.eq.s32.totalorder %s23, 1
      %p209 = scmp.ne.s32.totalorder %s204, %s206
      %p210 = scmp.eq.s32.totalorder %s23, 0
      %p211 = por %p209, %p210
      %p212 = scmp.ne.s32.totalorder %s204, %s206
      %p213 = scmp.eq.s32.totalorder %s28, 1
      %p214 = por %p212, %p213
      %p215 = scmp.ne.s32.totalorder %s206, %s207
      %p216 = scmp.eq.s32.totalorder %s28, 0
      %p217 = por %p215, %p216
      %p218 = scmp.ne.s32.totalorder %s206, %s207
      %p219 = scmp.eq.s32.totalorder %s29, 1
      %p220 = por %p218, %p219
      %p222 = scmp.ne.s32.totalorder %s207, %s221
      %p223 = scmp.eq.s32.totalorder %s29, 0
      %p224 = por %p222, %p223
      %s226 = sadd.s32 %s225, 1
      %p229 = scmp.eq.s32.totalorder %s23, 1
      %p230 = scmp.ne.s32.totalorder %s225, %s227
      %p231 = scmp.eq.s32.totalorder %s23, 0
      %p232 = por %p230, %p231
      %p233 = scmp.ne.s32.totalorder %s225, %s227
      %p234 = scmp.eq.s32.totalorder %s28, 1
      %p235 = por %p233, %p234
      %p236 = scmp.ne.s32.totalorder %s227, %s228
      %p237 = scmp.eq.s32.totalorder %s28, 0
      %p238 = por %p236, %p237
      %p239 = scmp.ne.s32.totalorder %s227, %s228
      %p240 = scmp.eq.s32.totalorder %s29, 1
      %p241 = por %p239, %p240
      %p243 = scmp.ne.s32.totalorder %s228, %s242
      %p244 = scmp.eq.s32.totalorder %s29, 0
      %p245 = por %p243, %p244
      %s247 = sadd.s32 %s246, 1
      %p250 = scmp.eq.s32.totalorder %s23, 1
      %p251 = scmp.ne.s32.totalorder %s246, %s248
      %p252 = scmp.eq.s32.totalorder %s23, 0
      %p253 = por %p251, %p252
      %p254 = scmp.ne.s32.totalorder %s246, %s248
      %p255 = scmp.eq.s32.totalorder %s28, 1
      %p256 = por %p254, %p255
      %p257 = scmp.ne.s32.totalorder %s248, %s249
      %p258 = scmp.eq.s32.totalorder %s28, 0
      %p259 = por %p257, %p258
      %p260 = scmp.ne.s32.totalorder %s248, %s249
      %p261 = scmp.eq.s32.totalorder %s29, 1
      %p262 = por %p260, %p261
      %p264 = scmp.ne.s32.totalorder %s249, %s263
      %p265 = scmp.eq.s32.totalorder %s29, 0
      %p266 = por %p264, %p265
      %s267 = ssub.s32 %s23, %s30
      %p268 = scmp.eq.s32.totalorder %s267, 0
      %s270 = sadd.s32 %s269, 1
      %s271 = scalar_select %p268, %s269, %s270
      %p274 = pneg %p268
      %p275 = scmp.eq.s32.totalorder %s23, 1
      %p276 = por %p274, %p275
      %p277 = scmp.ne.s32.totalorder %s269, %s272
      %p278 = scmp.eq.s32.totalorder %s23, 0
      %p279 = por %p277, %p278
      %p280 = scmp.ne.s32.totalorder %s269, %s272
      %p281 = scmp.eq.s32.totalorder %s28, 1
      %p282 = por %p280, %p281
      %p283 = scmp.ne.s32.totalorder %s272, %s273
      %p284 = scmp.eq.s32.totalorder %s28, 0
      %p285 = por %p283, %p284
      %p286 = scmp.ne.s32.totalorder %s272, %s273
      %p287 = scmp.eq.s32.totalorder %s29, 1
      %p288 = por %p286, %p287
      %p290 = scmp.ne.s32.totalorder %s273, %s289
      %p291 = scmp.eq.s32.totalorder %s29, 0
      %p292 = por %p290, %p291
      %s293 = ssub.s32 %s23, %s30
      %p294 = scmp.eq.s32.totalorder %s293, 0
      %s296 = sadd.s32 %s295, 1
      %s297 = scalar_select %p294, %s295, %s296
      %p300 = pneg %p294
      %p301 = scmp.eq.s32.totalorder %s23, 1
      %p302 = por %p300, %p301
      %p303 = scmp.ne.s32.totalorder %s295, %s298
      %p304 = scmp.eq.s32.totalorder %s23, 0
      %p305 = por %p303, %p304
      %p306 = scmp.ne.s32.totalorder %s295, %s298
      %p307 = scmp.eq.s32.totalorder %s28, 1
      %p308 = por %p306, %p307
      %p309 = scmp.ne.s32.totalorder %s298, %s299
      %p310 = scmp.eq.s32.totalorder %s28, 0
      %p311 = por %p309, %p310
      %p312 = scmp.ne.s32.totalorder %s298, %s299
      %p313 = scmp.eq.s32.totalorder %s29, 1
      %p314 = por %p312, %p313
      %p316 = scmp.ne.s32.totalorder %s299, %s315
      %p317 = scmp.eq.s32.totalorder %s29, 0
      %p318 = por %p316, %p317
      %s319 = ssub.s32 %s23, %s30
      %p320 = scmp.eq.s32.totalorder %s319, 0
      %s322 = sadd.s32 %s321, 1
      %s323 = scalar_select %p320, %s321, %s322
      %p326 = pneg %p320
      %p327 = scmp.eq.s32.totalorder %s23, 1
      %p328 = por %p326, %p327
      %p329 = scmp.ne.s32.totalorder %s321, %s324
      %p330 = scmp.eq.s32.totalorder %s23, 0
      %p331 = por %p329, %p330
      %p332 = scmp.ne.s32.totalorder %s321, %s324
      %p333 = scmp.eq.s32.totalorder %s28, 1
      %p334 = por %p332, %p333
      %p335 = scmp.ne.s32.totalorder %s324, %s325
      %p336 = scmp.eq.s32.totalorder %s28, 0
      %p337 = por %p335, %p336
      %p338 = scmp.ne.s32.totalorder %s324, %s325
      %p339 = scmp.eq.s32.totalorder %s29, 1
      %p340 = por %p338, %p339
      %p342 = scmp.ne.s32.totalorder %s325, %s341
      %p343 = scmp.eq.s32.totalorder %s29, 0
      %p344 = por %p342, %p343
      %p345 = scmp.le.s32.totalorder 1, %s23
      %p346 = scmp.lt.s32.totalorder %s23, 3
      %p347 = pnand %p345, %p346
      %p348 = pneg %p347
      // Predicated region
      $region9: #{lenet32_forward.1} parent=5 // pred_check
        _
      $region10: #{lenet32_forward.1} parent=5 // pred_check_branch
        %350 = sbr.rel (%p347) target = $region12
      $region11: #{lenet32_forward.1} parent=5 // pred_region
        %s351 = ssub.s32 %s23, 1
        // Predicated region
        $region13: #{lenet32_forward.1} parent=11 // pred_check
          %p352 = pneg %p70
        $region14: #{lenet32_forward.1} parent=11 // pred_check_branch
          %354 = sbr.rel (%p352) target = $region16
        $region15: #{lenet32_forward.1} parent=11 // pred_region
          _
        $region16: #{lenet32_forward.1} parent=11 // pred_fallthru
          _
        // Predicated region
        $region17: #{lenet32_forward.1} parent=11 // pred_check
          %p355 = pneg %p91
        $region18: #{lenet32_forward.1} parent=11 // pred_check_branch
          %357 = sbr.rel (%p355) target = $region20
        $region19: #{lenet32_forward.1} parent=11 // pred_region
          _
        $region20: #{lenet32_forward.1} parent=11 // pred_fallthru
          _
        // Predicated region
        $region21: #{lenet32_forward.1} parent=11 // pred_check
          %p358 = pneg %p112
        $region22: #{lenet32_forward.1} parent=11 // pred_check_branch
          %360 = sbr.rel (%p358) target = $region24
        $region23: #{lenet32_forward.1} parent=11 // pred_region
          _
        $region24: #{lenet32_forward.1} parent=11 // pred_fallthru
          _
        // Predicated region
        $region25: #{lenet32_forward.1} parent=11 // pred_check
          %p361 = pneg %p133
        $region26: #{lenet32_forward.1} parent=11 // pred_check_branch
          %363 = sbr.rel (%p361) target = $region28
        $region27: #{lenet32_forward.1} parent=11 // pred_region
          _
        $region28: #{lenet32_forward.1} parent=11 // pred_fallthru
          _
        // Predicated region
        $region29: #{lenet32_forward.1} parent=11 // pred_check
          %p364 = pneg %p154
        $region30: #{lenet32_forward.1} parent=11 // pred_check_branch
          %366 = sbr.rel (%p364) target = $region32
        $region31: #{lenet32_forward.1} parent=11 // pred_region
          _
        $region32: #{lenet32_forward.1} parent=11 // pred_fallthru
          _
        // Predicated region
        $region33: #{lenet32_forward.1} parent=11 // pred_check
          %p367 = pneg %p175
        $region34: #{lenet32_forward.1} parent=11 // pred_check_branch
          %369 = sbr.rel (%p367) target = $region36
        $region35: #{lenet32_forward.1} parent=11 // pred_region
          _
        $region36: #{lenet32_forward.1} parent=11 // pred_fallthru
          _
        // Predicated region
        $region37: #{lenet32_forward.1} parent=11 // pred_check
          %p370 = pneg %p196
        $region38: #{lenet32_forward.1} parent=11 // pred_check_branch
          %372 = sbr.rel (%p370) target = $region40
        $region39: #{lenet32_forward.1} parent=11 // pred_region
          _
        $region40: #{lenet32_forward.1} parent=11 // pred_fallthru
          _
        // Predicated region
        $region41: #{lenet32_forward.1} parent=11 // pred_check
          %p373 = pneg %p217
        $region42: #{lenet32_forward.1} parent=11 // pred_check_branch
          %375 = sbr.rel (%p373) target = $region44
        $region43: #{lenet32_forward.1} parent=11 // pred_region
          _
        $region44: #{lenet32_forward.1} parent=11 // pred_fallthru
          _
        // Predicated region
        $region45: #{lenet32_forward.1} parent=11 // pred_check
          %p376 = pneg %p238
        $region46: #{lenet32_forward.1} parent=11 // pred_check_branch
          %378 = sbr.rel (%p376) target = $region48
        $region47: #{lenet32_forward.1} parent=11 // pred_region
          _
        $region48: #{lenet32_forward.1} parent=11 // pred_fallthru
          _
        // Predicated region
        $region49: #{lenet32_forward.1} parent=11 // pred_check
          %p379 = pneg %p259
        $region50: #{lenet32_forward.1} parent=11 // pred_check_branch
          %381 = sbr.rel (%p379) target = $region52
        $region51: #{lenet32_forward.1} parent=11 // pred_region
          _
        $region52: #{lenet32_forward.1} parent=11 // pred_fallthru
          _
      $region12: #{lenet32_forward.1} parent=5 // pred_fallthru
        _
      %p382 = scmp.lt.s32.totalorder %s23, 2
      // Predicated region
      $region53: #{lenet32_forward.1} parent=5 // pred_check
        %p383 = pneg %p382
      $region54: #{lenet32_forward.1} parent=5 // pred_check_branch
        %385 = sbr.rel (%p383) target = $region56
      $region55: #{lenet32_forward.1} parent=5 // pred_region
        // Predicated region
        $region57: #{lenet32_forward.1} parent=55 // pred_check
          %p386 = pneg %p43
        $region58: #{lenet32_forward.1} parent=55 // pred_check_branch
          %388 = sbr.rel (%p386) target = $region60
        $region59: #{lenet32_forward.1} parent=55 // pred_region
          %s389 = sand.u32 %s33, 1
          %s390 = sand.u32 %s33, 1
          %s391 = smul.addr %s390, 1280
          %s392 = scalar_lea.vmem [#allocation2], %s391
          %s393 = smul.u32 8, %s23
          %s394 = smul.addr %s393, 4
          %s395 = scalar_lea.vmem %s0, %s394
          // Predicated region
          $region61: #{lenet32_forward.1} parent=59 // pred_check
            _
          $region62: #{lenet32_forward.1} parent=59 // pred_check_branch
            %397 = sbr.rel (0) target = $region64
          $region63: #{lenet32_forward.1} parent=59 // pred_region
            // Predicated region
            $region65: #{lenet32_forward.1} parent=63 // pred_check
              _
            $region66: #{lenet32_forward.1} parent=63 // pred_check_branch
              %399 = sbr.rel (0) target = $region68
            $region67: #{lenet32_forward.1} parent=63 // pred_region
              loop: start=0, step=1, limit=1
              $region69: #{lenet32_forward.1} parent=67 // loop_pre_header
                _
              $region70: #{lenet32_forward.1} parent=67 // loop_header
                %s401 = sphi 0, %s405
                %p402 = scmp.ge.s32.totalorder %s401, 1
                %s406 = sphi %s395, %s395
                %s407 = sphi %s392, %s392
              $region71: #{lenet32_forward.1} parent=67 // loop_header_branch
                %404 = sbr.rel (%p402) target = $region75
              $region72: #{lenet32_forward.1} parent=67 // loop_body
                %v408 = vld [vmem:[%s406] sm:$0xff]
                %409 = vst [vmem:[%s407] sm:$0xff] %v408
                %v410 = vld [vmem:[%s406 + $0x8] sm:$0xff]
                %411 = vst [vmem:[%s407 + $0x8] sm:$0xff] %v410
                %v412 = vld [vmem:[%s406 + $0x10] sm:$0xff]
                %413 = vst [vmem:[%s407 + $0x10] sm:$0xff] %v412
                %v414 = vld [vmem:[%s406 + $0x18] sm:$0xff]
                %415 = vst [vmem:[%s407 + $0x18] sm:$0xff] %v414
                %v416 = vld [vmem:[%s406 + $0x40] sm:$0xff]
                %417 = vst [vmem:[%s407 + $0x20] sm:$0xff] %v416
                %v418 = vld [vmem:[%s406 + $0x48] sm:$0xff]
                %419 = vst [vmem:[%s407 + $0x28] sm:$0xff] %v418
                %v420 = vld [vmem:[%s406 + $0x50] sm:$0xff]
                %421 = vst [vmem:[%s407 + $0x30] sm:$0xff] %v420
                %v422 = vld [vmem:[%s406 + $0x58] sm:$0xff]
                %423 = vst [vmem:[%s407 + $0x38] sm:$0xff] %v422
                %v424 = vld [vmem:[%s406 + $0x80] sm:$0xff]
                %425 = vst [vmem:[%s407 + $0x40] sm:$0xff] %v424
                %v426 = vld [vmem:[%s406 + $0x88] sm:$0xff]
                %427 = vst [vmem:[%s407 + $0x48] sm:$0xff] %v426
                %v428 = vld [vmem:[%s406 + $0x90] sm:$0xff]
                %429 = vst [vmem:[%s407 + $0x50] sm:$0xff] %v428
                %v430 = vld [vmem:[%s406 + $0x98] sm:$0xff]
                %431 = vst [vmem:[%s407 + $0x58] sm:$0xff] %v430
                %v432 = vld [vmem:[%s406 + $0xc0] sm:$0xff]
                %433 = vst [vmem:[%s407 + $0x60] sm:$0xff] %v432
                %v434 = vld [vmem:[%s406 + $0xc8] sm:$0xff]
                %435 = vst [vmem:[%s407 + $0x68] sm:$0xff] %v434
                %v436 = vld [vmem:[%s406 + $0xd0] sm:$0xff]
                %437 = vst [vmem:[%s407 + $0x70] sm:$0xff] %v436
                %v438 = vld [vmem:[%s406 + $0xd8] sm:$0xff]
                %439 = vst [vmem:[%s407 + $0x78] sm:$0xff] %v438
                %v440 = vld [vmem:[%s406 + $0x100] sm:$0xff]
                %441 = vst [vmem:[%s407 + $0x80] sm:$0xff] %v440
                %v442 = vld [vmem:[%s406 + $0x108] sm:$0xff]
                %443 = vst [vmem:[%s407 + $0x88] sm:$0xff] %v442
                %v444 = vld [vmem:[%s406 + $0x110] sm:$0xff]
                %445 = vst [vmem:[%s407 + $0x90] sm:$0xff] %v444
                %v446 = vld [vmem:[%s406 + $0x118] sm:$0xff]
                %447 = vst [vmem:[%s407 + $0x98] sm:$0xff] %v446
                %v448 = vld [vmem:[%s406 + $0x140] sm:$0xff]
                %449 = vst [vmem:[%s407 + $0xa0] sm:$0xff] %v448
                %v450 = vld [vmem:[%s406 + $0x148] sm:$0xff]
                %451 = vst [vmem:[%s407 + $0xa8] sm:$0xff] %v450
                %v452 = vld [vmem:[%s406 + $0x150] sm:$0xff]
                %453 = vst [vmem:[%s407 + $0xb0] sm:$0xff] %v452
                %v454 = vld [vmem:[%s406 + $0x158] sm:$0xff]
                %455 = vst [vmem:[%s407 + $0xb8] sm:$0xff] %v454
                %v456 = vld [vmem:[%s406 + $0x180] sm:$0xff]
                %457 = vst [vmem:[%s407 + $0xc0] sm:$0xff] %v456
                %v458 = vld [vmem:[%s406 + $0x188] sm:$0xff]
                %459 = vst [vmem:[%s407 + $0xc8] sm:$0xff] %v458
                %v460 = vld [vmem:[%s406 + $0x190] sm:$0xff]
                %461 = vst [vmem:[%s407 + $0xd0] sm:$0xff] %v460
                %v462 = vld [vmem:[%s406 + $0x198] sm:$0xff]
                %463 = vst [vmem:[%s407 + $0xd8] sm:$0xff] %v462
                %v464 = vld [vmem:[%s406 + $0x1c0] sm:$0xff]
                %465 = vst [vmem:[%s407 + $0xe0] sm:$0xff] %v464
                %v466 = vld [vmem:[%s406 + $0x1c8] sm:$0xff]
                %467 = vst [vmem:[%s407 + $0xe8] sm:$0xff] %v466
                %v468 = vld [vmem:[%s406 + $0x1d0] sm:$0xff]
                %469 = vst [vmem:[%s407 + $0xf0] sm:$0xff] %v468
                %v470 = vld [vmem:[%s406 + $0x1d8] sm:$0xff]
                %471 = vst [vmem:[%s407 + $0xf8] sm:$0xff] %v470
                %v472 = vld [vmem:[%s406 + $0x200] sm:$0xff]
                %473 = vst [vmem:[%s407 + $0x100] sm:$0xff] %v472
                %v474 = vld [vmem:[%s406 + $0x208] sm:$0xff]
                %475 = vst [vmem:[%s407 + $0x108] sm:$0xff] %v474
                %v476 = vld [vmem:[%s406 + $0x210] sm:$0xff]
                %477 = vst [vmem:[%s407 + $0x110] sm:$0xff] %v476
                %v478 = vld [vmem:[%s406 + $0x218] sm:$0xff]
                %479 = vst [vmem:[%s407 + $0x118] sm:$0xff] %v478
                %v480 = vld [vmem:[%s406 + $0x240] sm:$0xff]
                %481 = vst [vmem:[%s407 + $0x120] sm:$0xff] %v480
                %v482 = vld [vmem:[%s406 + $0x248] sm:$0xff]
                %483 = vst [vmem:[%s407 + $0x128] sm:$0xff] %v482
                %v484 = vld [vmem:[%s406 + $0x250] sm:$0xff]
                %485 = vst [vmem:[%s407 + $0x130] sm:$0xff] %v484
                %v486 = vld [vmem:[%s406 + $0x258] sm:$0xff]
                %487 = vst [vmem:[%s407 + $0x138] sm:$0xff] %v486
                %v488 = vld [vmem:[%s406 + $0x280] sm:$0xff]
                %489 = vst [vmem:[%s407 + $0x140] sm:$0xff] %v488
                %v490 = vld [vmem:[%s406 + $0x288] sm:$0xff]
                %491 = vst [vmem:[%s407 + $0x148] sm:$0xff] %v490
                %v492 = vld [vmem:[%s406 + $0x290] sm:$0xff]
                %493 = vst [vmem:[%s407 + $0x150] sm:$0xff] %v492
                %v494 = vld [vmem:[%s406 + $0x298] sm:$0xff]
                %495 = vst [vmem:[%s407 + $0x158] sm:$0xff] %v494
                %v496 = vld [vmem:[%s406 + $0x2c0] sm:$0xff]
                %497 = vst [vmem:[%s407 + $0x160] sm:$0xff] %v496
                %v498 = vld [vmem:[%s406 + $0x2c8] sm:$0xff]
                %499 = vst [vmem:[%s407 + $0x168] sm:$0xff] %v498
                %v500 = vld [vmem:[%s406 + $0x2d0] sm:$0xff]
                %501 = vst [vmem:[%s407 + $0x170] sm:$0xff] %v500
                %v502 = vld [vmem:[%s406 + $0x2d8] sm:$0xff]
                %503 = vst [vmem:[%s407 + $0x178] sm:$0xff] %v502
                %v504 = vld [vmem:[%s406 + $0x300] sm:$0xff]
                %505 = vst [vmem:[%s407 + $0x180] sm:$0xff] %v504
                %v506 = vld [vmem:[%s406 + $0x308] sm:$0xff]
                %507 = vst [vmem:[%s407 + $0x188] sm:$0xff] %v506
                %v508 = vld [vmem:[%s406 + $0x310] sm:$0xff]
                %509 = vst [vmem:[%s407 + $0x190] sm:$0xff] %v508
                %v510 = vld [vmem:[%s406 + $0x318] sm:$0xff]
                %511 = vst [vmem:[%s407 + $0x198] sm:$0xff] %v510
                %v512 = vld [vmem:[%s406 + $0x340] sm:$0xff]
                %513 = vst [vmem:[%s407 + $0x1a0] sm:$0xff] %v512
                %v514 = vld [vmem:[%s406 + $0x348] sm:$0xff]
                %515 = vst [vmem:[%s407 + $0x1a8] sm:$0xff] %v514
                %v516 = vld [vmem:[%s406 + $0x350] sm:$0xff]
                %517 = vst [vmem:[%s407 + $0x1b0] sm:$0xff] %v516
                %v518 = vld [vmem:[%s406 + $0x358] sm:$0xff]
                %519 = vst [vmem:[%s407 + $0x1b8] sm:$0xff] %v518
                %v520 = vld [vmem:[%s406 + $0x380] sm:$0xff]
                %521 = vst [vmem:[%s407 + $0x1c0] sm:$0xff] %v520
                %v522 = vld [vmem:[%s406 + $0x388] sm:$0xff]
                %523 = vst [vmem:[%s407 + $0x1c8] sm:$0xff] %v522
                %v524 = vld [vmem:[%s406 + $0x390] sm:$0xff]
                %525 = vst [vmem:[%s407 + $0x1d0] sm:$0xff] %v524
                %v526 = vld [vmem:[%s406 + $0x398] sm:$0xff]
                %527 = vst [vmem:[%s407 + $0x1d8] sm:$0xff] %v526
                %v528 = vld [vmem:[%s406 + $0x3c0] sm:$0xff]
                %529 = vst [vmem:[%s407 + $0x1e0] sm:$0xff] %v528
                %v530 = vld [vmem:[%s406 + $0x3c8] sm:$0xff]
                %531 = vst [vmem:[%s407 + $0x1e8] sm:$0xff] %v530
                %v532 = vld [vmem:[%s406 + $0x3d0] sm:$0xff]
                %533 = vst [vmem:[%s407 + $0x1f0] sm:$0xff] %v532
                %v534 = vld [vmem:[%s406 + $0x3d8] sm:$0xff]
                %535 = vst [vmem:[%s407 + $0x1f8] sm:$0xff] %v534
                %v536 = vld [vmem:[%s406 + $0x400] sm:$0xff]
                %537 = vst [vmem:[%s407 + $0x200] sm:$0xff] %v536
                %v538 = vld [vmem:[%s406 + $0x408] sm:$0xff]
                %539 = vst [vmem:[%s407 + $0x208] sm:$0xff] %v538
                %v540 = vld [vmem:[%s406 + $0x410] sm:$0xff]
                %541 = vst [vmem:[%s407 + $0x210] sm:$0xff] %v540
                %v542 = vld [vmem:[%s406 + $0x418] sm:$0xff]
                %543 = vst [vmem:[%s407 + $0x218] sm:$0xff] %v542
                %v544 = vld [vmem:[%s406 + $0x440] sm:$0xff]
                %545 = vst [vmem:[%s407 + $0x220] sm:$0xff] %v544
                %v546 = vld [vmem:[%s406 + $0x448] sm:$0xff]
                %547 = vst [vmem:[%s407 + $0x228] sm:$0xff] %v546
                %v548 = vld [vmem:[%s406 + $0x450] sm:$0xff]
                %549 = vst [vmem:[%s407 + $0x230] sm:$0xff] %v548
                %v550 = vld [vmem:[%s406 + $0x458] sm:$0xff]
                %551 = vst [vmem:[%s407 + $0x238] sm:$0xff] %v550
                %v552 = vld [vmem:[%s406 + $0x480] sm:$0xff]
                %553 = vst [vmem:[%s407 + $0x240] sm:$0xff] %v552
                %v554 = vld [vmem:[%s406 + $0x488] sm:$0xff]
                %555 = vst [vmem:[%s407 + $0x248] sm:$0xff] %v554
                %v556 = vld [vmem:[%s406 + $0x490] sm:$0xff]
                %557 = vst [vmem:[%s407 + $0x250] sm:$0xff] %v556
                %v558 = vld [vmem:[%s406 + $0x498] sm:$0xff]
                %559 = vst [vmem:[%s407 + $0x258] sm:$0xff] %v558
                %v560 = vld [vmem:[%s406 + $0x4c0] sm:$0xff]
                %561 = vst [vmem:[%s407 + $0x260] sm:$0xff] %v560
                %v562 = vld [vmem:[%s406 + $0x4c8] sm:$0xff]
                %563 = vst [vmem:[%s407 + $0x268] sm:$0xff] %v562
                %v564 = vld [vmem:[%s406 + $0x4d0] sm:$0xff]
                %565 = vst [vmem:[%s407 + $0x270] sm:$0xff] %v564
                %v566 = vld [vmem:[%s406 + $0x4d8] sm:$0xff]
                %567 = vst [vmem:[%s407 + $0x278] sm:$0xff] %v566
                %v568 = vld [vmem:[%s406 + $0x500] sm:$0xff]
                %569 = vst [vmem:[%s407 + $0x280] sm:$0xff] %v568
                %v570 = vld [vmem:[%s406 + $0x508] sm:$0xff]
                %571 = vst [vmem:[%s407 + $0x288] sm:$0xff] %v570
                %v572 = vld [vmem:[%s406 + $0x510] sm:$0xff]
                %573 = vst [vmem:[%s407 + $0x290] sm:$0xff] %v572
                %v574 = vld [vmem:[%s406 + $0x518] sm:$0xff]
                %575 = vst [vmem:[%s407 + $0x298] sm:$0xff] %v574
                %v576 = vld [vmem:[%s406 + $0x540] sm:$0xff]
                %577 = vst [vmem:[%s407 + $0x2a0] sm:$0xff] %v576
                %v578 = vld [vmem:[%s406 + $0x548] sm:$0xff]
                %579 = vst [vmem:[%s407 + $0x2a8] sm:$0xff] %v578
                %v580 = vld [vmem:[%s406 + $0x550] sm:$0xff]
                %581 = vst [vmem:[%s407 + $0x2b0] sm:$0xff] %v580
                %v582 = vld [vmem:[%s406 + $0x558] sm:$0xff]
                %583 = vst [vmem:[%s407 + $0x2b8] sm:$0xff] %v582
                %v584 = vld [vmem:[%s406 + $0x580] sm:$0xff]
                %585 = vst [vmem:[%s407 + $0x2c0] sm:$0xff] %v584
                %v586 = vld [vmem:[%s406 + $0x588] sm:$0xff]
                %587 = vst [vmem:[%s407 + $0x2c8] sm:$0xff] %v586
                %v588 = vld [vmem:[%s406 + $0x590] sm:$0xff]
                %589 = vst [vmem:[%s407 + $0x2d0] sm:$0xff] %v588
                %v590 = vld [vmem:[%s406 + $0x598] sm:$0xff]
                %591 = vst [vmem:[%s407 + $0x2d8] sm:$0xff] %v590
                %v592 = vld [vmem:[%s406 + $0x5c0] sm:$0xff]
                %593 = vst [vmem:[%s407 + $0x2e0] sm:$0xff] %v592
                %v594 = vld [vmem:[%s406 + $0x5c8] sm:$0xff]
                %595 = vst [vmem:[%s407 + $0x2e8] sm:$0xff] %v594
                %v596 = vld [vmem:[%s406 + $0x5d0] sm:$0xff]
                %597 = vst [vmem:[%s407 + $0x2f0] sm:$0xff] %v596
                %v598 = vld [vmem:[%s406 + $0x5d8] sm:$0xff]
                %599 = vst [vmem:[%s407 + $0x2f8] sm:$0xff] %v598
                %v600 = vld [vmem:[%s406 + $0x600] sm:$0xff]
                %601 = vst [vmem:[%s407 + $0x300] sm:$0xff] %v600
                %v602 = vld [vmem:[%s406 + $0x608] sm:$0xff]
                %603 = vst [vmem:[%s407 + $0x308] sm:$0xff] %v602
                %v604 = vld [vmem:[%s406 + $0x610] sm:$0xff]
                %605 = vst [vmem:[%s407 + $0x310] sm:$0xff] %v604
                %v606 = vld [vmem:[%s406 + $0x618] sm:$0xff]
                %607 = vst [vmem:[%s407 + $0x318] sm:$0xff] %v606
                %v608 = vld [vmem:[%s406 + $0x640] sm:$0xff]
                %609 = vst [vmem:[%s407 + $0x320] sm:$0xff] %v608
                %v610 = vld [vmem:[%s406 + $0x648] sm:$0xff]
                %611 = vst [vmem:[%s407 + $0x328] sm:$0xff] %v610
                %v612 = vld [vmem:[%s406 + $0x650] sm:$0xff]
                %613 = vst [vmem:[%s407 + $0x330] sm:$0xff] %v612
                %v614 = vld [vmem:[%s406 + $0x658] sm:$0xff]
                %615 = vst [vmem:[%s407 + $0x338] sm:$0xff] %v614
                %v616 = vld [vmem:[%s406 + $0x680] sm:$0xff]
                %617 = vst [vmem:[%s407 + $0x340] sm:$0xff] %v616
                %v618 = vld [vmem:[%s406 + $0x688] sm:$0xff]
                %619 = vst [vmem:[%s407 + $0x348] sm:$0xff] %v618
                %v620 = vld [vmem:[%s406 + $0x690] sm:$0xff]
                %621 = vst [vmem:[%s407 + $0x350] sm:$0xff] %v620
                %v622 = vld [vmem:[%s406 + $0x698] sm:$0xff]
                %623 = vst [vmem:[%s407 + $0x358] sm:$0xff] %v622
                %v624 = vld [vmem:[%s406 + $0x6c0] sm:$0xff]
                %625 = vst [vmem:[%s407 + $0x360] sm:$0xff] %v624
                %v626 = vld [vmem:[%s406 + $0x6c8] sm:$0xff]
                %627 = vst [vmem:[%s407 + $0x368] sm:$0xff] %v626
                %v628 = vld [vmem:[%s406 + $0x6d0] sm:$0xff]
                %629 = vst [vmem:[%s407 + $0x370] sm:$0xff] %v628
                %v630 = vld [vmem:[%s406 + $0x6d8] sm:$0xff]
                %631 = vst [vmem:[%s407 + $0x378] sm:$0xff] %v630
                %v632 = vld [vmem:[%s406 + $0x700] sm:$0xff]
                %633 = vst [vmem:[%s407 + $0x380] sm:$0xff] %v632
                %v634 = vld [vmem:[%s406 + $0x708] sm:$0xff]
                %635 = vst [vmem:[%s407 + $0x388] sm:$0xff] %v634
                %v636 = vld [vmem:[%s406 + $0x710] sm:$0xff]
                %637 = vst [vmem:[%s407 + $0x390] sm:$0xff] %v636
                %v638 = vld [vmem:[%s406 + $0x718] sm:$0xff]
                %639 = vst [vmem:[%s407 + $0x398] sm:$0xff] %v638
                %v640 = vld [vmem:[%s406 + $0x740] sm:$0xff]
                %641 = vst [vmem:[%s407 + $0x3a0] sm:$0xff] %v640
                %v642 = vld [vmem:[%s406 + $0x748] sm:$0xff]
                %643 = vst [vmem:[%s407 + $0x3a8] sm:$0xff] %v642
                %v644 = vld [vmem:[%s406 + $0x750] sm:$0xff]
                %645 = vst [vmem:[%s407 + $0x3b0] sm:$0xff] %v644
                %v646 = vld [vmem:[%s406 + $0x758] sm:$0xff]
                %647 = vst [vmem:[%s407 + $0x3b8] sm:$0xff] %v646
                %v648 = vld [vmem:[%s406 + $0x780] sm:$0xff]
                %649 = vst [vmem:[%s407 + $0x3c0] sm:$0xff] %v648
                %v650 = vld [vmem:[%s406 + $0x788] sm:$0xff]
                %651 = vst [vmem:[%s407 + $0x3c8] sm:$0xff] %v650
                %v652 = vld [vmem:[%s406 + $0x790] sm:$0xff]
                %653 = vst [vmem:[%s407 + $0x3d0] sm:$0xff] %v652
                %v654 = vld [vmem:[%s406 + $0x798] sm:$0xff]
                %655 = vst [vmem:[%s407 + $0x3d8] sm:$0xff] %v654
                %v656 = vld [vmem:[%s406 + $0x7c0] sm:$0xff]
                %657 = vst [vmem:[%s407 + $0x3e0] sm:$0xff] %v656
                %v658 = vld [vmem:[%s406 + $0x7c8] sm:$0xff]
                %659 = vst [vmem:[%s407 + $0x3e8] sm:$0xff] %v658
                %v660 = vld [vmem:[%s406 + $0x7d0] sm:$0xff]
                %661 = vst [vmem:[%s407 + $0x3f0] sm:$0xff] %v660
                %v662 = vld [vmem:[%s406 + $0x7d8] sm:$0xff]
                %663 = vst [vmem:[%s407 + $0x3f8] sm:$0xff] %v662
                %v664 = vld [vmem:[%s406 + $0x800] sm:$0xff]
                %665 = vst [vmem:[%s407 + $0x400] sm:$0xff] %v664
                %v666 = vld [vmem:[%s406 + $0x808] sm:$0xff]
                %667 = vst [vmem:[%s407 + $0x408] sm:$0xff] %v666
                %v668 = vld [vmem:[%s406 + $0x810] sm:$0xff]
                %669 = vst [vmem:[%s407 + $0x410] sm:$0xff] %v668
                %v670 = vld [vmem:[%s406 + $0x818] sm:$0xff]
                %671 = vst [vmem:[%s407 + $0x418] sm:$0xff] %v670
                %v672 = vld [vmem:[%s406 + $0x840] sm:$0xff]
                %673 = vst [vmem:[%s407 + $0x420] sm:$0xff] %v672
                %v674 = vld [vmem:[%s406 + $0x848] sm:$0xff]
                %675 = vst [vmem:[%s407 + $0x428] sm:$0xff] %v674
                %v676 = vld [vmem:[%s406 + $0x850] sm:$0xff]
                %677 = vst [vmem:[%s407 + $0x430] sm:$0xff] %v676
                %v678 = vld [vmem:[%s406 + $0x858] sm:$0xff]
                %679 = vst [vmem:[%s407 + $0x438] sm:$0xff] %v678
                %v680 = vld [vmem:[%s406 + $0x880] sm:$0xff]
                %681 = vst [vmem:[%s407 + $0x440] sm:$0xff] %v680
                %v682 = vld [vmem:[%s406 + $0x888] sm:$0xff]
                %683 = vst [vmem:[%s407 + $0x448] sm:$0xff] %v682
                %v684 = vld [vmem:[%s406 + $0x890] sm:$0xff]
                %685 = vst [vmem:[%s407 + $0x450] sm:$0xff] %v684
                %v686 = vld [vmem:[%s406 + $0x898] sm:$0xff]
                %687 = vst [vmem:[%s407 + $0x458] sm:$0xff] %v686
                %v688 = vld [vmem:[%s406 + $0x8c0] sm:$0xff]
                %689 = vst [vmem:[%s407 + $0x460] sm:$0xff] %v688
                %v690 = vld [vmem:[%s406 + $0x8c8] sm:$0xff]
                %691 = vst [vmem:[%s407 + $0x468] sm:$0xff] %v690
                %v692 = vld [vmem:[%s406 + $0x8d0] sm:$0xff]
                %693 = vst [vmem:[%s407 + $0x470] sm:$0xff] %v692
                %v694 = vld [vmem:[%s406 + $0x8d8] sm:$0xff]
                %695 = vst [vmem:[%s407 + $0x478] sm:$0xff] %v694
                %v696 = vld [vmem:[%s406 + $0x900] sm:$0xff]
                %697 = vst [vmem:[%s407 + $0x480] sm:$0xff] %v696
                %v698 = vld [vmem:[%s406 + $0x908] sm:$0xff]
                %699 = vst [vmem:[%s407 + $0x488] sm:$0xff] %v698
                %v700 = vld [vmem:[%s406 + $0x910] sm:$0xff]
                %701 = vst [vmem:[%s407 + $0x490] sm:$0xff] %v700
                %v702 = vld [vmem:[%s406 + $0x918] sm:$0xff]
                %703 = vst [vmem:[%s407 + $0x498] sm:$0xff] %v702
                %v704 = vld [vmem:[%s406 + $0x940] sm:$0xff]
                %705 = vst [vmem:[%s407 + $0x4a0] sm:$0xff] %v704
                %v706 = vld [vmem:[%s406 + $0x948] sm:$0xff]
                %707 = vst [vmem:[%s407 + $0x4a8] sm:$0xff] %v706
                %v708 = vld [vmem:[%s406 + $0x950] sm:$0xff]
                %709 = vst [vmem:[%s407 + $0x4b0] sm:$0xff] %v708
                %v710 = vld [vmem:[%s406 + $0x958] sm:$0xff]
                %711 = vst [vmem:[%s407 + $0x4b8] sm:$0xff] %v710
                %v712 = vld [vmem:[%s406 + $0x980] sm:$0xff]
                %713 = vst [vmem:[%s407 + $0x4c0] sm:$0xff] %v712
                %v714 = vld [vmem:[%s406 + $0x988] sm:$0xff]
                %715 = vst [vmem:[%s407 + $0x4c8] sm:$0xff] %v714
                %v716 = vld [vmem:[%s406 + $0x990] sm:$0xff]
                %717 = vst [vmem:[%s407 + $0x4d0] sm:$0xff] %v716
                %v718 = vld [vmem:[%s406 + $0x998] sm:$0xff]
                %719 = vst [vmem:[%s407 + $0x4d8] sm:$0xff] %v718
                %v720 = vld [vmem:[%s406 + $0x9c0] sm:$0xff]
                %721 = vst [vmem:[%s407 + $0x4e0] sm:$0xff] %v720
                %v722 = vld [vmem:[%s406 + $0x9c8] sm:$0xff]
                %723 = vst [vmem:[%s407 + $0x4e8] sm:$0xff] %v722
                %v724 = vld [vmem:[%s406 + $0x9d0] sm:$0xff]
                %725 = vst [vmem:[%s407 + $0x4f0] sm:$0xff] %v724
                %v726 = vld [vmem:[%s406 + $0x9d8] sm:$0xff]
                %727 = vst [vmem:[%s407 + $0x4f8] sm:$0xff] %v726
              $region73: #{lenet32_forward.1} parent=67 // loop_footer
                %s405 = sadd.s32 1, %s401
              $region74: #{lenet32_forward.1} parent=67 // loop_footer_branch
                %400 = sbr.rel target = $region70
              $region75: #{lenet32_forward.1} parent=67 // loop_exit
                _
            $region68: #{lenet32_forward.1} parent=63 // pred_fallthru
              _
            // Predicated region
            $region76: #{lenet32_forward.1} parent=63 // pred_check
              _
            $region77: #{lenet32_forward.1} parent=63 // pred_check_branch
              %729 = sbr.rel target = $region79
            $region78: #{lenet32_forward.1} parent=63 // pred_region
              _
            $region79: #{lenet32_forward.1} parent=63 // pred_fallthru
              _
          $region64: #{lenet32_forward.1} parent=59 // pred_fallthru
            _
          %730 = vnop
        $region60: #{lenet32_forward.1} parent=55 // pred_fallthru
          _
      $region56: #{lenet32_forward.1} parent=5 // pred_fallthru
        _
      %p731 = scmp.le.s32.totalorder 1, %s23
      %p732 = scmp.lt.s32.totalorder %s23, 3
      %p733 = pnand %p731, %p732
      %p734 = pneg %p733
      // Predicated region
      $region80: #{lenet32_forward.1} parent=5 // pred_check
        _
      $region81: #{lenet32_forward.1} parent=5 // pred_check_branch
        %736 = sbr.rel (%p733) target = $region83
      $region82: #{lenet32_forward.1} parent=5 // pred_region
        %s737 = ssub.s32 %s23, 1
        %s738 = sand.u32 %s36, 1
        %s739 = sand.u32 %s36, 1
        %s740 = smul.addr %s739, 1280
        %s741 = scalar_lea.vmem [#allocation2], %s740
        // Predicated region
        $region84: #{lenet32_forward.1} parent=82 // pred_check
          %p742 = pneg %p49
        $region85: #{lenet32_forward.1} parent=82 // pred_check_branch
          %744 = sbr.rel (%p742) target = $region87
        $region86: #{lenet32_forward.1} parent=82 // pred_region
          _
        $region87: #{lenet32_forward.1} parent=82 // pred_fallthru
          _
        %s745 = sand.u32 %s36, 1
        %s746 = sand.u32 %s36, 1
        %s747 = smul.addr %s746, 1280
        %s748 = scalar_lea.vmem [#allocation2], %s747
        %p749 = pneg %p49
        %p750 = pneg %p46
        %p751 = pneg %p70
        %p752 = pneg %p67
        %p753 = pneg %p91
        %p754 = pneg %p88
        %p755 = pneg %p112
        %p756 = pneg %p109
        %p757 = pneg %p133
        %p758 = pneg %p130
        %p759 = pneg %p154
        %p760 = pneg %p151
        %p761 = pneg %p175
        %p762 = pneg %p172
        %p763 = pneg %p196
        %p764 = pneg %p193
        %p765 = pneg %p217
        %p766 = pneg %p214
        %p767 = pneg %p238
        %p768 = pneg %p235
        %p769 = pneg %p259
        %p770 = pneg %p256
        %p771 = pneg %p285
        %p772 = pneg %p282
        %s773 = sand.u32 %s272, 1
        %s774 = sand.u32 %s272, 1
        %s775 = smul.addr %s774, 256
        %s776 = scalar_lea.vmem [#allocation3], %s775
        %p777 = pneg %p311
        %p778 = pneg %p308
        %s779 = sand.u32 %s298, 1
        %s780 = sand.u32 %s298, 1
        %s781 = smul.addr %s780, 128
        %s782 = scalar_lea.vmem [#allocation4], %s781
        %p783 = pneg %p337
        %p784 = pneg %p334
        %s785 = sand.u32 %s324, 1
        %s786 = scalar_lea.sflag [#allocation6], %s785
        %s787 = sand.u32 %s324, 1
        %s788 = smul.addr %s787, 4
        %s789 = scalar_lea.vmem [#allocation5], %s788
        %s790 = smul.u32 8, %s28
        %s791 = smul.u32 8, %s28
        %s792 = smul.u32 8, %s28
        %v794 = vld [vmem:[%s1] sm:$0x7]
        %v795 = vld [vmem:[%s741] sm:$0xff]
        %v796 = vld [vmem:[%s741 + $0x8] sm:$0xff]
        %v797 = vld [vmem:[%s741 + $0x10] sm:$0xff]
        %v798 = vld [vmem:[%s741 + $0x18] sm:$0xff]
        %v799 = vld [vmem:[%s741 + $0x20] sm:$0xff]
        %v800 = vld [vmem:[%s741 + $0x28] sm:$0xff]
        %v801 = vld [vmem:[%s741 + $0x30] sm:$0xff]
        %v802 = vld [vmem:[%s741 + $0x38] sm:$0xff]
        %v803 = vld [vmem:[%s741 + $0x40] sm:$0xff]
        %v804 = vld [vmem:[%s741 + $0x48] sm:$0xff]
        %v805 = vld [vmem:[%s741 + $0x50] sm:$0xff]
        %v806 = vld [vmem:[%s741 + $0x58] sm:$0xff]
        %v807 = vld [vmem:[%s741 + $0x60] sm:$0xff]
        %v808 = vld [vmem:[%s741 + $0x68] sm:$0xff]
        %v809 = vld [vmem:[%s741 + $0x70] sm:$0xff]
        %v810 = vld [vmem:[%s741 + $0x78] sm:$0xff]
        %v811 = vld [vmem:[%s741 + $0x80] sm:$0xff]
        %v812 = vld [vmem:[%s741 + $0x88] sm:$0xff]
        %v813 = vld [vmem:[%s741 + $0x90] sm:$0xff]
        %v814 = vld [vmem:[%s741 + $0x98] sm:$0xff]
        %v815 = vld [vmem:[%s741 + $0xa0] sm:$0xff]
        %v816 = vld [vmem:[%s741 + $0xa8] sm:$0xff]
        %v817 = vld [vmem:[%s741 + $0xb0] sm:$0xff]
        %v818 = vld [vmem:[%s741 + $0xb8] sm:$0xff]
        %v819 = vld [vmem:[%s741 + $0xc0] sm:$0xff]
        %v820 = vld [vmem:[%s741 + $0xc8] sm:$0xff]
        %v821 = vld [vmem:[%s741 + $0xd0] sm:$0xff]
        %v822 = vld [vmem:[%s741 + $0xd8] sm:$0xff]
        %v823 = vld [vmem:[%s741 + $0xe0] sm:$0xff]
        %v824 = vld [vmem:[%s741 + $0xe8] sm:$0xff]
        %v825 = vld [vmem:[%s741 + $0xf0] sm:$0xff]
        %v826 = vld [vmem:[%s741 + $0xf8] sm:$0xff]
        %v827 = vld [vmem:[%s741 + $0x100] sm:$0xff]
        %v828 = vld [vmem:[%s741 + $0x108] sm:$0xff]
        %v829 = vld [vmem:[%s741 + $0x110] sm:$0xff]
        %v830 = vld [vmem:[%s741 + $0x118] sm:$0xff]
        %v831 = vld [vmem:[%s741 + $0x120] sm:$0x33]
        %v832 = vld [vmem:[%s741 + $0x128] sm:$0x33]
        %v833 = vld [vmem:[%s741 + $0x130] sm:$0x33]
        %v834 = vld [vmem:[%s741 + $0x138] sm:$0x33]
        %v835 = vld [vmem:[%s2] sm:$0x3f]
        %837 = vset.pattern.permute.xlu0 0
        %838 = vperm.xlu0 %837, %v835
        %v839 = vpop.permute.xlu0 %838
        %v881 = vunpack.c.l.b16 %v795
        %v882 = vunpack.c.h.b16 %v795
        %v883 = vunpack.c.l.b16 %v796
        %v884 = vunpack.c.h.b16 %v796
        %v885 = vunpack.c.l.b16 %v797
        %v886 = vunpack.c.h.b16 %v797
        %v887 = vunpack.c.l.b16 %v798
        %v888 = vunpack.c.h.b16 %v798
        %v889 = vunpack.c.l.b16 %v799
        %v890 = vunpack.c.h.b16 %v799
        %v891 = vunpack.c.l.b16 %v800
        %v892 = vunpack.c.h.b16 %v800
        %v893 = vunpack.c.l.b16 %v801
        %v894 = vunpack.c.h.b16 %v801
        %v895 = vunpack.c.l.b16 %v802
        %v896 = vunpack.c.h.b16 %v802
        %v897 = vunpack.c.l.b16 %v803
        %v898 = vunpack.c.h.b16 %v803
        %v899 = vunpack.c.l.b16 %v804
        %v900 = vunpack.c.h.b16 %v804
        %v901 = vunpack.c.l.b16 %v805
        %v902 = vunpack.c.h.b16 %v805
        %v903 = vunpack.c.l.b16 %v806
        %v904 = vunpack.c.h.b16 %v806
        %v905 = vunpack.c.l.b16 %v807
        %v906 = vunpack.c.h.b16 %v807
        %v907 = vunpack.c.l.b16 %v808
        %v908 = vunpack.c.h.b16 %v808
        %v909 = vunpack.c.l.b16 %v809
        %v910 = vunpack.c.h.b16 %v809
        %v911 = vunpack.c.l.b16 %v810
        %v912 = vunpack.c.h.b16 %v810
        %v913 = vunpack.c.l.b16 %v811
        %v914 = vunpack.c.h.b16 %v811
        %v915 = vunpack.c.l.b16 %v812
        %v916 = vunpack.c.h.b16 %v812
        %v917 = vunpack.c.l.b16 %v813
        %v918 = vunpack.c.h.b16 %v813
        %v919 = vunpack.c.l.b16 %v814
        %v920 = vunpack.c.h.b16 %v814
        %v921 = vunpack.c.l.b16 %v815
        %v922 = vunpack.c.h.b16 %v815
        %v923 = vunpack.c.l.b16 %v816
        %v924 = vunpack.c.h.b16 %v816
        %v925 = vunpack.c.l.b16 %v817
        %v926 = vunpack.c.h.b16 %v817
        %v927 = vunpack.c.l.b16 %v818
        %v928 = vunpack.c.h.b16 %v818
        %v929 = vunpack.c.l.b16 %v819
        %v930 = vunpack.c.h.b16 %v819
        %v931 = vunpack.c.l.b16 %v820
        %v932 = vunpack.c.h.b16 %v820
        %v933 = vunpack.c.l.b16 %v821
        %v934 = vunpack.c.h.b16 %v821
        %v935 = vunpack.c.l.b16 %v822
        %v936 = vunpack.c.h.b16 %v822
        %v937 = vunpack.c.l.b16 %v823
        %v938 = vunpack.c.h.b16 %v823
        %v939 = vunpack.c.l.b16 %v824
        %v940 = vunpack.c.h.b16 %v824
        %v941 = vunpack.c.l.b16 %v825
        %v942 = vunpack.c.h.b16 %v825
        %v943 = vunpack.c.l.b16 %v826
        %v944 = vunpack.c.h.b16 %v826
        %v945 = vunpack.c.l.b16 %v827
        %v946 = vunpack.c.h.b16 %v827
        %v947 = vunpack.c.l.b16 %v828
        %v948 = vunpack.c.h.b16 %v828
        %v949 = vunpack.c.l.b16 %v829
        %v950 = vunpack.c.h.b16 %v829
        %v951 = vunpack.c.l.b16 %v830
        %v952 = vunpack.c.h.b16 %v830
        %v953 = vunpack.c.l.b16 %v831
        %v954 = vunpack.c.h.b16 %v831
        %v955 = vunpack.c.l.b16 %v832
        %v956 = vunpack.c.h.b16 %v832
        %v957 = vunpack.c.l.b16 %v833
        %v958 = vunpack.c.h.b16 %v833
        %v959 = vunpack.c.l.b16 %v834
        %v960 = vunpack.c.h.b16 %v834
        %v961 = vpack.c.b16 %v889, %v881
        %v962 = vpack.c.b16 %v890, %v882
        %v963 = vpack.c.b16 %v891, %v883
        %v964 = vpack.c.b16 %v892, %v884
        %v965 = vpack.c.b16 %v893, %v885
        %v966 = vpack.c.b16 %v894, %v886
        %v967 = vpack.c.b16 %v895, %v887
        %v968 = vpack.c.b16 %v896, %v888
        %v969 = vpack.c.b16 %v905, %v897
        %v970 = vpack.c.b16 %v906, %v898
        %v971 = vpack.c.b16 %v907, %v899
        %v972 = vpack.c.b16 %v908, %v900
        %v973 = vpack.c.b16 %v909, %v901
        %v974 = vpack.c.b16 %v910, %v902
        %v975 = vpack.c.b16 %v911, %v903
        %v976 = vpack.c.b16 %v912, %v904
        %v977 = vpack.c.b16 %v921, %v913
        %v978 = vpack.c.b16 %v922, %v914
        %v979 = vpack.c.b16 %v923, %v915
        %v980 = vpack.c.b16 %v924, %v916
        %v981 = vpack.c.b16 %v925, %v917
        %v982 = vpack.c.b16 %v926, %v918
        %v983 = vpack.c.b16 %v927, %v919
        %v984 = vpack.c.b16 %v928, %v920
        %v985 = vpack.c.b16 %v937, %v929
        %v986 = vpack.c.b16 %v938, %v930
        %v987 = vpack.c.b16 %v939, %v931
        %v988 = vpack.c.b16 %v940, %v932
        %v989 = vpack.c.b16 %v941, %v933
        %v990 = vpack.c.b16 %v942, %v934
        %v991 = vpack.c.b16 %v943, %v935
        %v992 = vpack.c.b16 %v944, %v936
        %v993 = vpack.c.b16 %v953, %v945
        %v994 = vpack.c.b16 %v954, %v946
        %v995 = vpack.c.b16 %v955, %v947
        %v996 = vpack.c.b16 %v956, %v948
        %v997 = vpack.c.b16 %v957, %v949
        %v998 = vpack.c.b16 %v958, %v950
        %v999 = vpack.c.b16 %v959, %v951
        %v1000 = vpack.c.b16 %v960, %v952
        %vm1033 = vcmask 613376
        %v1035 = vsel %vm1033, %v794, 0
        %vm1037 = vcmask 1044480
        %vm1038 = vcmask 1045504
        %v1039 = vsel %vm1037, 4294967295, 65535
        %v1040 = vsel %vm1038, %v1039, 0
        %v1042 = vand.u32 %v993, %v1040
        %v1045 = vand.u32 %v994, %v1040
        %v1048 = vand.u32 %v995, %v1040
        %v1051 = vand.u32 %v996, %v1040
        %v1054 = vand.u32 %v997, %v1040
        %v1057 = vand.u32 %v998, %v1040
        %v1060 = vand.u32 %v999, %v1040
        %v1063 = vand.u32 %v1000, %v1040
        %1065 = vmatpush.bf16.msra.mxu0 0
        %1066 = vmatpush.bf16.msra.mxu0 0
        %1067 = vmatpush.bf16.msra.mxu0 0
        %1068 = vmatpush.bf16.msra.mxu0 %v1042
        %1069 = vmatpush.bf16.msra.mxu0 %v985
        %1070 = vmatpush.bf16.msra.mxu0 %v977
        %1071 = vmatpush.bf16.msra.mxu0 %v969
        %1072 = vmatpush.bf16.msra.mxu0 %v961
        %1073 = vmatmul.bf16.gmra.mxu0 %v1035
        %v1074 = vpop.f32.mrf.mxu0
        %v1075 = vadd.f32 %v839, %v1074
        %v1076 = vpop.f32.mrf.mxu0
        %1077 = vdwg.mxu0
        %1078 = vmatpush.bf16.msra.mxu0 0
        %1079 = vmatpush.bf16.msra.mxu0 0
        %1080 = vmatpush.bf16.msra.mxu0 0
        %1081 = vmatpush.bf16.msra.mxu0 %v1045
        %1082 = vmatpush.bf16.msra.mxu0 %v986
        %1083 = vmatpush.bf16.msra.mxu0 %v978
        %1084 = vmatpush.bf16.msra.mxu0 %v970
        %1085 = vmatpush.bf16.msra.mxu0 %v962
        %1086 = vmatmul.bf16.gmra.mxu0 %v1035
        %v1087 = vpop.f32.mrf.mxu0
        %v1088 = vadd.f32 %v839, %v1087
        %v1089 = vpop.f32.mrf.mxu0
        %1090 = vdwg.mxu0
        %1091 = vmatpush.bf16.msra.mxu0 0
        %1092 = vmatpush.bf16.msra.mxu0 0
        %1093 = vmatpush.bf16.msra.mxu0 0
        %1094 = vmatpush.bf16.msra.mxu0 %v1048
        %1095 = vmatpush.bf16.msra.mxu0 %v987
        %1096 = vmatpush.bf16.msra.mxu0 %v979
        %1097 = vmatpush.bf16.msra.mxu0 %v971
        %1098 = vmatpush.bf16.msra.mxu0 %v963
        %1099 = vmatmul.bf16.gmra.mxu0 %v1035
        %v1100 = vpop.f32.mrf.mxu0
        %v1101 = vadd.f32 %v839, %v1100
        %v1102 = vpop.f32.mrf.mxu0
        %1103 = vdwg.mxu0
        %1104 = vmatpush.bf16.msra.mxu0 0
        %1105 = vmatpush.bf16.msra.mxu0 0
        %1106 = vmatpush.bf16.msra.mxu0 0
        %1107 = vmatpush.bf16.msra.mxu0 %v1051
        %1108 = vmatpush.bf16.msra.mxu0 %v988
        %1109 = vmatpush.bf16.msra.mxu0 %v980
        %1110 = vmatpush.bf16.msra.mxu0 %v972
        %1111 = vmatpush.bf16.msra.mxu0 %v964
        %1112 = vmatmul.bf16.gmra.mxu0 %v1035
        %v1113 = vpop.f32.mrf.mxu0
        %v1114 = vadd.f32 %v839, %v1113
        %v1115 = vpop.f32.mrf.mxu0
        %1116 = vdwg.mxu0
        %1117 = vmatpush.bf16.msra.mxu0 0
        %1118 = vmatpush.bf16.msra.mxu0 0
        %1119 = vmatpush.bf16.msra.mxu0 0
        %1120 = vmatpush.bf16.msra.mxu0 %v1054
        %1121 = vmatpush.bf16.msra.mxu0 %v989
        %1122 = vmatpush.bf16.msra.mxu0 %v981
        %1123 = vmatpush.bf16.msra.mxu0 %v973
        %1124 = vmatpush.bf16.msra.mxu0 %v965
        %1125 = vmatmul.bf16.gmra.mxu0 %v1035
        %v1126 = vpop.f32.mrf.mxu0
        %v1127 = vadd.f32 %v839, %v1126
        %v1128 = vpop.f32.mrf.mxu0
        %1129 = vdwg.mxu0
        %1130 = vmatpush.bf16.msra.mxu0 0
        %1131 = vmatpush.bf16.msra.mxu0 0
        %1132 = vmatpush.bf16.msra.mxu0 0
        %1133 = vmatpush.bf16.msra.mxu0 %v1057
        %1134 = vmatpush.bf16.msra.mxu0 %v990
        %1135 = vmatpush.bf16.msra.mxu0 %v982
        %1136 = vmatpush.bf16.msra.mxu0 %v974
        %1137 = vmatpush.bf16.msra.mxu0 %v966
        %1138 = vmatmul.bf16.gmra.mxu0 %v1035
        %v1139 = vpop.f32.mrf.mxu0
        %v1140 = vadd.f32 %v839, %v1139
        %v1141 = vpop.f32.mrf.mxu0
        %1142 = vdwg.mxu0
        %1143 = vmatpush.bf16.msra.mxu0 0
        %1144 = vmatpush.bf16.msra.mxu0 0
        %1145 = vmatpush.bf16.msra.mxu0 0
        %1146 = vmatpush.bf16.msra.mxu0 %v1060
        %1147 = vmatpush.bf16.msra.mxu0 %v991
        %1148 = vmatpush.bf16.msra.mxu0 %v983
        %1149 = vmatpush.bf16.msra.mxu0 %v975
        %1150 = vmatpush.bf16.msra.mxu0 %v967
        %1151 = vmatmul.bf16.gmra.mxu0 %v1035
        %v1152 = vpop.f32.mrf.mxu0
        %v1153 = vadd.f32 %v839, %v1152
        %v1154 = vpop.f32.mrf.mxu0
        %1155 = vdwg.mxu0
        %1156 = vmatpush.bf16.msra.mxu0 0
        %1157 = vmatpush.bf16.msra.mxu0 0
        %1158 = vmatpush.bf16.msra.mxu0 0
        %1159 = vmatpush.bf16.msra.mxu0 %v1063
        %1160 = vmatpush.bf16.msra.mxu0 %v992
        %1161 = vmatpush.bf16.msra.mxu0 %v984
        %1162 = vmatpush.bf16.msra.mxu0 %v976
        %1163 = vmatpush.bf16.msra.mxu0 %v968
        %1164 = vmatmul.bf16.gmra.mxu0 %v1035
        %v1165 = vpop.f32.mrf.mxu0
        %v1166 = vadd.f32 %v839, %v1165
        %v1167 = vpop.f32.mrf.mxu0
        %1168 = vdwg.mxu0
        %v1169 = vmax.f32 %v1075, 0.0
        %v1170 = vmax.f32 %v1088, 0.0
        %v1171 = vmax.f32 %v1101, 0.0
        %v1172 = vmax.f32 %v1114, 0.0
        %v1173 = vmax.f32 %v1127, 0.0
        %v1174 = vmax.f32 %v1140, 0.0
        %v1175 = vmax.f32 %v1153, 0.0
        %v1176 = vmax.f32 %v1166, 0.0
        %1177 = vst [vmem:[%s776] sm:$0x3f] %v1169
        %1178 = vst [vmem:[%s776 + $0x8] sm:$0x3f] %v1170
        %1179 = vst [vmem:[%s776 + $0x10] sm:$0x3f] %v1171
        %1180 = vst [vmem:[%s776 + $0x18] sm:$0x3f] %v1172
        %1181 = vst [vmem:[%s776 + $0x20] sm:$0x3f] %v1173
        %1182 = vst [vmem:[%s776 + $0x28] sm:$0x3f] %v1174
        %1183 = vst [vmem:[%s776 + $0x30] sm:$0x3f] %v1175
        %1184 = vst [vmem:[%s776 + $0x38] sm:$0x3f] %v1176
        %v1185 = vld [vmem:[%s1] sm:$0x7]
        %s1186 = scalar_lea.vmem %s741, 320 [#allocation2]
        %v1187 = vld [vmem:[%s1186] sm:$0xff]
        %v1188 = vld [vmem:[%s1186 + $0x8] sm:$0xff]
        %v1189 = vld [vmem:[%s1186 + $0x10] sm:$0xff]
        %v1190 = vld [vmem:[%s1186 + $0x18] sm:$0xff]
        %v1191 = vld [vmem:[%s1186 + $0x20] sm:$0xff]
        %v1192 = vld [vmem:[%s1186 + $0x28] sm:$0xff]
        %v1193 = vld [vmem:[%s1186 + $0x30] sm:$0xff]
        %v1194 = vld [vmem:[%s1186 + $0x38] sm:$0xff]
        %v1195 = vld [vmem:[%s1186 + $0x40] sm:$0xff]
        %v1196 = vld [vmem:[%s1186 + $0x48] sm:$0xff]
        %v1197 = vld [vmem:[%s1186 + $0x50] sm:$0xff]
        %v1198 = vld [vmem:[%s1186 + $0x58] sm:$0xff]
        %v1199 = vld [vmem:[%s1186 + $0x60] sm:$0xff]
        %v1200 = vld [vmem:[%s1186 + $0x68] sm:$0xff]
        %v1201 = vld [vmem:[%s1186 + $0x70] sm:$0xff]
        %v1202 = vld [vmem:[%s1186 + $0x78] sm:$0xff]
        %v1203 = vld [vmem:[%s1186 + $0x80] sm:$0xff]
        %v1204 = vld [vmem:[%s1186 + $0x88] sm:$0xff]
        %v1205 = vld [vmem:[%s1186 + $0x90] sm:$0xff]
        %v1206 = vld [vmem:[%s1186 + $0x98] sm:$0xff]
        %v1207 = vld [vmem:[%s1186 + $0xa0] sm:$0xff]
        %v1208 = vld [vmem:[%s1186 + $0xa8] sm:$0xff]
        %v1209 = vld [vmem:[%s1186 + $0xb0] sm:$0xff]
        %v1210 = vld [vmem:[%s1186 + $0xb8] sm:$0xff]
        %v1211 = vld [vmem:[%s1186 + $0xc0] sm:$0xff]
        %v1212 = vld [vmem:[%s1186 + $0xc8] sm:$0xff]
        %v1213 = vld [vmem:[%s1186 + $0xd0] sm:$0xff]
        %v1214 = vld [vmem:[%s1186 + $0xd8] sm:$0xff]
        %v1215 = vld [vmem:[%s1186 + $0xe0] sm:$0xff]
        %v1216 = vld [vmem:[%s1186 + $0xe8] sm:$0xff]
        %v1217 = vld [vmem:[%s1186 + $0xf0] sm:$0xff]
        %v1218 = vld [vmem:[%s1186 + $0xf8] sm:$0xff]
        %v1219 = vld [vmem:[%s1186 + $0x100] sm:$0xff]
        %v1220 = vld [vmem:[%s1186 + $0x108] sm:$0xff]
        %v1221 = vld [vmem:[%s1186 + $0x110] sm:$0xff]
        %v1222 = vld [vmem:[%s1186 + $0x118] sm:$0xff]
        %v1223 = vld [vmem:[%s1186 + $0x120] sm:$0x33]
        %v1224 = vld [vmem:[%s1186 + $0x128] sm:$0x33]
        %v1225 = vld [vmem:[%s1186 + $0x130] sm:$0x33]
        %v1226 = vld [vmem:[%s1186 + $0x138] sm:$0x33]
        %v1227 = vld [vmem:[%s2] sm:$0x3f]
        %1229 = vset.pattern.permute.xlu0 0
        %1230 = vperm.xlu0 %1229, %v1227
        %v1231 = vpop.permute.xlu0 %1230
        %v1273 = vunpack.c.l.b16 %v1187
        %v1274 = vunpack.c.h.b16 %v1187
        %v1275 = vunpack.c.l.b16 %v1188
        %v1276 = vunpack.c.h.b16 %v1188
        %v1277 = vunpack.c.l.b16 %v1189
        %v1278 = vunpack.c.h.b16 %v1189
        %v1279 = vunpack.c.l.b16 %v1190
        %v1280 = vunpack.c.h.b16 %v1190
        %v1281 = vunpack.c.l.b16 %v1191
        %v1282 = vunpack.c.h.b16 %v1191
        %v1283 = vunpack.c.l.b16 %v1192
        %v1284 = vunpack.c.h.b16 %v1192
        %v1285 = vunpack.c.l.b16 %v1193
        %v1286 = vunpack.c.h.b16 %v1193
        %v1287 = vunpack.c.l.b16 %v1194
        %v1288 = vunpack.c.h.b16 %v1194
        %v1289 = vunpack.c.l.b16 %v1195
        %v1290 = vunpack.c.h.b16 %v1195
        %v1291 = vunpack.c.l.b16 %v1196
        %v1292 = vunpack.c.h.b16 %v1196
        %v1293 = vunpack.c.l.b16 %v1197
        %v1294 = vunpack.c.h.b16 %v1197
        %v1295 = vunpack.c.l.b16 %v1198
        %v1296 = vunpack.c.h.b16 %v1198
        %v1297 = vunpack.c.l.b16 %v1199
        %v1298 = vunpack.c.h.b16 %v1199
        %v1299 = vunpack.c.l.b16 %v1200
        %v1300 = vunpack.c.h.b16 %v1200
        %v1301 = vunpack.c.l.b16 %v1201
        %v1302 = vunpack.c.h.b16 %v1201
        %v1303 = vunpack.c.l.b16 %v1202
        %v1304 = vunpack.c.h.b16 %v1202
        %v1305 = vunpack.c.l.b16 %v1203
        %v1306 = vunpack.c.h.b16 %v1203
        %v1307 = vunpack.c.l.b16 %v1204
        %v1308 = vunpack.c.h.b16 %v1204
        %v1309 = vunpack.c.l.b16 %v1205
        %v1310 = vunpack.c.h.b16 %v1205
        %v1311 = vunpack.c.l.b16 %v1206
        %v1312 = vunpack.c.h.b16 %v1206
        %v1313 = vunpack.c.l.b16 %v1207
        %v1314 = vunpack.c.h.b16 %v1207
        %v1315 = vunpack.c.l.b16 %v1208
        %v1316 = vunpack.c.h.b16 %v1208
        %v1317 = vunpack.c.l.b16 %v1209
        %v1318 = vunpack.c.h.b16 %v1209
        %v1319 = vunpack.c.l.b16 %v1210
        %v1320 = vunpack.c.h.b16 %v1210
        %v1321 = vunpack.c.l.b16 %v1211
        %v1322 = vunpack.c.h.b16 %v1211
        %v1323 = vunpack.c.l.b16 %v1212
        %v1324 = vunpack.c.h.b16 %v1212
        %v1325 = vunpack.c.l.b16 %v1213
        %v1326 = vunpack.c.h.b16 %v1213
        %v1327 = vunpack.c.l.b16 %v1214
        %v1328 = vunpack.c.h.b16 %v1214
        %v1329 = vunpack.c.l.b16 %v1215
        %v1330 = vunpack.c.h.b16 %v1215
        %v1331 = vunpack.c.l.b16 %v1216
        %v1332 = vunpack.c.h.b16 %v1216
        %v1333 = vunpack.c.l.b16 %v1217
        %v1334 = vunpack.c.h.b16 %v1217
        %v1335 = vunpack.c.l.b16 %v1218
        %v1336 = vunpack.c.h.b16 %v1218
        %v1337 = vunpack.c.l.b16 %v1219
        %v1338 = vunpack.c.h.b16 %v1219
        %v1339 = vunpack.c.l.b16 %v1220
        %v1340 = vunpack.c.h.b16 %v1220
        %v1341 = vunpack.c.l.b16 %v1221
        %v1342 = vunpack.c.h.b16 %v1221
        %v1343 = vunpack.c.l.b16 %v1222
        %v1344 = vunpack.c.h.b16 %v1222
        %v1345 = vunpack.c.l.b16 %v1223
        %v1346 = vunpack.c.h.b16 %v1223
        %v1347 = vunpack.c.l.b16 %v1224
        %v1348 = vunpack.c.h.b16 %v1224
        %v1349 = vunpack.c.l.b16 %v1225
        %v1350 = vunpack.c.h.b16 %v1225
        %v1351 = vunpack.c.l.b16 %v1226
        %v1352 = vunpack.c.h.b16 %v1226
        %v1353 = vpack.c.b16 %v1281, %v1273
        %v1354 = vpack.c.b16 %v1282, %v1274
        %v1355 = vpack.c.b16 %v1283, %v1275
        %v1356 = vpack.c.b16 %v1284, %v1276
        %v1357 = vpack.c.b16 %v1285, %v1277
        %v1358 = vpack.c.b16 %v1286, %v1278
        %v1359 = vpack.c.b16 %v1287, %v1279
        %v1360 = vpack.c.b16 %v1288, %v1280
        %v1361 = vpack.c.b16 %v1297, %v1289
        %v1362 = vpack.c.b16 %v1298, %v1290
        %v1363 = vpack.c.b16 %v1299, %v1291
        %v1364 = vpack.c.b16 %v1300, %v1292
        %v1365 = vpack.c.b16 %v1301, %v1293
        %v1366 = vpack.c.b16 %v1302, %v1294
        %v1367 = vpack.c.b16 %v1303, %v1295
        %v1368 = vpack.c.b16 %v1304, %v1296
        %v1369 = vpack.c.b16 %v1313, %v1305
        %v1370 = vpack.c.b16 %v1314, %v1306
        %v1371 = vpack.c.b16 %v1315, %v1307
        %v1372 = vpack.c.b16 %v1316, %v1308
        %v1373 = vpack.c.b16 %v1317, %v1309
        %v1374 = vpack.c.b16 %v1318, %v1310
        %v1375 = vpack.c.b16 %v1319, %v1311
        %v1376 = vpack.c.b16 %v1320, %v1312
        %v1377 = vpack.c.b16 %v1329, %v1321
        %v1378 = vpack.c.b16 %v1330, %v1322
        %v1379 = vpack.c.b16 %v1331, %v1323
        %v1380 = vpack.c.b16 %v1332, %v1324
        %v1381 = vpack.c.b16 %v1333, %v1325
        %v1382 = vpack.c.b16 %v1334, %v1326
        %v1383 = vpack.c.b16 %v1335, %v1327
        %v1384 = vpack.c.b16 %v1336, %v1328
        %v1385 = vpack.c.b16 %v1345, %v1337
        %v1386 = vpack.c.b16 %v1346, %v1338
        %v1387 = vpack.c.b16 %v1347, %v1339
        %v1388 = vpack.c.b16 %v1348, %v1340
        %v1389 = vpack.c.b16 %v1349, %v1341
        %v1390 = vpack.c.b16 %v1350, %v1342
        %v1391 = vpack.c.b16 %v1351, %v1343
        %v1392 = vpack.c.b16 %v1352, %v1344
        %v1426 = vsel %vm1033, %v1185, 0
        %v1429 = vand.u32 %v1385, %v1040
        %v1432 = vand.u32 %v1386, %v1040
        %v1435 = vand.u32 %v1387, %v1040
        %v1438 = vand.u32 %v1388, %v1040
        %v1441 = vand.u32 %v1389, %v1040
        %v1444 = vand.u32 %v1390, %v1040
        %v1447 = vand.u32 %v1391, %v1040
        %v1450 = vand.u32 %v1392, %v1040
        %1452 = vmatpush.bf16.msra.mxu0 0
        %1453 = vmatpush.bf16.msra.mxu0 0
        %1454 = vmatpush.bf16.msra.mxu0 0
        %1455 = vmatpush.bf16.msra.mxu0 %v1429
        %1456 = vmatpush.bf16.msra.mxu0 %v1377
        %1457 = vmatpush.bf16.msra.mxu0 %v1369
        %1458 = vmatpush.bf16.msra.mxu0 %v1361
        %1459 = vmatpush.bf16.msra.mxu0 %v1353
        %1460 = vmatmul.bf16.gmra.mxu0 %v1426
        %v1461 = vpop.f32.mrf.mxu0
        %v1462 = vadd.f32 %v1231, %v1461
        %v1463 = vpop.f32.mrf.mxu0
        %1464 = vdwg.mxu0
        %1465 = vmatpush.bf16.msra.mxu0 0
        %1466 = vmatpush.bf16.msra.mxu0 0
        %1467 = vmatpush.bf16.msra.mxu0 0
        %1468 = vmatpush.bf16.msra.mxu0 %v1432
        %1469 = vmatpush.bf16.msra.mxu0 %v1378
        %1470 = vmatpush.bf16.msra.mxu0 %v1370
        %1471 = vmatpush.bf16.msra.mxu0 %v1362
        %1472 = vmatpush.bf16.msra.mxu0 %v1354
        %1473 = vmatmul.bf16.gmra.mxu0 %v1426
        %v1474 = vpop.f32.mrf.mxu0
        %v1475 = vadd.f32 %v1231, %v1474
        %v1476 = vpop.f32.mrf.mxu0
        %1477 = vdwg.mxu0
        %1478 = vmatpush.bf16.msra.mxu0 0
        %1479 = vmatpush.bf16.msra.mxu0 0
        %1480 = vmatpush.bf16.msra.mxu0 0
        %1481 = vmatpush.bf16.msra.mxu0 %v1435
        %1482 = vmatpush.bf16.msra.mxu0 %v1379
        %1483 = vmatpush.bf16.msra.mxu0 %v1371
        %1484 = vmatpush.bf16.msra.mxu0 %v1363
        %1485 = vmatpush.bf16.msra.mxu0 %v1355
        %1486 = vmatmul.bf16.gmra.mxu0 %v1426
        %v1487 = vpop.f32.mrf.mxu0
        %v1488 = vadd.f32 %v1231, %v1487
        %v1489 = vpop.f32.mrf.mxu0
        %1490 = vdwg.mxu0
        %1491 = vmatpush.bf16.msra.mxu0 0
        %1492 = vmatpush.bf16.msra.mxu0 0
        %1493 = vmatpush.bf16.msra.mxu0 0
        %1494 = vmatpush.bf16.msra.mxu0 %v1438
        %1495 = vmatpush.bf16.msra.mxu0 %v1380
        %1496 = vmatpush.bf16.msra.mxu0 %v1372
        %1497 = vmatpush.bf16.msra.mxu0 %v1364
        %1498 = vmatpush.bf16.msra.mxu0 %v1356
        %1499 = vmatmul.bf16.gmra.mxu0 %v1426
        %v1500 = vpop.f32.mrf.mxu0
        %v1501 = vadd.f32 %v1231, %v1500
        %v1502 = vpop.f32.mrf.mxu0
        %1503 = vdwg.mxu0
        %1504 = vmatpush.bf16.msra.mxu0 0
        %1505 = vmatpush.bf16.msra.mxu0 0
        %1506 = vmatpush.bf16.msra.mxu0 0
        %1507 = vmatpush.bf16.msra.mxu0 %v1441
        %1508 = vmatpush.bf16.msra.mxu0 %v1381
        %1509 = vmatpush.bf16.msra.mxu0 %v1373
        %1510 = vmatpush.bf16.msra.mxu0 %v1365
        %1511 = vmatpush.bf16.msra.mxu0 %v1357
        %1512 = vmatmul.bf16.gmra.mxu0 %v1426
        %v1513 = vpop.f32.mrf.mxu0
        %v1514 = vadd.f32 %v1231, %v1513
        %v1515 = vpop.f32.mrf.mxu0
        %1516 = vdwg.mxu0
        %1517 = vmatpush.bf16.msra.mxu0 0
        %1518 = vmatpush.bf16.msra.mxu0 0
        %1519 = vmatpush.bf16.msra.mxu0 0
        %1520 = vmatpush.bf16.msra.mxu0 %v1444
        %1521 = vmatpush.bf16.msra.mxu0 %v1382
        %1522 = vmatpush.bf16.msra.mxu0 %v1374
        %1523 = vmatpush.bf16.msra.mxu0 %v1366
        %1524 = vmatpush.bf16.msra.mxu0 %v1358
        %1525 = vmatmul.bf16.gmra.mxu0 %v1426
        %v1526 = vpop.f32.mrf.mxu0
        %v1527 = vadd.f32 %v1231, %v1526
        %v1528 = vpop.f32.mrf.mxu0
        %1529 = vdwg.mxu0
        %1530 = vmatpush.bf16.msra.mxu0 0
        %1531 = vmatpush.bf16.msra.mxu0 0
        %1532 = vmatpush.bf16.msra.mxu0 0
        %1533 = vmatpush.bf16.msra.mxu0 %v1447
        %1534 = vmatpush.bf16.msra.mxu0 %v1383
        %1535 = vmatpush.bf16.msra.mxu0 %v1375
        %1536 = vmatpush.bf16.msra.mxu0 %v1367
        %1537 = vmatpush.bf16.msra.mxu0 %v1359
        %1538 = vmatmul.bf16.gmra.mxu0 %v1426
        %v1539 = vpop.f32.mrf.mxu0
        %v1540 = vadd.f32 %v1231, %v1539
        %v1541 = vpop.f32.mrf.mxu0
        %1542 = vdwg.mxu0
        %1543 = vmatpush.bf16.msra.mxu0 0
        %1544 = vmatpush.bf16.msra.mxu0 0
        %1545 = vmatpush.bf16.msra.mxu0 0
        %1546 = vmatpush.bf16.msra.mxu0 %v1450
        %1547 = vmatpush.bf16.msra.mxu0 %v1384
        %1548 = vmatpush.bf16.msra.mxu0 %v1376
        %1549 = vmatpush.bf16.msra.mxu0 %v1368
        %1550 = vmatpush.bf16.msra.mxu0 %v1360
        %1551 = vmatmul.bf16.gmra.mxu0 %v1426
        %v1552 = vpop.f32.mrf.mxu0
        %v1553 = vadd.f32 %v1231, %v1552
        %v1554 = vpop.f32.mrf.mxu0
        %1555 = vdwg.mxu0
        %v1556 = vmax.f32 %v1462, 0.0
        %v1557 = vmax.f32 %v1475, 0.0
        %v1558 = vmax.f32 %v1488, 0.0
        %v1559 = vmax.f32 %v1501, 0.0
        %v1560 = vmax.f32 %v1514, 0.0
        %v1561 = vmax.f32 %v1527, 0.0
        %v1562 = vmax.f32 %v1540, 0.0
        %v1563 = vmax.f32 %v1553, 0.0
        %s1564 = scalar_lea.vmem %s776, 64 [#allocation3]
        %1565 = vst [vmem:[%s1564] sm:$0x3f] %v1556
        %1566 = vst [vmem:[%s1564 + $0x8] sm:$0x3f] %v1557
        %1567 = vst [vmem:[%s1564 + $0x10] sm:$0x3f] %v1558
        %1568 = vst [vmem:[%s1564 + $0x18] sm:$0x3f] %v1559
        %1569 = vst [vmem:[%s1564 + $0x20] sm:$0x3f] %v1560
        %1570 = vst [vmem:[%s1564 + $0x28] sm:$0x3f] %v1561
        %1571 = vst [vmem:[%s1564 + $0x30] sm:$0x3f] %v1562
        %1572 = vst [vmem:[%s1564 + $0x38] sm:$0x3f] %v1563
        %v1573 = vmax.f32 %v1169, %v1556
        %v1574 = vmax.f32 %v1170, %v1557
        %v1575 = vmax.f32 %v1171, %v1558
        %v1576 = vmax.f32 %v1172, %v1559
        %v1577 = vmax.f32 %v1173, %v1560
        %v1578 = vmax.f32 %v1174, %v1561
        %v1579 = vmax.f32 %v1175, %v1562
        %v1580 = vmax.f32 %v1176, %v1563
        %v1581 = vld [vmem:[%s1] sm:$0x7]
        %s1582 = scalar_lea.vmem %s741, 640 [#allocation2]
        %v1583 = vld [vmem:[%s1582] sm:$0xff]
        %v1584 = vld [vmem:[%s1582 + $0x8] sm:$0xff]
        %v1585 = vld [vmem:[%s1582 + $0x10] sm:$0xff]
        %v1586 = vld [vmem:[%s1582 + $0x18] sm:$0xff]
        %v1587 = vld [vmem:[%s1582 + $0x20] sm:$0xff]
        %v1588 = vld [vmem:[%s1582 + $0x28] sm:$0xff]
        %v1589 = vld [vmem:[%s1582 + $0x30] sm:$0xff]
        %v1590 = vld [vmem:[%s1582 + $0x38] sm:$0xff]
        %v1591 = vld [vmem:[%s1582 + $0x40] sm:$0xff]
        %v1592 = vld [vmem:[%s1582 + $0x48] sm:$0xff]
        %v1593 = vld [vmem:[%s1582 + $0x50] sm:$0xff]
        %v1594 = vld [vmem:[%s1582 + $0x58] sm:$0xff]
        %v1595 = vld [vmem:[%s1582 + $0x60] sm:$0xff]
        %v1596 = vld [vmem:[%s1582 + $0x68] sm:$0xff]
        %v1597 = vld [vmem:[%s1582 + $0x70] sm:$0xff]
        %v1598 = vld [vmem:[%s1582 + $0x78] sm:$0xff]
        %v1599 = vld [vmem:[%s1582 + $0x80] sm:$0xff]
        %v1600 = vld [vmem:[%s1582 + $0x88] sm:$0xff]
        %v1601 = vld [vmem:[%s1582 + $0x90] sm:$0xff]
        %v1602 = vld [vmem:[%s1582 + $0x98] sm:$0xff]
        %v1603 = vld [vmem:[%s1582 + $0xa0] sm:$0xff]
        %v1604 = vld [vmem:[%s1582 + $0xa8] sm:$0xff]
        %v1605 = vld [vmem:[%s1582 + $0xb0] sm:$0xff]
        %v1606 = vld [vmem:[%s1582 + $0xb8] sm:$0xff]
        %v1607 = vld [vmem:[%s1582 + $0xc0] sm:$0xff]
        %v1608 = vld [vmem:[%s1582 + $0xc8] sm:$0xff]
        %v1609 = vld [vmem:[%s1582 + $0xd0] sm:$0xff]
        %v1610 = vld [vmem:[%s1582 + $0xd8] sm:$0xff]
        %v1611 = vld [vmem:[%s1582 + $0xe0] sm:$0xff]
        %v1612 = vld [vmem:[%s1582 + $0xe8] sm:$0xff]
        %v1613 = vld [vmem:[%s1582 + $0xf0] sm:$0xff]
        %v1614 = vld [vmem:[%s1582 + $0xf8] sm:$0xff]
        %v1615 = vld [vmem:[%s1582 + $0x100] sm:$0xff]
        %v1616 = vld [vmem:[%s1582 + $0x108] sm:$0xff]
        %v1617 = vld [vmem:[%s1582 + $0x110] sm:$0xff]
        %v1618 = vld [vmem:[%s1582 + $0x118] sm:$0xff]
        %v1619 = vld [vmem:[%s1582 + $0x120] sm:$0x33]
        %v1620 = vld [vmem:[%s1582 + $0x128] sm:$0x33]
        %v1621 = vld [vmem:[%s1582 + $0x130] sm:$0x33]
        %v1622 = vld [vmem:[%s1582 + $0x138] sm:$0x33]
        %v1623 = vld [vmem:[%s2] sm:$0x3f]
        %1625 = vset.pattern.permute.xlu0 0
        %1626 = vperm.xlu0 %1625, %v1623
        %v1627 = vpop.permute.xlu0 %1626
        %v1669 = vunpack.c.l.b16 %v1583
        %v1670 = vunpack.c.h.b16 %v1583
        %v1671 = vunpack.c.l.b16 %v1584
        %v1672 = vunpack.c.h.b16 %v1584
        %v1673 = vunpack.c.l.b16 %v1585
        %v1674 = vunpack.c.h.b16 %v1585
        %v1675 = vunpack.c.l.b16 %v1586
        %v1676 = vunpack.c.h.b16 %v1586
        %v1677 = vunpack.c.l.b16 %v1587
        %v1678 = vunpack.c.h.b16 %v1587
        %v1679 = vunpack.c.l.b16 %v1588
        %v1680 = vunpack.c.h.b16 %v1588
        %v1681 = vunpack.c.l.b16 %v1589
        %v1682 = vunpack.c.h.b16 %v1589
        %v1683 = vunpack.c.l.b16 %v1590
        %v1684 = vunpack.c.h.b16 %v1590
        %v1685 = vunpack.c.l.b16 %v1591
        %v1686 = vunpack.c.h.b16 %v1591
        %v1687 = vunpack.c.l.b16 %v1592
        %v1688 = vunpack.c.h.b16 %v1592
        %v1689 = vunpack.c.l.b16 %v1593
        %v1690 = vunpack.c.h.b16 %v1593
        %v1691 = vunpack.c.l.b16 %v1594
        %v1692 = vunpack.c.h.b16 %v1594
        %v1693 = vunpack.c.l.b16 %v1595
        %v1694 = vunpack.c.h.b16 %v1595
        %v1695 = vunpack.c.l.b16 %v1596
        %v1696 = vunpack.c.h.b16 %v1596
        %v1697 = vunpack.c.l.b16 %v1597
        %v1698 = vunpack.c.h.b16 %v1597
        %v1699 = vunpack.c.l.b16 %v1598
        %v1700 = vunpack.c.h.b16 %v1598
        %v1701 = vunpack.c.l.b16 %v1599
        %v1702 = vunpack.c.h.b16 %v1599
        %v1703 = vunpack.c.l.b16 %v1600
        %v1704 = vunpack.c.h.b16 %v1600
        %v1705 = vunpack.c.l.b16 %v1601
        %v1706 = vunpack.c.h.b16 %v1601
        %v1707 = vunpack.c.l.b16 %v1602
        %v1708 = vunpack.c.h.b16 %v1602
        %v1709 = vunpack.c.l.b16 %v1603
        %v1710 = vunpack.c.h.b16 %v1603
        %v1711 = vunpack.c.l.b16 %v1604
        %v1712 = vunpack.c.h.b16 %v1604
        %v1713 = vunpack.c.l.b16 %v1605
        %v1714 = vunpack.c.h.b16 %v1605
        %v1715 = vunpack.c.l.b16 %v1606
        %v1716 = vunpack.c.h.b16 %v1606
        %v1717 = vunpack.c.l.b16 %v1607
        %v1718 = vunpack.c.h.b16 %v1607
        %v1719 = vunpack.c.l.b16 %v1608
        %v1720 = vunpack.c.h.b16 %v1608
        %v1721 = vunpack.c.l.b16 %v1609
        %v1722 = vunpack.c.h.b16 %v1609
        %v1723 = vunpack.c.l.b16 %v1610
        %v1724 = vunpack.c.h.b16 %v1610
        %v1725 = vunpack.c.l.b16 %v1611
        %v1726 = vunpack.c.h.b16 %v1611
        %v1727 = vunpack.c.l.b16 %v1612
        %v1728 = vunpack.c.h.b16 %v1612
        %v1729 = vunpack.c.l.b16 %v1613
        %v1730 = vunpack.c.h.b16 %v1613
        %v1731 = vunpack.c.l.b16 %v1614
        %v1732 = vunpack.c.h.b16 %v1614
        %v1733 = vunpack.c.l.b16 %v1615
        %v1734 = vunpack.c.h.b16 %v1615
        %v1735 = vunpack.c.l.b16 %v1616
        %v1736 = vunpack.c.h.b16 %v1616
        %v1737 = vunpack.c.l.b16 %v1617
        %v1738 = vunpack.c.h.b16 %v1617
        %v1739 = vunpack.c.l.b16 %v1618
        %v1740 = vunpack.c.h.b16 %v1618
        %v1741 = vunpack.c.l.b16 %v1619
        %v1742 = vunpack.c.h.b16 %v1619
        %v1743 = vunpack.c.l.b16 %v1620
        %v1744 = vunpack.c.h.b16 %v1620
        %v1745 = vunpack.c.l.b16 %v1621
        %v1746 = vunpack.c.h.b16 %v1621
        %v1747 = vunpack.c.l.b16 %v1622
        %v1748 = vunpack.c.h.b16 %v1622
        %v1749 = vpack.c.b16 %v1677, %v1669
        %v1750 = vpack.c.b16 %v1678, %v1670
        %v1751 = vpack.c.b16 %v1679, %v1671
        %v1752 = vpack.c.b16 %v1680, %v1672
        %v1753 = vpack.c.b16 %v1681, %v1673
        %v1754 = vpack.c.b16 %v1682, %v1674
        %v1755 = vpack.c.b16 %v1683, %v1675
        %v1756 = vpack.c.b16 %v1684, %v1676
        %v1757 = vpack.c.b16 %v1693, %v1685
        %v1758 = vpack.c.b16 %v1694, %v1686
        %v1759 = vpack.c.b16 %v1695, %v1687
        %v1760 = vpack.c.b16 %v1696, %v1688
        %v1761 = vpack.c.b16 %v1697, %v1689
        %v1762 = vpack.c.b16 %v1698, %v1690
        %v1763 = vpack.c.b16 %v1699, %v1691
        %v1764 = vpack.c.b16 %v1700, %v1692
        %v1765 = vpack.c.b16 %v1709, %v1701
        %v1766 = vpack.c.b16 %v1710, %v1702
        %v1767 = vpack.c.b16 %v1711, %v1703
        %v1768 = vpack.c.b16 %v1712, %v1704
        %v1769 = vpack.c.b16 %v1713, %v1705
        %v1770 = vpack.c.b16 %v1714, %v1706
        %v1771 = vpack.c.b16 %v1715, %v1707
        %v1772 = vpack.c.b16 %v1716, %v1708
        %v1773 = vpack.c.b16 %v1725, %v1717
        %v1774 = vpack.c.b16 %v1726, %v1718
        %v1775 = vpack.c.b16 %v1727, %v1719
        %v1776 = vpack.c.b16 %v1728, %v1720
        %v1777 = vpack.c.b16 %v1729, %v1721
        %v1778 = vpack.c.b16 %v1730, %v1722
        %v1779 = vpack.c.b16 %v1731, %v1723
        %v1780 = vpack.c.b16 %v1732, %v1724
        %v1781 = vpack.c.b16 %v1741, %v1733
        %v1782 = vpack.c.b16 %v1742, %v1734
        %v1783 = vpack.c.b16 %v1743, %v1735
        %v1784 = vpack.c.b16 %v1744, %v1736
        %v1785 = vpack.c.b16 %v1745, %v1737
        %v1786 = vpack.c.b16 %v1746, %v1738
        %v1787 = vpack.c.b16 %v1747, %v1739
        %v1788 = vpack.c.b16 %v1748, %v1740
        %v1822 = vsel %vm1033, %v1581, 0
        %v1825 = vand.u32 %v1781, %v1040
        %v1828 = vand.u32 %v1782, %v1040
        %v1831 = vand.u32 %v1783, %v1040
        %v1834 = vand.u32 %v1784, %v1040
        %v1837 = vand.u32 %v1785, %v1040
        %v1840 = vand.u32 %v1786, %v1040
        %v1843 = vand.u32 %v1787, %v1040
        %v1846 = vand.u32 %v1788, %v1040
        %1848 = vmatpush.bf16.msra.mxu0 0
        %1849 = vmatpush.bf16.msra.mxu0 0
        %1850 = vmatpush.bf16.msra.mxu0 0
        %1851 = vmatpush.bf16.msra.mxu0 %v1825
        %1852 = vmatpush.bf16.msra.mxu0 %v1773
        %1853 = vmatpush.bf16.msra.mxu0 %v1765
        %1854 = vmatpush.bf16.msra.mxu0 %v1757
        %1855 = vmatpush.bf16.msra.mxu0 %v1749
        %1856 = vmatmul.bf16.gmra.mxu0 %v1822
        %v1857 = vpop.f32.mrf.mxu0
        %v1858 = vadd.f32 %v1627, %v1857
        %v1859 = vpop.f32.mrf.mxu0
        %1860 = vdwg.mxu0
        %1861 = vmatpush.bf16.msra.mxu0 0
        %1862 = vmatpush.bf16.msra.mxu0 0
        %1863 = vmatpush.bf16.msra.mxu0 0
        %1864 = vmatpush.bf16.msra.mxu0 %v1828
        %1865 = vmatpush.bf16.msra.mxu0 %v1774
        %1866 = vmatpush.bf16.msra.mxu0 %v1766
        %1867 = vmatpush.bf16.msra.mxu0 %v1758
        %1868 = vmatpush.bf16.msra.mxu0 %v1750
        %1869 = vmatmul.bf16.gmra.mxu0 %v1822
        %v1870 = vpop.f32.mrf.mxu0
        %v1871 = vadd.f32 %v1627, %v1870
        %v1872 = vpop.f32.mrf.mxu0
        %1873 = vdwg.mxu0
        %1874 = vmatpush.bf16.msra.mxu0 0
        %1875 = vmatpush.bf16.msra.mxu0 0
        %1876 = vmatpush.bf16.msra.mxu0 0
        %1877 = vmatpush.bf16.msra.mxu0 %v1831
        %1878 = vmatpush.bf16.msra.mxu0 %v1775
        %1879 = vmatpush.bf16.msra.mxu0 %v1767
        %1880 = vmatpush.bf16.msra.mxu0 %v1759
        %1881 = vmatpush.bf16.msra.mxu0 %v1751
        %1882 = vmatmul.bf16.gmra.mxu0 %v1822
        %v1883 = vpop.f32.mrf.mxu0
        %v1884 = vadd.f32 %v1627, %v1883
        %v1885 = vpop.f32.mrf.mxu0
        %1886 = vdwg.mxu0
        %1887 = vmatpush.bf16.msra.mxu0 0
        %1888 = vmatpush.bf16.msra.mxu0 0
        %1889 = vmatpush.bf16.msra.mxu0 0
        %1890 = vmatpush.bf16.msra.mxu0 %v1834
        %1891 = vmatpush.bf16.msra.mxu0 %v1776
        %1892 = vmatpush.bf16.msra.mxu0 %v1768
        %1893 = vmatpush.bf16.msra.mxu0 %v1760
        %1894 = vmatpush.bf16.msra.mxu0 %v1752
        %1895 = vmatmul.bf16.gmra.mxu0 %v1822
        %v1896 = vpop.f32.mrf.mxu0
        %v1897 = vadd.f32 %v1627, %v1896
        %v1898 = vpop.f32.mrf.mxu0
        %1899 = vdwg.mxu0
        %1900 = vmatpush.bf16.msra.mxu0 0
        %1901 = vmatpush.bf16.msra.mxu0 0
        %1902 = vmatpush.bf16.msra.mxu0 0
        %1903 = vmatpush.bf16.msra.mxu0 %v1837
        %1904 = vmatpush.bf16.msra.mxu0 %v1777
        %1905 = vmatpush.bf16.msra.mxu0 %v1769
        %1906 = vmatpush.bf16.msra.mxu0 %v1761
        %1907 = vmatpush.bf16.msra.mxu0 %v1753
        %1908 = vmatmul.bf16.gmra.mxu0 %v1822
        %v1909 = vpop.f32.mrf.mxu0
        %v1910 = vadd.f32 %v1627, %v1909
        %v1911 = vpop.f32.mrf.mxu0
        %1912 = vdwg.mxu0
        %1913 = vmatpush.bf16.msra.mxu0 0
        %1914 = vmatpush.bf16.msra.mxu0 0
        %1915 = vmatpush.bf16.msra.mxu0 0
        %1916 = vmatpush.bf16.msra.mxu0 %v1840
        %1917 = vmatpush.bf16.msra.mxu0 %v1778
        %1918 = vmatpush.bf16.msra.mxu0 %v1770
        %1919 = vmatpush.bf16.msra.mxu0 %v1762
        %1920 = vmatpush.bf16.msra.mxu0 %v1754
        %1921 = vmatmul.bf16.gmra.mxu0 %v1822
        %v1922 = vpop.f32.mrf.mxu0
        %v1923 = vadd.f32 %v1627, %v1922
        %v1924 = vpop.f32.mrf.mxu0
        %1925 = vdwg.mxu0
        %1926 = vmatpush.bf16.msra.mxu0 0
        %1927 = vmatpush.bf16.msra.mxu0 0
        %1928 = vmatpush.bf16.msra.mxu0 0
        %1929 = vmatpush.bf16.msra.mxu0 %v1843
        %1930 = vmatpush.bf16.msra.mxu0 %v1779
        %1931 = vmatpush.bf16.msra.mxu0 %v1771
        %1932 = vmatpush.bf16.msra.mxu0 %v1763
        %1933 = vmatpush.bf16.msra.mxu0 %v1755
        %1934 = vmatmul.bf16.gmra.mxu0 %v1822
        %v1935 = vpop.f32.mrf.mxu0
        %v1936 = vadd.f32 %v1627, %v1935
        %v1937 = vpop.f32.mrf.mxu0
        %1938 = vdwg.mxu0
        %1939 = vmatpush.bf16.msra.mxu0 0
        %1940 = vmatpush.bf16.msra.mxu0 0
        %1941 = vmatpush.bf16.msra.mxu0 0
        %1942 = vmatpush.bf16.msra.mxu0 %v1846
        %1943 = vmatpush.bf16.msra.mxu0 %v1780
        %1944 = vmatpush.bf16.msra.mxu0 %v1772
        %1945 = vmatpush.bf16.msra.mxu0 %v1764
        %1946 = vmatpush.bf16.msra.mxu0 %v1756
        %1947 = vmatmul.bf16.gmra.mxu0 %v1822
        %v1948 = vpop.f32.mrf.mxu0
        %v1949 = vadd.f32 %v1627, %v1948
        %v1950 = vpop.f32.mrf.mxu0
        %1951 = vdwg.mxu0
        %v1952 = vmax.f32 %v1858, 0.0
        %v1953 = vmax.f32 %v1871, 0.0
        %v1954 = vmax.f32 %v1884, 0.0
        %v1955 = vmax.f32 %v1897, 0.0
        %v1956 = vmax.f32 %v1910, 0.0
        %v1957 = vmax.f32 %v1923, 0.0
        %v1958 = vmax.f32 %v1936, 0.0
        %v1959 = vmax.f32 %v1949, 0.0
        %s1960 = scalar_lea.vmem %s776, 128 [#allocation3]
        %1961 = vst [vmem:[%s1960] sm:$0x3f] %v1952
        %1962 = vst [vmem:[%s1960 + $0x8] sm:$0x3f] %v1953
        %1963 = vst [vmem:[%s1960 + $0x10] sm:$0x3f] %v1954
        %1964 = vst [vmem:[%s1960 + $0x18] sm:$0x3f] %v1955
        %1965 = vst [vmem:[%s1960 + $0x20] sm:$0x3f] %v1956
        %1966 = vst [vmem:[%s1960 + $0x28] sm:$0x3f] %v1957
        %1967 = vst [vmem:[%s1960 + $0x30] sm:$0x3f] %v1958
        %1968 = vst [vmem:[%s1960 + $0x38] sm:$0x3f] %v1959
        %v1969 = vmax.f32 %v1573, %v1952
        %v1970 = vmax.f32 %v1574, %v1953
        %v1971 = vmax.f32 %v1575, %v1954
        %v1972 = vmax.f32 %v1576, %v1955
        %v1973 = vmax.f32 %v1577, %v1956
        %v1974 = vmax.f32 %v1578, %v1957
        %v1975 = vmax.f32 %v1579, %v1958
        %v1976 = vmax.f32 %v1580, %v1959
        %v1977 = vld [vmem:[%s1] sm:$0x7]
        %s1978 = scalar_lea.vmem %s741, 960 [#allocation2]
        %v1979 = vld [vmem:[%s1978] sm:$0xff]
        %v1980 = vld [vmem:[%s1978 + $0x8] sm:$0xff]
        %v1981 = vld [vmem:[%s1978 + $0x10] sm:$0xff]
        %v1982 = vld [vmem:[%s1978 + $0x18] sm:$0xff]
        %v1983 = vld [vmem:[%s1978 + $0x20] sm:$0xff]
        %v1984 = vld [vmem:[%s1978 + $0x28] sm:$0xff]
        %v1985 = vld [vmem:[%s1978 + $0x30] sm:$0xff]
        %v1986 = vld [vmem:[%s1978 + $0x38] sm:$0xff]
        %v1987 = vld [vmem:[%s1978 + $0x40] sm:$0xff]
        %v1988 = vld [vmem:[%s1978 + $0x48] sm:$0xff]
        %v1989 = vld [vmem:[%s1978 + $0x50] sm:$0xff]
        %v1990 = vld [vmem:[%s1978 + $0x58] sm:$0xff]
        %v1991 = vld [vmem:[%s1978 + $0x60] sm:$0xff]
        %v1992 = vld [vmem:[%s1978 + $0x68] sm:$0xff]
        %v1993 = vld [vmem:[%s1978 + $0x70] sm:$0xff]
        %v1994 = vld [vmem:[%s1978 + $0x78] sm:$0xff]
        %v1995 = vld [vmem:[%s1978 + $0x80] sm:$0xff]
        %v1996 = vld [vmem:[%s1978 + $0x88] sm:$0xff]
        %v1997 = vld [vmem:[%s1978 + $0x90] sm:$0xff]
        %v1998 = vld [vmem:[%s1978 + $0x98] sm:$0xff]
        %v1999 = vld [vmem:[%s1978 + $0xa0] sm:$0xff]
        %v2000 = vld [vmem:[%s1978 + $0xa8] sm:$0xff]
        %v2001 = vld [vmem:[%s1978 + $0xb0] sm:$0xff]
        %v2002 = vld [vmem:[%s1978 + $0xb8] sm:$0xff]
        %v2003 = vld [vmem:[%s1978 + $0xc0] sm:$0xff]
        %v2004 = vld [vmem:[%s1978 + $0xc8] sm:$0xff]
        %v2005 = vld [vmem:[%s1978 + $0xd0] sm:$0xff]
        %v2006 = vld [vmem:[%s1978 + $0xd8] sm:$0xff]
        %v2007 = vld [vmem:[%s1978 + $0xe0] sm:$0xff]
        %v2008 = vld [vmem:[%s1978 + $0xe8] sm:$0xff]
        %v2009 = vld [vmem:[%s1978 + $0xf0] sm:$0xff]
        %v2010 = vld [vmem:[%s1978 + $0xf8] sm:$0xff]
        %v2011 = vld [vmem:[%s1978 + $0x100] sm:$0xff]
        %v2012 = vld [vmem:[%s1978 + $0x108] sm:$0xff]
        %v2013 = vld [vmem:[%s1978 + $0x110] sm:$0xff]
        %v2014 = vld [vmem:[%s1978 + $0x118] sm:$0xff]
        %v2015 = vld [vmem:[%s1978 + $0x120] sm:$0x33]
        %v2016 = vld [vmem:[%s1978 + $0x128] sm:$0x33]
        %v2017 = vld [vmem:[%s1978 + $0x130] sm:$0x33]
        %v2018 = vld [vmem:[%s1978 + $0x138] sm:$0x33]
        %v2019 = vld [vmem:[%s2] sm:$0x3f]
        %2021 = vset.pattern.permute.xlu0 0
        %2022 = vperm.xlu0 %2021, %v2019
        %v2023 = vpop.permute.xlu0 %2022
        %v2065 = vunpack.c.l.b16 %v1979
        %v2066 = vunpack.c.h.b16 %v1979
        %v2067 = vunpack.c.l.b16 %v1980
        %v2068 = vunpack.c.h.b16 %v1980
        %v2069 = vunpack.c.l.b16 %v1981
        %v2070 = vunpack.c.h.b16 %v1981
        %v2071 = vunpack.c.l.b16 %v1982
        %v2072 = vunpack.c.h.b16 %v1982
        %v2073 = vunpack.c.l.b16 %v1983
        %v2074 = vunpack.c.h.b16 %v1983
        %v2075 = vunpack.c.l.b16 %v1984
        %v2076 = vunpack.c.h.b16 %v1984
        %v2077 = vunpack.c.l.b16 %v1985
        %v2078 = vunpack.c.h.b16 %v1985
        %v2079 = vunpack.c.l.b16 %v1986
        %v2080 = vunpack.c.h.b16 %v1986
        %v2081 = vunpack.c.l.b16 %v1987
        %v2082 = vunpack.c.h.b16 %v1987
        %v2083 = vunpack.c.l.b16 %v1988
        %v2084 = vunpack.c.h.b16 %v1988
        %v2085 = vunpack.c.l.b16 %v1989
        %v2086 = vunpack.c.h.b16 %v1989
        %v2087 = vunpack.c.l.b16 %v1990
        %v2088 = vunpack.c.h.b16 %v1990
        %v2089 = vunpack.c.l.b16 %v1991
        %v2090 = vunpack.c.h.b16 %v1991
        %v2091 = vunpack.c.l.b16 %v1992
        %v2092 = vunpack.c.h.b16 %v1992
        %v2093 = vunpack.c.l.b16 %v1993
        %v2094 = vunpack.c.h.b16 %v1993
        %v2095 = vunpack.c.l.b16 %v1994
        %v2096 = vunpack.c.h.b16 %v1994
        %v2097 = vunpack.c.l.b16 %v1995
        %v2098 = vunpack.c.h.b16 %v1995
        %v2099 = vunpack.c.l.b16 %v1996
        %v2100 = vunpack.c.h.b16 %v1996
        %v2101 = vunpack.c.l.b16 %v1997
        %v2102 = vunpack.c.h.b16 %v1997
        %v2103 = vunpack.c.l.b16 %v1998
        %v2104 = vunpack.c.h.b16 %v1998
        %v2105 = vunpack.c.l.b16 %v1999
        %v2106 = vunpack.c.h.b16 %v1999
        %v2107 = vunpack.c.l.b16 %v2000
        %v2108 = vunpack.c.h.b16 %v2000
        %v2109 = vunpack.c.l.b16 %v2001
        %v2110 = vunpack.c.h.b16 %v2001
        %v2111 = vunpack.c.l.b16 %v2002
        %v2112 = vunpack.c.h.b16 %v2002
        %v2113 = vunpack.c.l.b16 %v2003
        %v2114 = vunpack.c.h.b16 %v2003
        %v2115 = vunpack.c.l.b16 %v2004
        %v2116 = vunpack.c.h.b16 %v2004
        %v2117 = vunpack.c.l.b16 %v2005
        %v2118 = vunpack.c.h.b16 %v2005
        %v2119 = vunpack.c.l.b16 %v2006
        %v2120 = vunpack.c.h.b16 %v2006
        %v2121 = vunpack.c.l.b16 %v2007
        %v2122 = vunpack.c.h.b16 %v2007
        %v2123 = vunpack.c.l.b16 %v2008
        %v2124 = vunpack.c.h.b16 %v2008
        %v2125 = vunpack.c.l.b16 %v2009
        %v2126 = vunpack.c.h.b16 %v2009
        %v2127 = vunpack.c.l.b16 %v2010
        %v2128 = vunpack.c.h.b16 %v2010
        %v2129 = vunpack.c.l.b16 %v2011
        %v2130 = vunpack.c.h.b16 %v2011
        %v2131 = vunpack.c.l.b16 %v2012
        %v2132 = vunpack.c.h.b16 %v2012
        %v2133 = vunpack.c.l.b16 %v2013
        %v2134 = vunpack.c.h.b16 %v2013
        %v2135 = vunpack.c.l.b16 %v2014
        %v2136 = vunpack.c.h.b16 %v2014
        %v2137 = vunpack.c.l.b16 %v2015
        %v2138 = vunpack.c.h.b16 %v2015
        %v2139 = vunpack.c.l.b16 %v2016
        %v2140 = vunpack.c.h.b16 %v2016
        %v2141 = vunpack.c.l.b16 %v2017
        %v2142 = vunpack.c.h.b16 %v2017
        %v2143 = vunpack.c.l.b16 %v2018
        %v2144 = vunpack.c.h.b16 %v2018
        %v2145 = vpack.c.b16 %v2073, %v2065
        %v2146 = vpack.c.b16 %v2074, %v2066
        %v2147 = vpack.c.b16 %v2075, %v2067
        %v2148 = vpack.c.b16 %v2076, %v2068
        %v2149 = vpack.c.b16 %v2077, %v2069
        %v2150 = vpack.c.b16 %v2078, %v2070
        %v2151 = vpack.c.b16 %v2079, %v2071
        %v2152 = vpack.c.b16 %v2080, %v2072
        %v2153 = vpack.c.b16 %v2089, %v2081
        %v2154 = vpack.c.b16 %v2090, %v2082
        %v2155 = vpack.c.b16 %v2091, %v2083
        %v2156 = vpack.c.b16 %v2092, %v2084
        %v2157 = vpack.c.b16 %v2093, %v2085
        %v2158 = vpack.c.b16 %v2094, %v2086
        %v2159 = vpack.c.b16 %v2095, %v2087
        %v2160 = vpack.c.b16 %v2096, %v2088
        %v2161 = vpack.c.b16 %v2105, %v2097
        %v2162 = vpack.c.b16 %v2106, %v2098
        %v2163 = vpack.c.b16 %v2107, %v2099
        %v2164 = vpack.c.b16 %v2108, %v2100
        %v2165 = vpack.c.b16 %v2109, %v2101
        %v2166 = vpack.c.b16 %v2110, %v2102
        %v2167 = vpack.c.b16 %v2111, %v2103
        %v2168 = vpack.c.b16 %v2112, %v2104
        %v2169 = vpack.c.b16 %v2121, %v2113
        %v2170 = vpack.c.b16 %v2122, %v2114
        %v2171 = vpack.c.b16 %v2123, %v2115
        %v2172 = vpack.c.b16 %v2124, %v2116
        %v2173 = vpack.c.b16 %v2125, %v2117
        %v2174 = vpack.c.b16 %v2126, %v2118
        %v2175 = vpack.c.b16 %v2127, %v2119
        %v2176 = vpack.c.b16 %v2128, %v2120
        %v2177 = vpack.c.b16 %v2137, %v2129
        %v2178 = vpack.c.b16 %v2138, %v2130
        %v2179 = vpack.c.b16 %v2139, %v2131
        %v2180 = vpack.c.b16 %v2140, %v2132
        %v2181 = vpack.c.b16 %v2141, %v2133
        %v2182 = vpack.c.b16 %v2142, %v2134
        %v2183 = vpack.c.b16 %v2143, %v2135
        %v2184 = vpack.c.b16 %v2144, %v2136
        %v2218 = vsel %vm1033, %v1977, 0
        %v2221 = vand.u32 %v2177, %v1040
        %v2224 = vand.u32 %v2178, %v1040
        %v2227 = vand.u32 %v2179, %v1040
        %v2230 = vand.u32 %v2180, %v1040
        %v2233 = vand.u32 %v2181, %v1040
        %v2236 = vand.u32 %v2182, %v1040
        %v2239 = vand.u32 %v2183, %v1040
        %v2242 = vand.u32 %v2184, %v1040
        %2244 = vmatpush.bf16.msra.mxu0 0
        %2245 = vmatpush.bf16.msra.mxu0 0
        %2246 = vmatpush.bf16.msra.mxu0 0
        %2247 = vmatpush.bf16.msra.mxu0 %v2221
        %2248 = vmatpush.bf16.msra.mxu0 %v2169
        %2249 = vmatpush.bf16.msra.mxu0 %v2161
        %2250 = vmatpush.bf16.msra.mxu0 %v2153
        %2251 = vmatpush.bf16.msra.mxu0 %v2145
        %2252 = vmatmul.bf16.gmra.mxu0 %v2218
        %v2253 = vpop.f32.mrf.mxu0
        %v2254 = vadd.f32 %v2023, %v2253
        %v2255 = vpop.f32.mrf.mxu0
        %2256 = vdwg.mxu0
        %2257 = vmatpush.bf16.msra.mxu0 0
        %2258 = vmatpush.bf16.msra.mxu0 0
        %2259 = vmatpush.bf16.msra.mxu0 0
        %2260 = vmatpush.bf16.msra.mxu0 %v2224
        %2261 = vmatpush.bf16.msra.mxu0 %v2170
        %2262 = vmatpush.bf16.msra.mxu0 %v2162
        %2263 = vmatpush.bf16.msra.mxu0 %v2154
        %2264 = vmatpush.bf16.msra.mxu0 %v2146
        %2265 = vmatmul.bf16.gmra.mxu0 %v2218
        %v2266 = vpop.f32.mrf.mxu0
        %v2267 = vadd.f32 %v2023, %v2266
        %v2268 = vpop.f32.mrf.mxu0
        %2269 = vdwg.mxu0
        %2270 = vmatpush.bf16.msra.mxu0 0
        %2271 = vmatpush.bf16.msra.mxu0 0
        %2272 = vmatpush.bf16.msra.mxu0 0
        %2273 = vmatpush.bf16.msra.mxu0 %v2227
        %2274 = vmatpush.bf16.msra.mxu0 %v2171
        %2275 = vmatpush.bf16.msra.mxu0 %v2163
        %2276 = vmatpush.bf16.msra.mxu0 %v2155
        %2277 = vmatpush.bf16.msra.mxu0 %v2147
        %2278 = vmatmul.bf16.gmra.mxu0 %v2218
        %v2279 = vpop.f32.mrf.mxu0
        %v2280 = vadd.f32 %v2023, %v2279
        %v2281 = vpop.f32.mrf.mxu0
        %2282 = vdwg.mxu0
        %2283 = vmatpush.bf16.msra.mxu0 0
        %2284 = vmatpush.bf16.msra.mxu0 0
        %2285 = vmatpush.bf16.msra.mxu0 0
        %2286 = vmatpush.bf16.msra.mxu0 %v2230
        %2287 = vmatpush.bf16.msra.mxu0 %v2172
        %2288 = vmatpush.bf16.msra.mxu0 %v2164
        %2289 = vmatpush.bf16.msra.mxu0 %v2156
        %2290 = vmatpush.bf16.msra.mxu0 %v2148
        %2291 = vmatmul.bf16.gmra.mxu0 %v2218
        %v2292 = vpop.f32.mrf.mxu0
        %v2293 = vadd.f32 %v2023, %v2292
        %v2294 = vpop.f32.mrf.mxu0
        %2295 = vdwg.mxu0
        %2296 = vmatpush.bf16.msra.mxu0 0
        %2297 = vmatpush.bf16.msra.mxu0 0
        %2298 = vmatpush.bf16.msra.mxu0 0
        %2299 = vmatpush.bf16.msra.mxu0 %v2233
        %2300 = vmatpush.bf16.msra.mxu0 %v2173
        %2301 = vmatpush.bf16.msra.mxu0 %v2165
        %2302 = vmatpush.bf16.msra.mxu0 %v2157
        %2303 = vmatpush.bf16.msra.mxu0 %v2149
        %2304 = vmatmul.bf16.gmra.mxu0 %v2218
        %v2305 = vpop.f32.mrf.mxu0
        %v2306 = vadd.f32 %v2023, %v2305
        %v2307 = vpop.f32.mrf.mxu0
        %2308 = vdwg.mxu0
        %2309 = vmatpush.bf16.msra.mxu0 0
        %2310 = vmatpush.bf16.msra.mxu0 0
        %2311 = vmatpush.bf16.msra.mxu0 0
        %2312 = vmatpush.bf16.msra.mxu0 %v2236
        %2313 = vmatpush.bf16.msra.mxu0 %v2174
        %2314 = vmatpush.bf16.msra.mxu0 %v2166
        %2315 = vmatpush.bf16.msra.mxu0 %v2158
        %2316 = vmatpush.bf16.msra.mxu0 %v2150
        %2317 = vmatmul.bf16.gmra.mxu0 %v2218
        %v2318 = vpop.f32.mrf.mxu0
        %v2319 = vadd.f32 %v2023, %v2318
        %v2320 = vpop.f32.mrf.mxu0
        %2321 = vdwg.mxu0
        %2322 = vmatpush.bf16.msra.mxu0 0
        %2323 = vmatpush.bf16.msra.mxu0 0
        %2324 = vmatpush.bf16.msra.mxu0 0
        %2325 = vmatpush.bf16.msra.mxu0 %v2239
        %2326 = vmatpush.bf16.msra.mxu0 %v2175
        %2327 = vmatpush.bf16.msra.mxu0 %v2167
        %2328 = vmatpush.bf16.msra.mxu0 %v2159
        %2329 = vmatpush.bf16.msra.mxu0 %v2151
        %2330 = vmatmul.bf16.gmra.mxu0 %v2218
        %v2331 = vpop.f32.mrf.mxu0
        %v2332 = vadd.f32 %v2023, %v2331
        %v2333 = vpop.f32.mrf.mxu0
        %2334 = vdwg.mxu0
        %2335 = vmatpush.bf16.msra.mxu0 0
        %2336 = vmatpush.bf16.msra.mxu0 0
        %2337 = vmatpush.bf16.msra.mxu0 0
        %2338 = vmatpush.bf16.msra.mxu0 %v2242
        %2339 = vmatpush.bf16.msra.mxu0 %v2176
        %2340 = vmatpush.bf16.msra.mxu0 %v2168
        %2341 = vmatpush.bf16.msra.mxu0 %v2160
        %2342 = vmatpush.bf16.msra.mxu0 %v2152
        %2343 = vmatmul.bf16.gmra.mxu0 %v2218
        %v2344 = vpop.f32.mrf.mxu0
        %v2345 = vadd.f32 %v2023, %v2344
        %v2346 = vpop.f32.mrf.mxu0
        %2347 = vdwg.mxu0
        %v2348 = vmax.f32 %v2254, 0.0
        %v2349 = vmax.f32 %v2267, 0.0
        %v2350 = vmax.f32 %v2280, 0.0
        %v2351 = vmax.f32 %v2293, 0.0
        %v2352 = vmax.f32 %v2306, 0.0
        %v2353 = vmax.f32 %v2319, 0.0
        %v2354 = vmax.f32 %v2332, 0.0
        %v2355 = vmax.f32 %v2345, 0.0
        %s2356 = scalar_lea.vmem %s776, 192 [#allocation3]
        %2357 = vst [vmem:[%s2356] sm:$0x3f] %v2348
        %2358 = vst [vmem:[%s2356 + $0x8] sm:$0x3f] %v2349
        %2359 = vst [vmem:[%s2356 + $0x10] sm:$0x3f] %v2350
        %2360 = vst [vmem:[%s2356 + $0x18] sm:$0x3f] %v2351
        %2361 = vst [vmem:[%s2356 + $0x20] sm:$0x3f] %v2352
        %2362 = vst [vmem:[%s2356 + $0x28] sm:$0x3f] %v2353
        %2363 = vst [vmem:[%s2356 + $0x30] sm:$0x3f] %v2354
        %2364 = vst [vmem:[%s2356 + $0x38] sm:$0x3f] %v2355
        %v2365 = vmax.f32 %v1969, %v2348
        %v2366 = vmax.f32 %v1970, %v2349
        %v2367 = vmax.f32 %v1971, %v2350
        %v2368 = vmax.f32 %v1972, %v2351
        %v2369 = vmax.f32 %v1973, %v2352
        %v2370 = vmax.f32 %v1974, %v2353
        %v2371 = vmax.f32 %v1975, %v2354
        %v2372 = vmax.f32 %v1976, %v2355
        %v2373 = vpack.c.bf16 %v2366, %v2365
        %v2374 = vpack.c.bf16 %v2368, %v2367
        %v2375 = vpack.c.bf16 %v2370, %v2369
        %v2376 = vpack.c.bf16 %v2372, %v2371
        %v2381 = vunpack.c.l.b16 %v2373
        %v2382 = vunpack.c.h.b16 %v2373
        %v2383 = vunpack.c.l.b16 %v2374
        %v2384 = vunpack.c.h.b16 %v2374
        %v2385 = vunpack.c.l.b16 %v2375
        %v2386 = vunpack.c.h.b16 %v2375
        %v2387 = vunpack.c.l.b16 %v2376
        %v2388 = vunpack.c.h.b16 %v2376
        %v2389 = vpack.c.b16 %v2381, %v2381
        %v2390 = vpack.c.b16 %v2382, %v2382
        %v2391 = vpack.c.b16 %v2383, %v2383
        %v2392 = vpack.c.b16 %v2384, %v2384
        %v2393 = vpack.c.b16 %v2385, %v2385
        %v2394 = vpack.c.b16 %v2386, %v2386
        %v2395 = vpack.c.b16 %v2387, %v2387
        %v2396 = vpack.c.b16 %v2388, %v2388
        %v2398 = vrot.slane %v2389, 5
        %v2399 = vrot.slane %v2390, 5
        %v2400 = vrot.slane %v2391, 5
        %v2401 = vrot.slane %v2392, 5
        %v2402 = vrot.slane %v2393, 5
        %v2403 = vrot.slane %v2394, 5
        %v2404 = vrot.slane %v2395, 5
        %v2405 = vrot.slane %v2396, 5
        %v2406 = vrot.slane 0, 5
        %2407 = vrot.lane.b32.xlu0 %v2398, 127
        %v2408 = vpop.permute.xlu0 %2407
        %2409 = vrot.lane.b32.xlu0 %v2399, 127
        %v2410 = vpop.permute.xlu0 %2409
        %2411 = vrot.lane.b32.xlu0 %v2400, 127
        %v2412 = vpop.permute.xlu0 %2411
        %2413 = vrot.lane.b32.xlu0 %v2401, 127
        %v2414 = vpop.permute.xlu0 %2413
        %2415 = vrot.lane.b32.xlu0 %v2402, 127
        %v2416 = vpop.permute.xlu0 %2415
        %2417 = vrot.lane.b32.xlu0 %v2403, 127
        %v2418 = vpop.permute.xlu0 %2417
        %2419 = vrot.lane.b32.xlu0 %v2404, 127
        %v2420 = vpop.permute.xlu0 %2419
        %2421 = vrot.lane.b32.xlu0 %v2405, 127
        %v2422 = vpop.permute.xlu0 %2421
        %2423 = vrot.lane.b32.xlu0 %v2406, 127
        %v2424 = vpop.permute.xlu0 %2423
        %vm2425 = vcmask 1039360
        %v2426 = vsel %vm2425, %v2408, %v2410
        %v2427 = vsel %vm2425, %v2410, %v2412
        %v2428 = vsel %vm2425, %v2412, %v2414
        %v2429 = vsel %vm2425, %v2414, %v2416
        %v2430 = vsel %vm2425, %v2416, %v2418
        %v2431 = vsel %vm2425, %v2418, %v2420
        %v2432 = vsel %vm2425, %v2420, %v2422
        %v2433 = vsel %vm2425, %v2422, %v2424
        %v2434 = vrot.slane %v2389, 2
        %v2435 = vrot.slane %v2390, 2
        %v2436 = vrot.slane %v2391, 2
        %v2437 = vrot.slane %v2392, 2
        %v2438 = vrot.slane %v2393, 2
        %v2439 = vrot.slane %v2394, 2
        %v2440 = vrot.slane %v2395, 2
        %v2441 = vrot.slane %v2396, 2
        %v2442 = vrot.slane 0, 2
        %2443 = vrot.lane.b32.xlu0 %v2434, 126
        %v2444 = vpop.permute.xlu0 %2443
        %2445 = vrot.lane.b32.xlu0 %v2435, 126
        %v2446 = vpop.permute.xlu0 %2445
        %2447 = vrot.lane.b32.xlu0 %v2436, 126
        %v2448 = vpop.permute.xlu0 %2447
        %2449 = vrot.lane.b32.xlu0 %v2437, 126
        %v2450 = vpop.permute.xlu0 %2449
        %2451 = vrot.lane.b32.xlu0 %v2438, 126
        %v2452 = vpop.permute.xlu0 %2451
        %2453 = vrot.lane.b32.xlu0 %v2439, 126
        %v2454 = vpop.permute.xlu0 %2453
        %2455 = vrot.lane.b32.xlu0 %v2440, 126
        %v2456 = vpop.permute.xlu0 %2455
        %2457 = vrot.lane.b32.xlu0 %v2441, 126
        %v2458 = vpop.permute.xlu0 %2457
        %2459 = vrot.lane.b32.xlu0 %v2442, 126
        %v2460 = vpop.permute.xlu0 %2459
        %vm2461 = vcmask 1031168
        %v2462 = vsel %vm2461, %v2444, %v2446
        %v2463 = vsel %vm2461, %v2446, %v2448
        %v2464 = vsel %vm2461, %v2448, %v2450
        %v2465 = vsel %vm2461, %v2450, %v2452
        %v2466 = vsel %vm2461, %v2452, %v2454
        %v2467 = vsel %vm2461, %v2454, %v2456
        %v2468 = vsel %vm2461, %v2456, %v2458
        %v2469 = vsel %vm2461, %v2458, %v2460
        %v2470 = vrot.slane %v2389, 7
        %v2471 = vrot.slane %v2390, 7
        %v2472 = vrot.slane %v2391, 7
        %v2473 = vrot.slane %v2392, 7
        %v2474 = vrot.slane %v2393, 7
        %v2475 = vrot.slane %v2394, 7
        %v2476 = vrot.slane %v2395, 7
        %v2477 = vrot.slane %v2396, 7
        %v2478 = vrot.slane 0, 7
        %2479 = vrot.lane.b32.xlu0 %v2470, 125
        %v2480 = vpop.permute.xlu0 %2479
        %2481 = vrot.lane.b32.xlu0 %v2471, 125
        %v2482 = vpop.permute.xlu0 %2481
        %2483 = vrot.lane.b32.xlu0 %v2472, 125
        %v2484 = vpop.permute.xlu0 %2483
        %2485 = vrot.lane.b32.xlu0 %v2473, 125
        %v2486 = vpop.permute.xlu0 %2485
        %2487 = vrot.lane.b32.xlu0 %v2474, 125
        %v2488 = vpop.permute.xlu0 %2487
        %2489 = vrot.lane.b32.xlu0 %v2475, 125
        %v2490 = vpop.permute.xlu0 %2489
        %2491 = vrot.lane.b32.xlu0 %v2476, 125
        %v2492 = vpop.permute.xlu0 %2491
        %2493 = vrot.lane.b32.xlu0 %v2477, 125
        %v2494 = vpop.permute.xlu0 %2493
        %2495 = vrot.lane.b32.xlu0 %v2478, 125
        %v2496 = vpop.permute.xlu0 %2495
        %vm2497 = vcmask 1022976
        %v2498 = vsel %vm2497, %v2480, %v2482
        %v2499 = vsel %vm2497, %v2482, %v2484
        %v2500 = vsel %vm2497, %v2484, %v2486
        %v2501 = vsel %vm2497, %v2486, %v2488
        %v2502 = vsel %vm2497, %v2488, %v2490
        %v2503 = vsel %vm2497, %v2490, %v2492
        %v2504 = vsel %vm2497, %v2492, %v2494
        %v2505 = vsel %vm2497, %v2494, %v2496
        %v2506 = vrot.slane %v2389, 4
        %v2507 = vrot.slane %v2390, 4
        %v2508 = vrot.slane %v2391, 4
        %v2509 = vrot.slane %v2392, 4
        %v2510 = vrot.slane %v2393, 4
        %v2511 = vrot.slane %v2394, 4
        %v2512 = vrot.slane %v2395, 4
        %v2513 = vrot.slane %v2396, 4
        %v2514 = vrot.slane 0, 4
        %2515 = vrot.lane.b32.xlu0 %v2506, 124
        %v2516 = vpop.permute.xlu0 %2515
        %2517 = vrot.lane.b32.xlu0 %v2507, 124
        %v2518 = vpop.permute.xlu0 %2517
        %2519 = vrot.lane.b32.xlu0 %v2508, 124
        %v2520 = vpop.permute.xlu0 %2519
        %2521 = vrot.lane.b32.xlu0 %v2509, 124
        %v2522 = vpop.permute.xlu0 %2521
        %2523 = vrot.lane.b32.xlu0 %v2510, 124
        %v2524 = vpop.permute.xlu0 %2523
        %2525 = vrot.lane.b32.xlu0 %v2511, 124
        %v2526 = vpop.permute.xlu0 %2525
        %2527 = vrot.lane.b32.xlu0 %v2512, 124
        %v2528 = vpop.permute.xlu0 %2527
        %2529 = vrot.lane.b32.xlu0 %v2513, 124
        %v2530 = vpop.permute.xlu0 %2529
        %2531 = vrot.lane.b32.xlu0 %v2514, 124
        %v2532 = vpop.permute.xlu0 %2531
        %vm2533 = vcmask 1014784
        %v2534 = vsel %vm2533, %v2516, %v2518
        %v2535 = vsel %vm2533, %v2518, %v2520
        %v2536 = vsel %vm2533, %v2520, %v2522
        %v2537 = vsel %vm2533, %v2522, %v2524
        %v2538 = vsel %vm2533, %v2524, %v2526
        %v2539 = vsel %vm2533, %v2526, %v2528
        %v2540 = vsel %vm2533, %v2528, %v2530
        %v2541 = vsel %vm2533, %v2530, %v2532
        %vm2542 = vcmask 1042432
        %v2545 = vsel %vm2542, %v2389, %v2426
        %v2548 = vsel %vm2542, %v2390, %v2427
        %v2551 = vsel %vm2542, %v2391, %v2428
        %v2554 = vsel %vm2542, %v2392, %v2429
        %v2557 = vsel %vm2542, %v2393, %v2430
        %v2560 = vsel %vm2542, %v2394, %v2431
        %v2563 = vsel %vm2542, %v2395, %v2432
        %v2566 = vsel %vm2542, %v2396, %v2433
        %v2568 = vsel %vm1038, %v2545, %v2462
        %v2571 = vsel %vm1038, %v2548, %v2463
        %v2574 = vsel %vm1038, %v2551, %v2464
        %v2577 = vsel %vm1038, %v2554, %v2465
        %v2580 = vsel %vm1038, %v2557, %v2466
        %v2583 = vsel %vm1038, %v2560, %v2467
        %v2586 = vsel %vm1038, %v2563, %v2468
        %v2589 = vsel %vm1038, %v2566, %v2469
        %vm2591 = vcmask 1040384
        %v2593 = vsel %vm2591, %v2462, %v2498
        %v2595 = vsel %vm2591, %v2463, %v2499
        %v2597 = vsel %vm2591, %v2464, %v2500
        %v2599 = vsel %vm2591, %v2465, %v2501
        %v2601 = vsel %vm2591, %v2466, %v2502
        %v2603 = vsel %vm2591, %v2467, %v2503
        %v2605 = vsel %vm2591, %v2468, %v2504
        %v2607 = vsel %vm2591, %v2469, %v2505
        %vm2608 = vcmask 1043456
        %v2610 = vsel %vm2608, %v2593, %v2534
        %v2612 = vsel %vm2608, %v2595, %v2535
        %v2614 = vsel %vm2608, %v2597, %v2536
        %v2616 = vsel %vm2608, %v2599, %v2537
        %v2618 = vsel %vm2608, %v2601, %v2538
        %v2620 = vsel %vm2608, %v2603, %v2539
        %v2622 = vsel %vm2608, %v2605, %v2540
        %v2624 = vsel %vm2608, %v2607, %v2541
        %v2625 = vld [vmem:[%s3] sm:$0xf]
        %v2626 = vld [vmem:[%s3 + $0x4] sm:$0xf]
        %v2629 = vsel %vm2542, 0, %v2424
        %v2631 = vsel %vm1038, %v2629, %v2460
        %v2633 = vsel %vm2591, %v2460, %v2496
        %v2635 = vsel %vm2608, %v2633, %v2532
        %s2636 = scalar_lea.vmem %s3, 8
        %v2637 = vld [vmem:[%s2636] sm:$0xf]
        %v2638 = vld [vmem:[%s2636 + $0x4] sm:$0xf]
        %v2641 = vunpack.c.l.b16 %v2637
        %v2642 = vunpack.c.l.b16 %v2638
        %v2643 = vpack.c.b16 %v2642, %v2641
        %2662 = vrot.lane.b32.xlu0 %v2568, 114
        %v2663 = vpop.permute.xlu0 %2662
        %2664 = vrot.lane.b32.xlu0 %v2571, 114
        %v2665 = vpop.permute.xlu0 %2664
        %2666 = vrot.lane.b32.xlu0 %v2574, 114
        %v2667 = vpop.permute.xlu0 %2666
        %2668 = vrot.lane.b32.xlu0 %v2577, 114
        %v2669 = vpop.permute.xlu0 %2668
        %2670 = vrot.lane.b32.xlu0 %v2580, 114
        %v2671 = vpop.permute.xlu0 %2670
        %2672 = vrot.lane.b32.xlu0 %v2583, 114
        %v2673 = vpop.permute.xlu0 %2672
        %2674 = vrot.lane.b32.xlu0 %v2586, 114
        %v2675 = vpop.permute.xlu0 %2674
        %2676 = vrot.lane.b32.xlu0 %v2589, 114
        %v2677 = vpop.permute.xlu0 %2676
        %2678 = vrot.lane.b32.xlu0 %v2631, 114
        %v2679 = vpop.permute.xlu0 %2678
        %2680 = vrot.lane.b32.xlu0 %v2610, 114
        %v2681 = vpop.permute.xlu0 %2680
        %2682 = vrot.lane.b32.xlu0 %v2612, 114
        %v2683 = vpop.permute.xlu0 %2682
        %2684 = vrot.lane.b32.xlu0 %v2614, 114
        %v2685 = vpop.permute.xlu0 %2684
        %2686 = vrot.lane.b32.xlu0 %v2616, 114
        %v2687 = vpop.permute.xlu0 %2686
        %2688 = vrot.lane.b32.xlu0 %v2618, 114
        %v2689 = vpop.permute.xlu0 %2688
        %2690 = vrot.lane.b32.xlu0 %v2620, 114
        %v2691 = vpop.permute.xlu0 %2690
        %2692 = vrot.lane.b32.xlu0 %v2622, 114
        %v2693 = vpop.permute.xlu0 %2692
        %2694 = vrot.lane.b32.xlu0 %v2624, 114
        %v2695 = vpop.permute.xlu0 %2694
        %2696 = vrot.lane.b32.xlu0 %v2635, 114
        %v2697 = vpop.permute.xlu0 %2696
        %vm2698 = vcmask 932864
        %v2699 = vsel %vm2698, %v2663, %v2665
        %v2700 = vsel %vm2698, %v2665, %v2667
        %v2701 = vsel %vm2698, %v2667, %v2669
        %v2702 = vsel %vm2698, %v2669, %v2671
        %v2703 = vsel %vm2698, %v2671, %v2673
        %v2704 = vsel %vm2698, %v2673, %v2675
        %v2705 = vsel %vm2698, %v2675, %v2677
        %v2706 = vsel %vm2698, %v2677, %v2679
        %v2707 = vsel %vm2698, %v2681, %v2683
        %v2708 = vsel %vm2698, %v2683, %v2685
        %v2709 = vsel %vm2698, %v2685, %v2687
        %v2710 = vsel %vm2698, %v2687, %v2689
        %v2711 = vsel %vm2698, %v2689, %v2691
        %v2712 = vsel %vm2698, %v2691, %v2693
        %v2713 = vsel %vm2698, %v2693, %v2695
        %v2714 = vsel %vm2698, %v2695, %v2697
        %vm2723 = vcmask 244736
        %v2725 = vsel %vm2723, %v2643, 0
        %vm2727 = vcmask 1046528
        %v2729 = vsel %vm2727, %v2707, 0
        %v2732 = vsel %vm2727, %v2708, 0
        %v2735 = vsel %vm2727, %v2709, 0
        %v2738 = vsel %vm2727, %v2710, 0
        %v2741 = vsel %vm2727, %v2711, 0
        %v2744 = vsel %vm2727, %v2712, 0
        %v2747 = vsel %vm2727, %v2713, 0
        %v2750 = vsel %vm2727, %v2714, 0
        %2752 = vmatpush.bf16.msra.mxu0 0
        %2753 = vmatpush.bf16.msra.mxu0 0
        %2754 = vmatpush.bf16.msra.mxu0 0
        %2755 = vmatpush.bf16.msra.mxu0 0
        %2756 = vmatpush.bf16.msra.mxu0 0
        %2757 = vmatpush.bf16.msra.mxu0 0
        %2758 = vmatpush.bf16.msra.mxu0 %v2729
        %2759 = vmatpush.bf16.msra.mxu0 %v2699
        %2760 = vmatmul.bf16.gmra.mxu0 %v2725
        %v2761 = vpop.f32.mrf.mxu0
        %v2762 = vadd.f32 0.0, %v2761
        %v2763 = vpop.f32.mrf.mxu0
        %v2764 = vadd.f32 0.0, %v2763
        %2765 = vdwg.mxu0
        %2766 = vmatpush.bf16.msra.mxu0 0
        %2767 = vmatpush.bf16.msra.mxu0 0
        %2768 = vmatpush.bf16.msra.mxu0 0
        %2769 = vmatpush.bf16.msra.mxu0 0
        %2770 = vmatpush.bf16.msra.mxu0 0
        %2771 = vmatpush.bf16.msra.mxu0 0
        %2772 = vmatpush.bf16.msra.mxu0 %v2732
        %2773 = vmatpush.bf16.msra.mxu0 %v2700
        %2774 = vmatmul.bf16.gmra.mxu0 %v2725
        %v2775 = vpop.f32.mrf.mxu0
        %v2776 = vadd.f32 0.0, %v2775
        %v2777 = vpop.f32.mrf.mxu0
        %v2778 = vadd.f32 0.0, %v2777
        %2779 = vdwg.mxu0
        %2780 = vmatpush.bf16.msra.mxu0 0
        %2781 = vmatpush.bf16.msra.mxu0 0
        %2782 = vmatpush.bf16.msra.mxu0 0
        %2783 = vmatpush.bf16.msra.mxu0 0
        %2784 = vmatpush.bf16.msra.mxu0 0
        %2785 = vmatpush.bf16.msra.mxu0 0
        %2786 = vmatpush.bf16.msra.mxu0 %v2735
        %2787 = vmatpush.bf16.msra.mxu0 %v2701
        %2788 = vmatmul.bf16.gmra.mxu0 %v2725
        %v2789 = vpop.f32.mrf.mxu0
        %v2790 = vadd.f32 0.0, %v2789
        %v2791 = vpop.f32.mrf.mxu0
        %v2792 = vadd.f32 0.0, %v2791
        %2793 = vdwg.mxu0
        %2794 = vmatpush.bf16.msra.mxu0 0
        %2795 = vmatpush.bf16.msra.mxu0 0
        %2796 = vmatpush.bf16.msra.mxu0 0
        %2797 = vmatpush.bf16.msra.mxu0 0
        %2798 = vmatpush.bf16.msra.mxu0 0
        %2799 = vmatpush.bf16.msra.mxu0 0
        %2800 = vmatpush.bf16.msra.mxu0 %v2738
        %2801 = vmatpush.bf16.msra.mxu0 %v2702
        %2802 = vmatmul.bf16.gmra.mxu0 %v2725
        %v2803 = vpop.f32.mrf.mxu0
        %v2804 = vadd.f32 0.0, %v2803
        %v2805 = vpop.f32.mrf.mxu0
        %v2806 = vadd.f32 0.0, %v2805
        %2807 = vdwg.mxu0
        %2808 = vmatpush.bf16.msra.mxu0 0
        %2809 = vmatpush.bf16.msra.mxu0 0
        %2810 = vmatpush.bf16.msra.mxu0 0
        %2811 = vmatpush.bf16.msra.mxu0 0
        %2812 = vmatpush.bf16.msra.mxu0 0
        %2813 = vmatpush.bf16.msra.mxu0 0
        %2814 = vmatpush.bf16.msra.mxu0 %v2741
        %2815 = vmatpush.bf16.msra.mxu0 %v2703
        %2816 = vmatmul.bf16.gmra.mxu0 %v2725
        %v2817 = vpop.f32.mrf.mxu0
        %v2818 = vadd.f32 0.0, %v2817
        %v2819 = vpop.f32.mrf.mxu0
        %v2820 = vadd.f32 0.0, %v2819
        %2821 = vdwg.mxu0
        %2822 = vmatpush.bf16.msra.mxu0 0
        %2823 = vmatpush.bf16.msra.mxu0 0
        %2824 = vmatpush.bf16.msra.mxu0 0
        %2825 = vmatpush.bf16.msra.mxu0 0
        %2826 = vmatpush.bf16.msra.mxu0 0
        %2827 = vmatpush.bf16.msra.mxu0 0
        %2828 = vmatpush.bf16.msra.mxu0 %v2744
        %2829 = vmatpush.bf16.msra.mxu0 %v2704
        %2830 = vmatmul.bf16.gmra.mxu0 %v2725
        %v2831 = vpop.f32.mrf.mxu0
        %v2832 = vadd.f32 0.0, %v2831
        %v2833 = vpop.f32.mrf.mxu0
        %v2834 = vadd.f32 0.0, %v2833
        %2835 = vdwg.mxu0
        %2836 = vmatpush.bf16.msra.mxu0 0
        %2837 = vmatpush.bf16.msra.mxu0 0
        %2838 = vmatpush.bf16.msra.mxu0 0
        %2839 = vmatpush.bf16.msra.mxu0 0
        %2840 = vmatpush.bf16.msra.mxu0 0
        %2841 = vmatpush.bf16.msra.mxu0 0
        %2842 = vmatpush.bf16.msra.mxu0 %v2747
        %2843 = vmatpush.bf16.msra.mxu0 %v2705
        %2844 = vmatmul.bf16.gmra.mxu0 %v2725
        %v2845 = vpop.f32.mrf.mxu0
        %v2846 = vadd.f32 0.0, %v2845
        %v2847 = vpop.f32.mrf.mxu0
        %v2848 = vadd.f32 0.0, %v2847
        %2849 = vdwg.mxu0
        %2850 = vmatpush.bf16.msra.mxu0 0
        %2851 = vmatpush.bf16.msra.mxu0 0
        %2852 = vmatpush.bf16.msra.mxu0 0
        %2853 = vmatpush.bf16.msra.mxu0 0
        %2854 = vmatpush.bf16.msra.mxu0 0
        %2855 = vmatpush.bf16.msra.mxu0 0
        %2856 = vmatpush.bf16.msra.mxu0 %v2750
        %2857 = vmatpush.bf16.msra.mxu0 %v2706
        %2858 = vmatmul.bf16.gmra.mxu0 %v2725
        %v2859 = vpop.f32.mrf.mxu0
        %v2860 = vadd.f32 0.0, %v2859
        %v2861 = vpop.f32.mrf.mxu0
        %v2862 = vadd.f32 0.0, %v2861
        %2863 = vdwg.mxu0
        %s2864 = scalar_lea.vmem %s3, 16
        %v2865 = vld [vmem:[%s2864] sm:$0xf]
        %v2866 = vld [vmem:[%s2864 + $0x4] sm:$0xf]
        %v2869 = vunpack.c.l.b16 %v2865
        %v2870 = vunpack.c.l.b16 %v2866
        %v2871 = vpack.c.b16 %v2870, %v2869
        %2872 = vrot.lane.b32.xlu0 %v2568, 100
        %v2873 = vpop.permute.xlu0 %2872
        %2874 = vrot.lane.b32.xlu0 %v2571, 100
        %v2875 = vpop.permute.xlu0 %2874
        %2876 = vrot.lane.b32.xlu0 %v2574, 100
        %v2877 = vpop.permute.xlu0 %2876
        %2878 = vrot.lane.b32.xlu0 %v2577, 100
        %v2879 = vpop.permute.xlu0 %2878
        %2880 = vrot.lane.b32.xlu0 %v2580, 100
        %v2881 = vpop.permute.xlu0 %2880
        %2882 = vrot.lane.b32.xlu0 %v2583, 100
        %v2883 = vpop.permute.xlu0 %2882
        %2884 = vrot.lane.b32.xlu0 %v2586, 100
        %v2885 = vpop.permute.xlu0 %2884
        %2886 = vrot.lane.b32.xlu0 %v2589, 100
        %v2887 = vpop.permute.xlu0 %2886
        %2888 = vrot.lane.b32.xlu0 %v2631, 100
        %v2889 = vpop.permute.xlu0 %2888
        %2890 = vrot.lane.b32.xlu0 %v2610, 100
        %v2891 = vpop.permute.xlu0 %2890
        %2892 = vrot.lane.b32.xlu0 %v2612, 100
        %v2893 = vpop.permute.xlu0 %2892
        %2894 = vrot.lane.b32.xlu0 %v2614, 100
        %v2895 = vpop.permute.xlu0 %2894
        %2896 = vrot.lane.b32.xlu0 %v2616, 100
        %v2897 = vpop.permute.xlu0 %2896
        %2898 = vrot.lane.b32.xlu0 %v2618, 100
        %v2899 = vpop.permute.xlu0 %2898
        %2900 = vrot.lane.b32.xlu0 %v2620, 100
        %v2901 = vpop.permute.xlu0 %2900
        %2902 = vrot.lane.b32.xlu0 %v2622, 100
        %v2903 = vpop.permute.xlu0 %2902
        %2904 = vrot.lane.b32.xlu0 %v2624, 100
        %v2905 = vpop.permute.xlu0 %2904
        %2906 = vrot.lane.b32.xlu0 %v2635, 100
        %v2907 = vpop.permute.xlu0 %2906
        %vm2908 = vcmask 818176
        %v2909 = vsel %vm2908, %v2873, %v2875
        %v2910 = vsel %vm2908, %v2875, %v2877
        %v2911 = vsel %vm2908, %v2877, %v2879
        %v2912 = vsel %vm2908, %v2879, %v2881
        %v2913 = vsel %vm2908, %v2881, %v2883
        %v2914 = vsel %vm2908, %v2883, %v2885
        %v2915 = vsel %vm2908, %v2885, %v2887
        %v2916 = vsel %vm2908, %v2887, %v2889
        %v2917 = vsel %vm2908, %v2891, %v2893
        %v2918 = vsel %vm2908, %v2893, %v2895
        %v2919 = vsel %vm2908, %v2895, %v2897
        %v2920 = vsel %vm2908, %v2897, %v2899
        %v2921 = vsel %vm2908, %v2899, %v2901
        %v2922 = vsel %vm2908, %v2901, %v2903
        %v2923 = vsel %vm2908, %v2903, %v2905
        %v2924 = vsel %vm2908, %v2905, %v2907
        %v2934 = vsel %vm2723, %v2871, 0
        %v2937 = vsel %vm2727, %v2917, 0
        %v2940 = vsel %vm2727, %v2918, 0
        %v2943 = vsel %vm2727, %v2919, 0
        %v2946 = vsel %vm2727, %v2920, 0
        %v2949 = vsel %vm2727, %v2921, 0
        %v2952 = vsel %vm2727, %v2922, 0
        %v2955 = vsel %vm2727, %v2923, 0
        %v2958 = vsel %vm2727, %v2924, 0
        %2960 = vmatpush.bf16.msra.mxu0 0
        %2961 = vmatpush.bf16.msra.mxu0 0
        %2962 = vmatpush.bf16.msra.mxu0 0
        %2963 = vmatpush.bf16.msra.mxu0 0
        %2964 = vmatpush.bf16.msra.mxu0 0
        %2965 = vmatpush.bf16.msra.mxu0 0
        %2966 = vmatpush.bf16.msra.mxu0 %v2937
        %2967 = vmatpush.bf16.msra.mxu0 %v2909
        %2968 = vmatmul.bf16.gmra.mxu0 %v2934
        %v2969 = vpop.f32.mrf.mxu0
        %v2970 = vadd.f32 0.0, %v2969
        %v2971 = vpop.f32.mrf.mxu0
        %v2972 = vadd.f32 0.0, %v2971
        %2973 = vdwg.mxu0
        %2974 = vmatpush.bf16.msra.mxu0 0
        %2975 = vmatpush.bf16.msra.mxu0 0
        %2976 = vmatpush.bf16.msra.mxu0 0
        %2977 = vmatpush.bf16.msra.mxu0 0
        %2978 = vmatpush.bf16.msra.mxu0 0
        %2979 = vmatpush.bf16.msra.mxu0 0
        %2980 = vmatpush.bf16.msra.mxu0 %v2940
        %2981 = vmatpush.bf16.msra.mxu0 %v2910
        %2982 = vmatmul.bf16.gmra.mxu0 %v2934
        %v2983 = vpop.f32.mrf.mxu0
        %v2984 = vadd.f32 0.0, %v2983
        %v2985 = vpop.f32.mrf.mxu0
        %v2986 = vadd.f32 0.0, %v2985
        %2987 = vdwg.mxu0
        %2988 = vmatpush.bf16.msra.mxu0 0
        %2989 = vmatpush.bf16.msra.mxu0 0
        %2990 = vmatpush.bf16.msra.mxu0 0
        %2991 = vmatpush.bf16.msra.mxu0 0
        %2992 = vmatpush.bf16.msra.mxu0 0
        %2993 = vmatpush.bf16.msra.mxu0 0
        %2994 = vmatpush.bf16.msra.mxu0 %v2943
        %2995 = vmatpush.bf16.msra.mxu0 %v2911
        %2996 = vmatmul.bf16.gmra.mxu0 %v2934
        %v2997 = vpop.f32.mrf.mxu0
        %v2998 = vadd.f32 0.0, %v2997
        %v2999 = vpop.f32.mrf.mxu0
        %v3000 = vadd.f32 0.0, %v2999
        %3001 = vdwg.mxu0
        %3002 = vmatpush.bf16.msra.mxu0 0
        %3003 = vmatpush.bf16.msra.mxu0 0
        %3004 = vmatpush.bf16.msra.mxu0 0
        %3005 = vmatpush.bf16.msra.mxu0 0
        %3006 = vmatpush.bf16.msra.mxu0 0
        %3007 = vmatpush.bf16.msra.mxu0 0
        %3008 = vmatpush.bf16.msra.mxu0 %v2946
        %3009 = vmatpush.bf16.msra.mxu0 %v2912
        %3010 = vmatmul.bf16.gmra.mxu0 %v2934
        %v3011 = vpop.f32.mrf.mxu0
        %v3012 = vadd.f32 0.0, %v3011
        %v3013 = vpop.f32.mrf.mxu0
        %v3014 = vadd.f32 0.0, %v3013
        %3015 = vdwg.mxu0
        %3016 = vmatpush.bf16.msra.mxu0 0
        %3017 = vmatpush.bf16.msra.mxu0 0
        %3018 = vmatpush.bf16.msra.mxu0 0
        %3019 = vmatpush.bf16.msra.mxu0 0
        %3020 = vmatpush.bf16.msra.mxu0 0
        %3021 = vmatpush.bf16.msra.mxu0 0
        %3022 = vmatpush.bf16.msra.mxu0 %v2949
        %3023 = vmatpush.bf16.msra.mxu0 %v2913
        %3024 = vmatmul.bf16.gmra.mxu0 %v2934
        %v3025 = vpop.f32.mrf.mxu0
        %v3026 = vadd.f32 0.0, %v3025
        %v3027 = vpop.f32.mrf.mxu0
        %v3028 = vadd.f32 0.0, %v3027
        %3029 = vdwg.mxu0
        %3030 = vmatpush.bf16.msra.mxu0 0
        %3031 = vmatpush.bf16.msra.mxu0 0
        %3032 = vmatpush.bf16.msra.mxu0 0
        %3033 = vmatpush.bf16.msra.mxu0 0
        %3034 = vmatpush.bf16.msra.mxu0 0
        %3035 = vmatpush.bf16.msra.mxu0 0
        %3036 = vmatpush.bf16.msra.mxu0 %v2952
        %3037 = vmatpush.bf16.msra.mxu0 %v2914
        %3038 = vmatmul.bf16.gmra.mxu0 %v2934
        %v3039 = vpop.f32.mrf.mxu0
        %v3040 = vadd.f32 0.0, %v3039
        %v3041 = vpop.f32.mrf.mxu0
        %v3042 = vadd.f32 0.0, %v3041
        %3043 = vdwg.mxu0
        %3044 = vmatpush.bf16.msra.mxu0 0
        %3045 = vmatpush.bf16.msra.mxu0 0
        %3046 = vmatpush.bf16.msra.mxu0 0
        %3047 = vmatpush.bf16.msra.mxu0 0
        %3048 = vmatpush.bf16.msra.mxu0 0
        %3049 = vmatpush.bf16.msra.mxu0 0
        %3050 = vmatpush.bf16.msra.mxu0 %v2955
        %3051 = vmatpush.bf16.msra.mxu0 %v2915
        %3052 = vmatmul.bf16.gmra.mxu0 %v2934
        %v3053 = vpop.f32.mrf.mxu0
        %v3054 = vadd.f32 0.0, %v3053
        %v3055 = vpop.f32.mrf.mxu0
        %v3056 = vadd.f32 0.0, %v3055
        %3057 = vdwg.mxu0
        %3058 = vmatpush.bf16.msra.mxu0 0
        %3059 = vmatpush.bf16.msra.mxu0 0
        %3060 = vmatpush.bf16.msra.mxu0 0
        %3061 = vmatpush.bf16.msra.mxu0 0
        %3062 = vmatpush.bf16.msra.mxu0 0
        %3063 = vmatpush.bf16.msra.mxu0 0
        %3064 = vmatpush.bf16.msra.mxu0 %v2958
        %3065 = vmatpush.bf16.msra.mxu0 %v2916
        %3066 = vmatmul.bf16.gmra.mxu0 %v2934
        %v3067 = vpop.f32.mrf.mxu0
        %v3068 = vadd.f32 0.0, %v3067
        %v3069 = vpop.f32.mrf.mxu0
        %v3070 = vadd.f32 0.0, %v3069
        %3071 = vdwg.mxu0
        %s3072 = scalar_lea.vmem %s3, 24
        %v3073 = vld [vmem:[%s3072] sm:$0xf]
        %v3074 = vld [vmem:[%s3072 + $0x4] sm:$0xf]
        %v3077 = vunpack.c.l.b16 %v3073
        %v3078 = vunpack.c.l.b16 %v3074
        %v3079 = vpack.c.b16 %v3078, %v3077
        %3080 = vrot.lane.b32.xlu0 %v2568, 86
        %v3081 = vpop.permute.xlu0 %3080
        %3082 = vrot.lane.b32.xlu0 %v2571, 86
        %v3083 = vpop.permute.xlu0 %3082
        %3084 = vrot.lane.b32.xlu0 %v2574, 86
        %v3085 = vpop.permute.xlu0 %3084
        %3086 = vrot.lane.b32.xlu0 %v2577, 86
        %v3087 = vpop.permute.xlu0 %3086
        %3088 = vrot.lane.b32.xlu0 %v2580, 86
        %v3089 = vpop.permute.xlu0 %3088
        %3090 = vrot.lane.b32.xlu0 %v2583, 86
        %v3091 = vpop.permute.xlu0 %3090
        %3092 = vrot.lane.b32.xlu0 %v2586, 86
        %v3093 = vpop.permute.xlu0 %3092
        %3094 = vrot.lane.b32.xlu0 %v2589, 86
        %v3095 = vpop.permute.xlu0 %3094
        %3096 = vrot.lane.b32.xlu0 %v2631, 86
        %v3097 = vpop.permute.xlu0 %3096
        %3098 = vrot.lane.b32.xlu0 %v2610, 86
        %v3099 = vpop.permute.xlu0 %3098
        %3100 = vrot.lane.b32.xlu0 %v2612, 86
        %v3101 = vpop.permute.xlu0 %3100
        %3102 = vrot.lane.b32.xlu0 %v2614, 86
        %v3103 = vpop.permute.xlu0 %3102
        %3104 = vrot.lane.b32.xlu0 %v2616, 86
        %v3105 = vpop.permute.xlu0 %3104
        %3106 = vrot.lane.b32.xlu0 %v2618, 86
        %v3107 = vpop.permute.xlu0 %3106
        %3108 = vrot.lane.b32.xlu0 %v2620, 86
        %v3109 = vpop.permute.xlu0 %3108
        %3110 = vrot.lane.b32.xlu0 %v2622, 86
        %v3111 = vpop.permute.xlu0 %3110
        %3112 = vrot.lane.b32.xlu0 %v2624, 86
        %v3113 = vpop.permute.xlu0 %3112
        %3114 = vrot.lane.b32.xlu0 %v2635, 86
        %v3115 = vpop.permute.xlu0 %3114
        %vm3116 = vcmask 703488
        %v3117 = vsel %vm3116, %v3081, %v3083
        %v3118 = vsel %vm3116, %v3083, %v3085
        %v3119 = vsel %vm3116, %v3085, %v3087
        %v3120 = vsel %vm3116, %v3087, %v3089
        %v3121 = vsel %vm3116, %v3089, %v3091
        %v3122 = vsel %vm3116, %v3091, %v3093
        %v3123 = vsel %vm3116, %v3093, %v3095
        %v3124 = vsel %vm3116, %v3095, %v3097
        %v3125 = vsel %vm3116, %v3099, %v3101
        %v3126 = vsel %vm3116, %v3101, %v3103
        %v3127 = vsel %vm3116, %v3103, %v3105
        %v3128 = vsel %vm3116, %v3105, %v3107
        %v3129 = vsel %vm3116, %v3107, %v3109
        %v3130 = vsel %vm3116, %v3109, %v3111
        %v3131 = vsel %vm3116, %v3111, %v3113
        %v3132 = vsel %vm3116, %v3113, %v3115
        %v3142 = vsel %vm2723, %v3079, 0
        %v3145 = vsel %vm2727, %v3125, 0
        %v3148 = vsel %vm2727, %v3126, 0
        %v3151 = vsel %vm2727, %v3127, 0
        %v3154 = vsel %vm2727, %v3128, 0
        %v3157 = vsel %vm2727, %v3129, 0
        %v3160 = vsel %vm2727, %v3130, 0
        %v3163 = vsel %vm2727, %v3131, 0
        %v3166 = vsel %vm2727, %v3132, 0
        %3168 = vmatpush.bf16.msra.mxu0 0
        %3169 = vmatpush.bf16.msra.mxu0 0
        %3170 = vmatpush.bf16.msra.mxu0 0
        %3171 = vmatpush.bf16.msra.mxu0 0
        %3172 = vmatpush.bf16.msra.mxu0 0
        %3173 = vmatpush.bf16.msra.mxu0 0
        %3174 = vmatpush.bf16.msra.mxu0 %v3145
        %3175 = vmatpush.bf16.msra.mxu0 %v3117
        %3176 = vmatmul.bf16.gmra.mxu0 %v3142
        %v3177 = vpop.f32.mrf.mxu0
        %v3178 = vadd.f32 0.0, %v3177
        %v3179 = vpop.f32.mrf.mxu0
        %v3180 = vadd.f32 0.0, %v3179
        %3181 = vdwg.mxu0
        %3182 = vmatpush.bf16.msra.mxu0 0
        %3183 = vmatpush.bf16.msra.mxu0 0
        %3184 = vmatpush.bf16.msra.mxu0 0
        %3185 = vmatpush.bf16.msra.mxu0 0
        %3186 = vmatpush.bf16.msra.mxu0 0
        %3187 = vmatpush.bf16.msra.mxu0 0
        %3188 = vmatpush.bf16.msra.mxu0 %v3148
        %3189 = vmatpush.bf16.msra.mxu0 %v3118
        %3190 = vmatmul.bf16.gmra.mxu0 %v3142
        %v3191 = vpop.f32.mrf.mxu0
        %v3192 = vadd.f32 0.0, %v3191
        %v3193 = vpop.f32.mrf.mxu0
        %v3194 = vadd.f32 0.0, %v3193
        %3195 = vdwg.mxu0
        %3196 = vmatpush.bf16.msra.mxu0 0
        %3197 = vmatpush.bf16.msra.mxu0 0
        %3198 = vmatpush.bf16.msra.mxu0 0
        %3199 = vmatpush.bf16.msra.mxu0 0
        %3200 = vmatpush.bf16.msra.mxu0 0
        %3201 = vmatpush.bf16.msra.mxu0 0
        %3202 = vmatpush.bf16.msra.mxu0 %v3151
        %3203 = vmatpush.bf16.msra.mxu0 %v3119
        %3204 = vmatmul.bf16.gmra.mxu0 %v3142
        %v3205 = vpop.f32.mrf.mxu0
        %v3206 = vadd.f32 0.0, %v3205
        %v3207 = vpop.f32.mrf.mxu0
        %v3208 = vadd.f32 0.0, %v3207
        %3209 = vdwg.mxu0
        %3210 = vmatpush.bf16.msra.mxu0 0
        %3211 = vmatpush.bf16.msra.mxu0 0
        %3212 = vmatpush.bf16.msra.mxu0 0
        %3213 = vmatpush.bf16.msra.mxu0 0
        %3214 = vmatpush.bf16.msra.mxu0 0
        %3215 = vmatpush.bf16.msra.mxu0 0
        %3216 = vmatpush.bf16.msra.mxu0 %v3154
        %3217 = vmatpush.bf16.msra.mxu0 %v3120
        %3218 = vmatmul.bf16.gmra.mxu0 %v3142
        %v3219 = vpop.f32.mrf.mxu0
        %v3220 = vadd.f32 0.0, %v3219
        %v3221 = vpop.f32.mrf.mxu0
        %v3222 = vadd.f32 0.0, %v3221
        %3223 = vdwg.mxu0
        %3224 = vmatpush.bf16.msra.mxu0 0
        %3225 = vmatpush.bf16.msra.mxu0 0
        %3226 = vmatpush.bf16.msra.mxu0 0
        %3227 = vmatpush.bf16.msra.mxu0 0
        %3228 = vmatpush.bf16.msra.mxu0 0
        %3229 = vmatpush.bf16.msra.mxu0 0
        %3230 = vmatpush.bf16.msra.mxu0 %v3157
        %3231 = vmatpush.bf16.msra.mxu0 %v3121
        %3232 = vmatmul.bf16.gmra.mxu0 %v3142
        %v3233 = vpop.f32.mrf.mxu0
        %v3234 = vadd.f32 0.0, %v3233
        %v3235 = vpop.f32.mrf.mxu0
        %v3236 = vadd.f32 0.0, %v3235
        %3237 = vdwg.mxu0
        %3238 = vmatpush.bf16.msra.mxu0 0
        %3239 = vmatpush.bf16.msra.mxu0 0
        %3240 = vmatpush.bf16.msra.mxu0 0
        %3241 = vmatpush.bf16.msra.mxu0 0
        %3242 = vmatpush.bf16.msra.mxu0 0
        %3243 = vmatpush.bf16.msra.mxu0 0
        %3244 = vmatpush.bf16.msra.mxu0 %v3160
        %3245 = vmatpush.bf16.msra.mxu0 %v3122
        %3246 = vmatmul.bf16.gmra.mxu0 %v3142
        %v3247 = vpop.f32.mrf.mxu0
        %v3248 = vadd.f32 0.0, %v3247
        %v3249 = vpop.f32.mrf.mxu0
        %v3250 = vadd.f32 0.0, %v3249
        %3251 = vdwg.mxu0
        %3252 = vmatpush.bf16.msra.mxu0 0
        %3253 = vmatpush.bf16.msra.mxu0 0
        %3254 = vmatpush.bf16.msra.mxu0 0
        %3255 = vmatpush.bf16.msra.mxu0 0
        %3256 = vmatpush.bf16.msra.mxu0 0
        %3257 = vmatpush.bf16.msra.mxu0 0
        %3258 = vmatpush.bf16.msra.mxu0 %v3163
        %3259 = vmatpush.bf16.msra.mxu0 %v3123
        %3260 = vmatmul.bf16.gmra.mxu0 %v3142
        %v3261 = vpop.f32.mrf.mxu0
        %v3262 = vadd.f32 0.0, %v3261
        %v3263 = vpop.f32.mrf.mxu0
        %v3264 = vadd.f32 0.0, %v3263
        %3265 = vdwg.mxu0
        %3266 = vmatpush.bf16.msra.mxu0 0
        %3267 = vmatpush.bf16.msra.mxu0 0
        %3268 = vmatpush.bf16.msra.mxu0 0
        %3269 = vmatpush.bf16.msra.mxu0 0
        %3270 = vmatpush.bf16.msra.mxu0 0
        %3271 = vmatpush.bf16.msra.mxu0 0
        %3272 = vmatpush.bf16.msra.mxu0 %v3166
        %3273 = vmatpush.bf16.msra.mxu0 %v3124
        %3274 = vmatmul.bf16.gmra.mxu0 %v3142
        %v3275 = vpop.f32.mrf.mxu0
        %v3276 = vadd.f32 0.0, %v3275
        %v3277 = vpop.f32.mrf.mxu0
        %v3278 = vadd.f32 0.0, %v3277
        %3279 = vdwg.mxu0
        %s3280 = scalar_lea.vmem %s3, 32
        %v3281 = vld [vmem:[%s3280] sm:$0xf]
        %v3282 = vld [vmem:[%s3280 + $0x4] sm:$0xf]
        %v3285 = vunpack.c.l.b16 %v3281
        %v3286 = vunpack.c.l.b16 %v3282
        %v3287 = vpack.c.b16 %v3286, %v3285
        %3288 = vrot.lane.b32.xlu0 %v2568, 72
        %v3289 = vpop.permute.xlu0 %3288
        %3290 = vrot.lane.b32.xlu0 %v2571, 72
        %v3291 = vpop.permute.xlu0 %3290
        %3292 = vrot.lane.b32.xlu0 %v2574, 72
        %v3293 = vpop.permute.xlu0 %3292
        %3294 = vrot.lane.b32.xlu0 %v2577, 72
        %v3295 = vpop.permute.xlu0 %3294
        %3296 = vrot.lane.b32.xlu0 %v2580, 72
        %v3297 = vpop.permute.xlu0 %3296
        %3298 = vrot.lane.b32.xlu0 %v2583, 72
        %v3299 = vpop.permute.xlu0 %3298
        %3300 = vrot.lane.b32.xlu0 %v2586, 72
        %v3301 = vpop.permute.xlu0 %3300
        %3302 = vrot.lane.b32.xlu0 %v2589, 72
        %v3303 = vpop.permute.xlu0 %3302
        %3304 = vrot.lane.b32.xlu0 %v2631, 72
        %v3305 = vpop.permute.xlu0 %3304
        %3306 = vrot.lane.b32.xlu0 %v2610, 72
        %v3307 = vpop.permute.xlu0 %3306
        %3308 = vrot.lane.b32.xlu0 %v2612, 72
        %v3309 = vpop.permute.xlu0 %3308
        %3310 = vrot.lane.b32.xlu0 %v2614, 72
        %v3311 = vpop.permute.xlu0 %3310
        %3312 = vrot.lane.b32.xlu0 %v2616, 72
        %v3313 = vpop.permute.xlu0 %3312
        %3314 = vrot.lane.b32.xlu0 %v2618, 72
        %v3315 = vpop.permute.xlu0 %3314
        %3316 = vrot.lane.b32.xlu0 %v2620, 72
        %v3317 = vpop.permute.xlu0 %3316
        %3318 = vrot.lane.b32.xlu0 %v2622, 72
        %v3319 = vpop.permute.xlu0 %3318
        %3320 = vrot.lane.b32.xlu0 %v2624, 72
        %v3321 = vpop.permute.xlu0 %3320
        %3322 = vrot.lane.b32.xlu0 %v2635, 72
        %v3323 = vpop.permute.xlu0 %3322
        %vm3324 = vcmask 588800
        %v3325 = vsel %vm3324, %v3289, %v3291
        %v3326 = vsel %vm3324, %v3291, %v3293
        %v3327 = vsel %vm3324, %v3293, %v3295
        %v3328 = vsel %vm3324, %v3295, %v3297
        %v3329 = vsel %vm3324, %v3297, %v3299
        %v3330 = vsel %vm3324, %v3299, %v3301
        %v3331 = vsel %vm3324, %v3301, %v3303
        %v3332 = vsel %vm3324, %v3303, %v3305
        %v3333 = vsel %vm3324, %v3307, %v3309
        %v3334 = vsel %vm3324, %v3309, %v3311
        %v3335 = vsel %vm3324, %v3311, %v3313
        %v3336 = vsel %vm3324, %v3313, %v3315
        %v3337 = vsel %vm3324, %v3315, %v3317
        %v3338 = vsel %vm3324, %v3317, %v3319
        %v3339 = vsel %vm3324, %v3319, %v3321
        %v3340 = vsel %vm3324, %v3321, %v3323
        %v3350 = vsel %vm2723, %v3287, 0
        %v3353 = vsel %vm2727, %v3333, 0
        %v3356 = vsel %vm2727, %v3334, 0
        %v3359 = vsel %vm2727, %v3335, 0
        %v3362 = vsel %vm2727, %v3336, 0
        %v3365 = vsel %vm2727, %v3337, 0
        %v3368 = vsel %vm2727, %v3338, 0
        %v3371 = vsel %vm2727, %v3339, 0
        %v3374 = vsel %vm2727, %v3340, 0
        %3376 = vmatpush.bf16.msra.mxu0 0
        %3377 = vmatpush.bf16.msra.mxu0 0
        %3378 = vmatpush.bf16.msra.mxu0 0
        %3379 = vmatpush.bf16.msra.mxu0 0
        %3380 = vmatpush.bf16.msra.mxu0 0
        %3381 = vmatpush.bf16.msra.mxu0 0
        %3382 = vmatpush.bf16.msra.mxu0 %v3353
        %3383 = vmatpush.bf16.msra.mxu0 %v3325
        %3384 = vmatmul.bf16.gmra.mxu0 %v3350
        %v3385 = vpop.f32.mrf.mxu0
        %v3386 = vadd.f32 0.0, %v3385
        %v3387 = vpop.f32.mrf.mxu0
        %v3388 = vadd.f32 0.0, %v3387
        %3389 = vdwg.mxu0
        %3390 = vmatpush.bf16.msra.mxu0 0
        %3391 = vmatpush.bf16.msra.mxu0 0
        %3392 = vmatpush.bf16.msra.mxu0 0
        %3393 = vmatpush.bf16.msra.mxu0 0
        %3394 = vmatpush.bf16.msra.mxu0 0
        %3395 = vmatpush.bf16.msra.mxu0 0
        %3396 = vmatpush.bf16.msra.mxu0 %v3356
        %3397 = vmatpush.bf16.msra.mxu0 %v3326
        %3398 = vmatmul.bf16.gmra.mxu0 %v3350
        %v3399 = vpop.f32.mrf.mxu0
        %v3400 = vadd.f32 0.0, %v3399
        %v3401 = vpop.f32.mrf.mxu0
        %v3402 = vadd.f32 0.0, %v3401
        %3403 = vdwg.mxu0
        %3404 = vmatpush.bf16.msra.mxu0 0
        %3405 = vmatpush.bf16.msra.mxu0 0
        %3406 = vmatpush.bf16.msra.mxu0 0
        %3407 = vmatpush.bf16.msra.mxu0 0
        %3408 = vmatpush.bf16.msra.mxu0 0
        %3409 = vmatpush.bf16.msra.mxu0 0
        %3410 = vmatpush.bf16.msra.mxu0 %v3359
        %3411 = vmatpush.bf16.msra.mxu0 %v3327
        %3412 = vmatmul.bf16.gmra.mxu0 %v3350
        %v3413 = vpop.f32.mrf.mxu0
        %v3414 = vadd.f32 0.0, %v3413
        %v3415 = vpop.f32.mrf.mxu0
        %v3416 = vadd.f32 0.0, %v3415
        %3417 = vdwg.mxu0
        %3418 = vmatpush.bf16.msra.mxu0 0
        %3419 = vmatpush.bf16.msra.mxu0 0
        %3420 = vmatpush.bf16.msra.mxu0 0
        %3421 = vmatpush.bf16.msra.mxu0 0
        %3422 = vmatpush.bf16.msra.mxu0 0
        %3423 = vmatpush.bf16.msra.mxu0 0
        %3424 = vmatpush.bf16.msra.mxu0 %v3362
        %3425 = vmatpush.bf16.msra.mxu0 %v3328
        %3426 = vmatmul.bf16.gmra.mxu0 %v3350
        %v3427 = vpop.f32.mrf.mxu0
        %v3428 = vadd.f32 0.0, %v3427
        %v3429 = vpop.f32.mrf.mxu0
        %v3430 = vadd.f32 0.0, %v3429
        %3431 = vdwg.mxu0
        %3432 = vmatpush.bf16.msra.mxu0 0
        %3433 = vmatpush.bf16.msra.mxu0 0
        %3434 = vmatpush.bf16.msra.mxu0 0
        %3435 = vmatpush.bf16.msra.mxu0 0
        %3436 = vmatpush.bf16.msra.mxu0 0
        %3437 = vmatpush.bf16.msra.mxu0 0
        %3438 = vmatpush.bf16.msra.mxu0 %v3365
        %3439 = vmatpush.bf16.msra.mxu0 %v3329
        %3440 = vmatmul.bf16.gmra.mxu0 %v3350
        %v3441 = vpop.f32.mrf.mxu0
        %v3442 = vadd.f32 0.0, %v3441
        %v3443 = vpop.f32.mrf.mxu0
        %v3444 = vadd.f32 0.0, %v3443
        %3445 = vdwg.mxu0
        %3446 = vmatpush.bf16.msra.mxu0 0
        %3447 = vmatpush.bf16.msra.mxu0 0
        %3448 = vmatpush.bf16.msra.mxu0 0
        %3449 = vmatpush.bf16.msra.mxu0 0
        %3450 = vmatpush.bf16.msra.mxu0 0
        %3451 = vmatpush.bf16.msra.mxu0 0
        %3452 = vmatpush.bf16.msra.mxu0 %v3368
        %3453 = vmatpush.bf16.msra.mxu0 %v3330
        %3454 = vmatmul.bf16.gmra.mxu0 %v3350
        %v3455 = vpop.f32.mrf.mxu0
        %v3456 = vadd.f32 0.0, %v3455
        %v3457 = vpop.f32.mrf.mxu0
        %v3458 = vadd.f32 0.0, %v3457
        %3459 = vdwg.mxu0
        %3460 = vmatpush.bf16.msra.mxu0 0
        %3461 = vmatpush.bf16.msra.mxu0 0
        %3462 = vmatpush.bf16.msra.mxu0 0
        %3463 = vmatpush.bf16.msra.mxu0 0
        %3464 = vmatpush.bf16.msra.mxu0 0
        %3465 = vmatpush.bf16.msra.mxu0 0
        %3466 = vmatpush.bf16.msra.mxu0 %v3371
        %3467 = vmatpush.bf16.msra.mxu0 %v3331
        %3468 = vmatmul.bf16.gmra.mxu0 %v3350
        %v3469 = vpop.f32.mrf.mxu0
        %v3470 = vadd.f32 0.0, %v3469
        %v3471 = vpop.f32.mrf.mxu0
        %v3472 = vadd.f32 0.0, %v3471
        %3473 = vdwg.mxu0
        %3474 = vmatpush.bf16.msra.mxu0 0
        %3475 = vmatpush.bf16.msra.mxu0 0
        %3476 = vmatpush.bf16.msra.mxu0 0
        %3477 = vmatpush.bf16.msra.mxu0 0
        %3478 = vmatpush.bf16.msra.mxu0 0
        %3479 = vmatpush.bf16.msra.mxu0 0
        %3480 = vmatpush.bf16.msra.mxu0 %v3374
        %3481 = vmatpush.bf16.msra.mxu0 %v3332
        %3482 = vmatmul.bf16.gmra.mxu0 %v3350
        %v3483 = vpop.f32.mrf.mxu0
        %v3484 = vadd.f32 0.0, %v3483
        %v3485 = vpop.f32.mrf.mxu0
        %v3486 = vadd.f32 0.0, %v3485
        %3487 = vdwg.mxu0
        %v3490 = vunpack.c.l.b16 %v2625
        %v3491 = vunpack.c.l.b16 %v2626
        %v3492 = vpack.c.b16 %v3491, %v3490
        %v3494 = vsel %vm2723, %v3492, 0
        %v3496 = vsel %vm2727, %v2610, 0
        %v3498 = vsel %vm2727, %v2612, 0
        %v3500 = vsel %vm2727, %v2614, 0
        %v3502 = vsel %vm2727, %v2616, 0
        %v3504 = vsel %vm2727, %v2618, 0
        %v3506 = vsel %vm2727, %v2620, 0
        %v3508 = vsel %vm2727, %v2622, 0
        %v3510 = vsel %vm2727, %v2624, 0
        %3512 = vmatpush.bf16.msra.mxu0 0
        %3513 = vmatpush.bf16.msra.mxu0 0
        %3514 = vmatpush.bf16.msra.mxu0 0
        %3515 = vmatpush.bf16.msra.mxu0 0
        %3516 = vmatpush.bf16.msra.mxu0 0
        %3517 = vmatpush.bf16.msra.mxu0 0
        %3518 = vmatpush.bf16.msra.mxu0 %v3496
        %3519 = vmatpush.bf16.msra.mxu0 %v2568
        %3520 = vmatmul.bf16.gmra.mxu0 %v3494
        %v3521 = vpop.f32.mrf.mxu0
        %v3522 = vadd.f32 %v2762, %v3521
        %v3523 = vpop.f32.mrf.mxu0
        %v3524 = vadd.f32 %v2764, %v3523
        %3525 = vdwg.mxu0
        %3526 = vmatpush.bf16.msra.mxu0 0
        %3527 = vmatpush.bf16.msra.mxu0 0
        %3528 = vmatpush.bf16.msra.mxu0 0
        %3529 = vmatpush.bf16.msra.mxu0 0
        %3530 = vmatpush.bf16.msra.mxu0 0
        %3531 = vmatpush.bf16.msra.mxu0 0
        %3532 = vmatpush.bf16.msra.mxu0 %v3498
        %3533 = vmatpush.bf16.msra.mxu0 %v2571
        %3534 = vmatmul.bf16.gmra.mxu0 %v3494
        %v3535 = vpop.f32.mrf.mxu0
        %v3536 = vadd.f32 %v2776, %v3535
        %v3537 = vpop.f32.mrf.mxu0
        %v3538 = vadd.f32 %v2778, %v3537
        %3539 = vdwg.mxu0
        %3540 = vmatpush.bf16.msra.mxu0 0
        %3541 = vmatpush.bf16.msra.mxu0 0
        %3542 = vmatpush.bf16.msra.mxu0 0
        %3543 = vmatpush.bf16.msra.mxu0 0
        %3544 = vmatpush.bf16.msra.mxu0 0
        %3545 = vmatpush.bf16.msra.mxu0 0
        %3546 = vmatpush.bf16.msra.mxu0 %v3500
        %3547 = vmatpush.bf16.msra.mxu0 %v2574
        %3548 = vmatmul.bf16.gmra.mxu0 %v3494
        %v3549 = vpop.f32.mrf.mxu0
        %v3550 = vadd.f32 %v2790, %v3549
        %v3551 = vpop.f32.mrf.mxu0
        %v3552 = vadd.f32 %v2792, %v3551
        %3553 = vdwg.mxu0
        %3554 = vmatpush.bf16.msra.mxu0 0
        %3555 = vmatpush.bf16.msra.mxu0 0
        %3556 = vmatpush.bf16.msra.mxu0 0
        %3557 = vmatpush.bf16.msra.mxu0 0
        %3558 = vmatpush.bf16.msra.mxu0 0
        %3559 = vmatpush.bf16.msra.mxu0 0
        %3560 = vmatpush.bf16.msra.mxu0 %v3502
        %3561 = vmatpush.bf16.msra.mxu0 %v2577
        %3562 = vmatmul.bf16.gmra.mxu0 %v3494
        %v3563 = vpop.f32.mrf.mxu0
        %v3564 = vadd.f32 %v2804, %v3563
        %v3565 = vpop.f32.mrf.mxu0
        %v3566 = vadd.f32 %v2806, %v3565
        %3567 = vdwg.mxu0
        %3568 = vmatpush.bf16.msra.mxu0 0
        %3569 = vmatpush.bf16.msra.mxu0 0
        %3570 = vmatpush.bf16.msra.mxu0 0
        %3571 = vmatpush.bf16.msra.mxu0 0
        %3572 = vmatpush.bf16.msra.mxu0 0
        %3573 = vmatpush.bf16.msra.mxu0 0
        %3574 = vmatpush.bf16.msra.mxu0 %v3504
        %3575 = vmatpush.bf16.msra.mxu0 %v2580
        %3576 = vmatmul.bf16.gmra.mxu0 %v3494
        %v3577 = vpop.f32.mrf.mxu0
        %v3578 = vadd.f32 %v2818, %v3577
        %v3579 = vpop.f32.mrf.mxu0
        %v3580 = vadd.f32 %v2820, %v3579
        %3581 = vdwg.mxu0
        %3582 = vmatpush.bf16.msra.mxu0 0
        %3583 = vmatpush.bf16.msra.mxu0 0
        %3584 = vmatpush.bf16.msra.mxu0 0
        %3585 = vmatpush.bf16.msra.mxu0 0
        %3586 = vmatpush.bf16.msra.mxu0 0
        %3587 = vmatpush.bf16.msra.mxu0 0
        %3588 = vmatpush.bf16.msra.mxu0 %v3506
        %3589 = vmatpush.bf16.msra.mxu0 %v2583
        %3590 = vmatmul.bf16.gmra.mxu0 %v3494
        %v3591 = vpop.f32.mrf.mxu0
        %v3592 = vadd.f32 %v2832, %v3591
        %v3593 = vpop.f32.mrf.mxu0
        %v3594 = vadd.f32 %v2834, %v3593
        %3595 = vdwg.mxu0
        %3596 = vmatpush.bf16.msra.mxu0 0
        %3597 = vmatpush.bf16.msra.mxu0 0
        %3598 = vmatpush.bf16.msra.mxu0 0
        %3599 = vmatpush.bf16.msra.mxu0 0
        %3600 = vmatpush.bf16.msra.mxu0 0
        %3601 = vmatpush.bf16.msra.mxu0 0
        %3602 = vmatpush.bf16.msra.mxu0 %v3508
        %3603 = vmatpush.bf16.msra.mxu0 %v2586
        %3604 = vmatmul.bf16.gmra.mxu0 %v3494
        %v3605 = vpop.f32.mrf.mxu0
        %v3606 = vadd.f32 %v2846, %v3605
        %v3607 = vpop.f32.mrf.mxu0
        %v3608 = vadd.f32 %v2848, %v3607
        %3609 = vdwg.mxu0
        %3610 = vmatpush.bf16.msra.mxu0 0
        %3611 = vmatpush.bf16.msra.mxu0 0
        %3612 = vmatpush.bf16.msra.mxu0 0
        %3613 = vmatpush.bf16.msra.mxu0 0
        %3614 = vmatpush.bf16.msra.mxu0 0
        %3615 = vmatpush.bf16.msra.mxu0 0
        %3616 = vmatpush.bf16.msra.mxu0 %v3510
        %3617 = vmatpush.bf16.msra.mxu0 %v2589
        %3618 = vmatmul.bf16.gmra.mxu0 %v3494
        %v3619 = vpop.f32.mrf.mxu0
        %v3620 = vadd.f32 %v2860, %v3619
        %v3621 = vpop.f32.mrf.mxu0
        %v3622 = vadd.f32 %v2862, %v3621
        %3623 = vdwg.mxu0
        %v3624 = vadd.f32 %v3522, %v2970
        %v3625 = vadd.f32 %v3536, %v2984
        %v3626 = vadd.f32 %v3550, %v2998
        %v3627 = vadd.f32 %v3564, %v3012
        %v3628 = vadd.f32 %v3578, %v3026
        %v3629 = vadd.f32 %v3592, %v3040
        %v3630 = vadd.f32 %v3606, %v3054
        %v3631 = vadd.f32 %v3620, %v3068
        %v3632 = vadd.f32 %v3524, %v2972
        %v3633 = vadd.f32 %v3538, %v2986
        %v3634 = vadd.f32 %v3552, %v3000
        %v3635 = vadd.f32 %v3566, %v3014
        %v3636 = vadd.f32 %v3580, %v3028
        %v3637 = vadd.f32 %v3594, %v3042
        %v3638 = vadd.f32 %v3608, %v3056
        %v3639 = vadd.f32 %v3622, %v3070
        %v3640 = vadd.f32 %v3624, %v3178
        %v3641 = vadd.f32 %v3625, %v3192
        %v3642 = vadd.f32 %v3626, %v3206
        %v3643 = vadd.f32 %v3627, %v3220
        %v3644 = vadd.f32 %v3628, %v3234
        %v3645 = vadd.f32 %v3629, %v3248
        %v3646 = vadd.f32 %v3630, %v3262
        %v3647 = vadd.f32 %v3631, %v3276
        %v3648 = vadd.f32 %v3632, %v3180
        %v3649 = vadd.f32 %v3633, %v3194
        %v3650 = vadd.f32 %v3634, %v3208
        %v3651 = vadd.f32 %v3635, %v3222
        %v3652 = vadd.f32 %v3636, %v3236
        %v3653 = vadd.f32 %v3637, %v3250
        %v3654 = vadd.f32 %v3638, %v3264
        %v3655 = vadd.f32 %v3639, %v3278
        %v3656 = vadd.f32 %v3640, %v3386
        %v3657 = vadd.f32 %v3641, %v3400
        %v3658 = vadd.f32 %v3642, %v3414
        %v3659 = vadd.f32 %v3643, %v3428
        %v3660 = vadd.f32 %v3644, %v3442
        %v3661 = vadd.f32 %v3645, %v3456
        %v3662 = vadd.f32 %v3646, %v3470
        %v3663 = vadd.f32 %v3647, %v3484
        %v3664 = vadd.f32 %v3648, %v3388
        %v3665 = vadd.f32 %v3649, %v3402
        %v3666 = vadd.f32 %v3650, %v3416
        %v3667 = vadd.f32 %v3651, %v3430
        %v3668 = vadd.f32 %v3652, %v3444
        %v3669 = vadd.f32 %v3653, %v3458
        %v3670 = vadd.f32 %v3654, %v3472
        %v3671 = vadd.f32 %v3655, %v3486
        %v3672 = vld [vmem:[%s4] sm:$0xff]
        %v3673 = vld [vmem:[%s4 + $0x8] sm:$0xff]
        %3675 = vset.pattern.permute.xlu0 0
        %3676 = vperm.xlu0 %3675, %v3672
        %v3677 = vpop.permute.xlu0 %3676
        %3680 = vset.pattern.permute.xlu0 0
        %3681 = vperm.xlu0 %3680, %v3673
        %v3682 = vpop.permute.xlu0 %3681
        %v3684 = vadd.f32 %v3656, %v3677
        %v3685 = vadd.f32 %v3657, %v3677
        %v3686 = vadd.f32 %v3658, %v3677
        %v3687 = vadd.f32 %v3659, %v3677
        %v3688 = vadd.f32 %v3660, %v3677
        %v3689 = vadd.f32 %v3661, %v3677
        %v3690 = vadd.f32 %v3662, %v3677
        %v3691 = vadd.f32 %v3663, %v3677
        %v3692 = vadd.f32 %v3664, %v3682
        %v3693 = vadd.f32 %v3665, %v3682
        %v3694 = vadd.f32 %v3666, %v3682
        %v3695 = vadd.f32 %v3667, %v3682
        %v3696 = vadd.f32 %v3668, %v3682
        %v3697 = vadd.f32 %v3669, %v3682
        %v3698 = vadd.f32 %v3670, %v3682
        %v3699 = vadd.f32 %v3671, %v3682
        %v3700 = vmax.f32 %v3684, 0.0
        %v3701 = vmax.f32 %v3685, 0.0
        %v3702 = vmax.f32 %v3686, 0.0
        %v3703 = vmax.f32 %v3687, 0.0
        %v3704 = vmax.f32 %v3688, 0.0
        %v3705 = vmax.f32 %v3689, 0.0
        %v3706 = vmax.f32 %v3690, 0.0
        %v3707 = vmax.f32 %v3691, 0.0
        %v3708 = vmax.f32 %v3692, 0.0
        %v3709 = vmax.f32 %v3693, 0.0
        %v3710 = vmax.f32 %v3694, 0.0
        %v3711 = vmax.f32 %v3695, 0.0
        %v3712 = vmax.f32 %v3696, 0.0
        %v3713 = vmax.f32 %v3697, 0.0
        %v3714 = vmax.f32 %v3698, 0.0
        %v3715 = vmax.f32 %v3699, 0.0
        %3716 = vst [vmem:[%s782] sm:$0xff] %v3700
        %3717 = vst [vmem:[%s782 + $0x8] sm:$0xff] %v3701
        %3718 = vst [vmem:[%s782 + $0x10] sm:$0xff] %v3702
        %3719 = vst [vmem:[%s782 + $0x18] sm:$0xff] %v3703
        %3720 = vst [vmem:[%s782 + $0x20] sm:$0xff] %v3704
        %3721 = vst [vmem:[%s782 + $0x28] sm:$0xff] %v3705
        %3722 = vst [vmem:[%s782 + $0x30] sm:$0xff] %v3706
        %3723 = vst [vmem:[%s782 + $0x38] sm:$0xff] %v3707
        %3724 = vst [vmem:[%s782 + $0x40] sm:$0xff] %v3708
        %3725 = vst [vmem:[%s782 + $0x48] sm:$0xff] %v3709
        %3726 = vst [vmem:[%s782 + $0x50] sm:$0xff] %v3710
        %3727 = vst [vmem:[%s782 + $0x58] sm:$0xff] %v3711
        %3728 = vst [vmem:[%s782 + $0x60] sm:$0xff] %v3712
        %3729 = vst [vmem:[%s782 + $0x68] sm:$0xff] %v3713
        %3730 = vst [vmem:[%s782 + $0x70] sm:$0xff] %v3714
        %3731 = vst [vmem:[%s782 + $0x78] sm:$0xff] %v3715
        %3748 = vrot.lane.b32.xlu0 %v3700, 127
        %v3749 = vpop.permute.xlu0 %3748
        %3750 = vrot.lane.b32.xlu0 %v3701, 127
        %v3751 = vpop.permute.xlu0 %3750
        %3752 = vrot.lane.b32.xlu0 %v3702, 127
        %v3753 = vpop.permute.xlu0 %3752
        %3754 = vrot.lane.b32.xlu0 %v3703, 127
        %v3755 = vpop.permute.xlu0 %3754
        %3756 = vrot.lane.b32.xlu0 %v3704, 127
        %v3757 = vpop.permute.xlu0 %3756
        %3758 = vrot.lane.b32.xlu0 %v3705, 127
        %v3759 = vpop.permute.xlu0 %3758
        %3760 = vrot.lane.b32.xlu0 %v3706, 127
        %v3761 = vpop.permute.xlu0 %3760
        %3762 = vrot.lane.b32.xlu0 %v3707, 127
        %v3763 = vpop.permute.xlu0 %3762
        %3764 = vrot.lane.b32.xlu0 %v3708, 127
        %v3765 = vpop.permute.xlu0 %3764
        %3766 = vrot.lane.b32.xlu0 %v3709, 127
        %v3767 = vpop.permute.xlu0 %3766
        %3768 = vrot.lane.b32.xlu0 %v3710, 127
        %v3769 = vpop.permute.xlu0 %3768
        %3770 = vrot.lane.b32.xlu0 %v3711, 127
        %v3771 = vpop.permute.xlu0 %3770
        %3772 = vrot.lane.b32.xlu0 %v3712, 127
        %v3773 = vpop.permute.xlu0 %3772
        %3774 = vrot.lane.b32.xlu0 %v3713, 127
        %v3775 = vpop.permute.xlu0 %3774
        %3776 = vrot.lane.b32.xlu0 %v3714, 127
        %v3777 = vpop.permute.xlu0 %3776
        %3778 = vrot.lane.b32.xlu0 %v3715, 127
        %v3779 = vpop.permute.xlu0 %3778
        %vm3780 = vcmask 1039360
        %v3781 = vsel %vm3780, %v3749, %v3751
        %v3782 = vsel %vm3780, %v3753, %v3755
        %v3783 = vsel %vm3780, %v3757, %v3759
        %v3784 = vsel %vm3780, %v3761, %v3763
        %v3785 = vsel %vm3780, %v3765, %v3767
        %v3786 = vsel %vm3780, %v3769, %v3771
        %v3787 = vsel %vm3780, %v3773, %v3775
        %v3788 = vsel %vm3780, %v3777, %v3779
        %v3797 = vmax.f32 %v3700, %v3781
        %v3798 = vmax.f32 %v3702, %v3782
        %v3799 = vmax.f32 %v3704, %v3783
        %v3800 = vmax.f32 %v3706, %v3784
        %v3801 = vmax.f32 %v3708, %v3785
        %v3802 = vmax.f32 %v3710, %v3786
        %v3803 = vmax.f32 %v3712, %v3787
        %v3804 = vmax.f32 %v3714, %v3788
        %v3805 = vsel %vm3780, %v3751, %v3753
        %v3806 = vsel %vm3780, %v3755, %v3757
        %v3807 = vsel %vm3780, %v3759, %v3761
        %v3808 = vsel %vm3780, %v3767, %v3769
        %v3809 = vsel %vm3780, %v3771, %v3773
        %v3810 = vsel %vm3780, %v3775, %v3777
        %v3819 = vmax.f32 %v3701, %v3805
        %v3820 = vmax.f32 %v3703, %v3806
        %v3821 = vmax.f32 %v3705, %v3807
        %v3822 = vmax.f32 %v3707, %v3763
        %v3823 = vmax.f32 %v3709, %v3808
        %v3824 = vmax.f32 %v3711, %v3809
        %v3825 = vmax.f32 %v3713, %v3810
        %v3826 = vmax.f32 %v3715, %v3779
        %3843 = vrot.lane.b32.xlu0 %v3797, 114
        %v3844 = vpop.permute.xlu0 %3843
        %3845 = vrot.lane.b32.xlu0 %v3819, 114
        %v3846 = vpop.permute.xlu0 %3845
        %3847 = vrot.lane.b32.xlu0 %v3798, 114
        %v3848 = vpop.permute.xlu0 %3847
        %3849 = vrot.lane.b32.xlu0 %v3820, 114
        %v3850 = vpop.permute.xlu0 %3849
        %3851 = vrot.lane.b32.xlu0 %v3799, 114
        %v3852 = vpop.permute.xlu0 %3851
        %3853 = vrot.lane.b32.xlu0 %v3821, 114
        %v3854 = vpop.permute.xlu0 %3853
        %3855 = vrot.lane.b32.xlu0 %v3800, 114
        %v3856 = vpop.permute.xlu0 %3855
        %3857 = vrot.lane.b32.xlu0 %v3822, 114
        %v3858 = vpop.permute.xlu0 %3857
        %3859 = vrot.lane.b32.xlu0 %v3801, 114
        %v3860 = vpop.permute.xlu0 %3859
        %3861 = vrot.lane.b32.xlu0 %v3823, 114
        %v3862 = vpop.permute.xlu0 %3861
        %3863 = vrot.lane.b32.xlu0 %v3802, 114
        %v3864 = vpop.permute.xlu0 %3863
        %3865 = vrot.lane.b32.xlu0 %v3824, 114
        %v3866 = vpop.permute.xlu0 %3865
        %3867 = vrot.lane.b32.xlu0 %v3803, 114
        %v3868 = vpop.permute.xlu0 %3867
        %3869 = vrot.lane.b32.xlu0 %v3825, 114
        %v3870 = vpop.permute.xlu0 %3869
        %3871 = vrot.lane.b32.xlu0 %v3804, 114
        %v3872 = vpop.permute.xlu0 %3871
        %3873 = vrot.lane.b32.xlu0 %v3826, 114
        %v3874 = vpop.permute.xlu0 %3873
        %vm3875 = vcmask 932864
        %v3876 = vsel %vm3875, %v3844, %v3846
        %v3877 = vsel %vm3875, %v3848, %v3850
        %v3878 = vsel %vm3875, %v3852, %v3854
        %v3879 = vsel %vm3875, %v3856, %v3858
        %v3880 = vsel %vm3875, %v3860, %v3862
        %v3881 = vsel %vm3875, %v3864, %v3866
        %v3882 = vsel %vm3875, %v3868, %v3870
        %v3883 = vsel %vm3875, %v3872, %v3874
        %v3892 = vmax.f32 %v3797, %v3876
        %v3893 = vmax.f32 %v3798, %v3877
        %v3894 = vmax.f32 %v3799, %v3878
        %v3895 = vmax.f32 %v3800, %v3879
        %v3896 = vmax.f32 %v3801, %v3880
        %v3897 = vmax.f32 %v3802, %v3881
        %v3898 = vmax.f32 %v3803, %v3882
        %v3899 = vmax.f32 %v3804, %v3883
        %v3901 = vrot.slane %v3892, 1
        %v3903 = vrot.slane %v3892, 2
        %v3905 = vrot.slane %v3892, 3
        %v3907 = vrot.slane %v3892, 4
        %v3909 = vrot.slane %v3892, 5
        %v3911 = vrot.slane %v3892, 6
        %v3913 = vrot.slane %v3892, 7
        %v3916 = vrot.slane %v3896, 1
        %v3918 = vrot.slane %v3896, 2
        %v3920 = vrot.slane %v3896, 3
        %v3922 = vrot.slane %v3896, 4
        %v3924 = vrot.slane %v3896, 5
        %v3926 = vrot.slane %v3896, 6
        %v3928 = vrot.slane %v3896, 7
        %v3931 = vrot.slane %v3893, 1
        %v3932 = vrot.slane %v3893, 2
        %v3933 = vrot.slane %v3893, 3
        %v3934 = vrot.slane %v3893, 4
        %v3935 = vrot.slane %v3893, 5
        %v3936 = vrot.slane %v3893, 6
        %v3937 = vrot.slane %v3893, 7
        %v3939 = vrot.slane %v3897, 1
        %v3940 = vrot.slane %v3897, 2
        %v3941 = vrot.slane %v3897, 3
        %v3942 = vrot.slane %v3897, 4
        %v3943 = vrot.slane %v3897, 5
        %v3944 = vrot.slane %v3897, 6
        %v3945 = vrot.slane %v3897, 7
        %v3947 = vrot.slane %v3894, 1
        %v3948 = vrot.slane %v3894, 2
        %v3949 = vrot.slane %v3894, 3
        %v3950 = vrot.slane %v3894, 4
        %v3951 = vrot.slane %v3894, 5
        %v3952 = vrot.slane %v3894, 6
        %v3953 = vrot.slane %v3894, 7
        %v3955 = vrot.slane %v3898, 1
        %v3956 = vrot.slane %v3898, 2
        %v3957 = vrot.slane %v3898, 3
        %v3958 = vrot.slane %v3898, 4
        %v3959 = vrot.slane %v3898, 5
        %v3960 = vrot.slane %v3898, 6
        %v3961 = vrot.slane %v3898, 7
        %v3963 = vrot.slane %v3895, 1
        %v3964 = vrot.slane %v3895, 2
        %v3965 = vrot.slane %v3895, 3
        %v3966 = vrot.slane %v3895, 4
        %v3967 = vrot.slane %v3895, 5
        %v3968 = vrot.slane %v3895, 6
        %v3969 = vrot.slane %v3895, 7
        %v3971 = vrot.slane %v3899, 1
        %v3972 = vrot.slane %v3899, 2
        %v3973 = vrot.slane %v3899, 3
        %v3974 = vrot.slane %v3899, 4
        %v3975 = vrot.slane %v3899, 5
        %v3976 = vrot.slane %v3899, 6
        %v3977 = vrot.slane %v3899, 7
        %v3978 = vrot.slane %v3931, 7
        %v3979 = vrot.slane %v3932, 7
        %v3980 = vrot.slane %v3933, 7
        %v3981 = vrot.slane %v3934, 7
        %v3982 = vrot.slane %v3935, 7
        %v3983 = vrot.slane %v3936, 7
        %v3984 = vrot.slane %v3937, 7
        %v3985 = vrot.slane %v3939, 7
        %v3986 = vrot.slane %v3940, 7
        %v3987 = vrot.slane %v3941, 7
        %v3988 = vrot.slane %v3942, 7
        %v3989 = vrot.slane %v3943, 7
        %v3990 = vrot.slane %v3944, 7
        %v3991 = vrot.slane %v3945, 7
        %v4008 = vrot.slane %v3947, 6
        %v4009 = vrot.slane %v3948, 6
        %v4010 = vrot.slane %v3949, 6
        %v4011 = vrot.slane %v3950, 6
        %v4012 = vrot.slane %v3951, 6
        %v4013 = vrot.slane %v3952, 6
        %v4014 = vrot.slane %v3953, 6
        %v4015 = vrot.slane %v3955, 6
        %v4016 = vrot.slane %v3956, 6
        %v4017 = vrot.slane %v3957, 6
        %v4018 = vrot.slane %v3958, 6
        %v4019 = vrot.slane %v3959, 6
        %v4020 = vrot.slane %v3960, 6
        %v4021 = vrot.slane %v3961, 6
        %v4038 = vrot.slane %v3963, 5
        %v4039 = vrot.slane %v3964, 5
        %v4040 = vrot.slane %v3965, 5
        %v4041 = vrot.slane %v3966, 5
        %v4042 = vrot.slane %v3967, 5
        %v4043 = vrot.slane %v3968, 5
        %v4044 = vrot.slane %v3969, 5
        %v4045 = vrot.slane %v3971, 5
        %v4046 = vrot.slane %v3972, 5
        %v4047 = vrot.slane %v3973, 5
        %v4048 = vrot.slane %v3974, 5
        %v4049 = vrot.slane %v3975, 5
        %v4050 = vrot.slane %v3976, 5
        %v4051 = vrot.slane %v3977, 5
        %v4068 = vsel %vm2591, %v3892, %v3937
        %v4069 = vsel %vm2591, %v3901, %v3978
        %v4070 = vsel %vm2591, %v3903, %v3979
        %v4071 = vsel %vm2591, %v3905, %v3980
        %v4072 = vsel %vm2591, %v3907, %v3981
        %v4073 = vsel %vm2591, %v3909, %v3982
        %v4074 = vsel %vm2591, %v3911, %v3983
        %v4075 = vsel %vm2591, %v3913, %v3984
        %v4076 = vsel %vm2591, %v3896, %v3945
        %v4077 = vsel %vm2591, %v3916, %v3985
        %v4078 = vsel %vm2591, %v3918, %v3986
        %v4079 = vsel %vm2591, %v3920, %v3987
        %v4080 = vsel %vm2591, %v3922, %v3988
        %v4081 = vsel %vm2591, %v3924, %v3989
        %v4082 = vsel %vm2591, %v3926, %v3990
        %v4083 = vsel %vm2591, %v3928, %v3991
        %vm4084 = vcmask 1041408
        %v4085 = vsel %vm4084, %v4068, %v3952
        %v4086 = vsel %vm4084, %v4069, %v4008
        %v4087 = vsel %vm4084, %v4070, %v4009
        %v4088 = vsel %vm4084, %v4071, %v4010
        %v4089 = vsel %vm4084, %v4072, %v4011
        %v4090 = vsel %vm4084, %v4073, %v4012
        %v4091 = vsel %vm4084, %v4074, %v4013
        %v4092 = vsel %vm4084, %v4075, %v4014
        %v4093 = vsel %vm4084, %v4076, %v3960
        %v4094 = vsel %vm4084, %v4077, %v4015
        %v4095 = vsel %vm4084, %v4078, %v4016
        %v4096 = vsel %vm4084, %v4079, %v4017
        %v4097 = vsel %vm4084, %v4080, %v4018
        %v4098 = vsel %vm4084, %v4081, %v4019
        %v4099 = vsel %vm4084, %v4082, %v4020
        %v4100 = vsel %vm4084, %v4083, %v4021
        %v4101 = vsel %vm2542, %v4085, %v3967
        %v4102 = vsel %vm2542, %v4086, %v4038
        %v4103 = vsel %vm2542, %v4087, %v4039
        %v4104 = vsel %vm2542, %v4088, %v4040
        %v4105 = vsel %vm2542, %v4089, %v4041
        %v4106 = vsel %vm2542, %v4090, %v4042
        %v4107 = vsel %vm2542, %v4091, %v4043
        %v4108 = vsel %vm2542, %v4092, %v4044
        %v4109 = vsel %vm2542, %v4093, %v3975
        %v4110 = vsel %vm2542, %v4094, %v4045
        %v4111 = vsel %vm2542, %v4095, %v4046
        %v4112 = vsel %vm2542, %v4096, %v4047
        %v4113 = vsel %vm2542, %v4097, %v4048
        %v4114 = vsel %vm2542, %v4098, %v4049
        %v4115 = vsel %vm2542, %v4099, %v4050
        %v4116 = vsel %vm2542, %v4100, %v4051
        %v4117 = vpack.c.bf16 %v4101, %v4101
        %v4118 = vpack.c.bf16 %v4102, %v4102
        %v4119 = vpack.c.bf16 %v4103, %v4103
        %v4120 = vpack.c.bf16 %v4104, %v4104
        %v4121 = vpack.c.bf16 %v4105, %v4105
        %v4122 = vpack.c.bf16 %v4106, %v4106
        %v4123 = vpack.c.bf16 %v4107, %v4107
        %v4124 = vpack.c.bf16 %v4108, %v4108
        %v4125 = vpack.c.bf16 %v4109, %v4109
        %v4126 = vpack.c.bf16 %v4110, %v4110
        %v4127 = vpack.c.bf16 %v4111, %v4111
        %v4128 = vpack.c.bf16 %v4112, %v4112
        %v4129 = vpack.c.bf16 %v4113, %v4113
        %v4130 = vpack.c.bf16 %v4114, %v4114
        %v4131 = vpack.c.bf16 %v4115, %v4115
        %v4132 = vpack.c.bf16 %v4116, %v4116
        %v4133 = vld [vmem:[%s5] sm:$0xf]
        %v4134 = vld [vmem:[%s5 + $0x4] sm:$0xf]
        %v4135 = vld [vmem:[%s5 + $0x8] sm:$0xf]
        %v4136 = vld [vmem:[%s5 + $0xc] sm:$0xf]
        %v4137 = vld [vmem:[%s5 + $0x10] sm:$0xf]
        %v4138 = vld [vmem:[%s5 + $0x14] sm:$0xf]
        %v4139 = vld [vmem:[%s5 + $0x18] sm:$0xf]
        %v4140 = vld [vmem:[%s5 + $0x1c] sm:$0xf]
        %v4141 = vld [vmem:[%s5 + $0x20] sm:$0xf]
        %v4142 = vld [vmem:[%s5 + $0x24] sm:$0xf]
        %v4143 = vld [vmem:[%s5 + $0x28] sm:$0xf]
        %v4144 = vld [vmem:[%s5 + $0x2c] sm:$0xf]
        %v4145 = vld [vmem:[%s5 + $0x30] sm:$0xf]
        %v4146 = vld [vmem:[%s5 + $0x34] sm:$0xf]
        %v4147 = vld [vmem:[%s5 + $0x38] sm:$0xf]
        %v4148 = vld [vmem:[%s5 + $0x3c] sm:$0xf]
        %v4149 = vld [vmem:[%s5 + $0x40] sm:$0xf]
        %v4150 = vld [vmem:[%s5 + $0x44] sm:$0xf]
        %v4151 = vld [vmem:[%s5 + $0x48] sm:$0xf]
        %v4152 = vld [vmem:[%s5 + $0x4c] sm:$0xf]
        %v4153 = vld [vmem:[%s5 + $0x50] sm:$0xf]
        %v4154 = vld [vmem:[%s5 + $0x54] sm:$0xf]
        %v4155 = vld [vmem:[%s5 + $0x58] sm:$0xf]
        %v4156 = vld [vmem:[%s5 + $0x5c] sm:$0xf]
        %v4157 = vld [vmem:[%s5 + $0x60] sm:$0xf]
        %v4158 = vld [vmem:[%s5 + $0x64] sm:$0xf]
        %v4159 = vld [vmem:[%s5 + $0x68] sm:$0xf]
        %v4160 = vld [vmem:[%s5 + $0x6c] sm:$0xf]
        %v4161 = vld [vmem:[%s5 + $0x70] sm:$0xf]
        %v4162 = vld [vmem:[%s5 + $0x74] sm:$0xf]
        %v4163 = vld [vmem:[%s5 + $0x78] sm:$0xf]
        %v4164 = vld [vmem:[%s5 + $0x7c] sm:$0xf]
        %v4165 = vld [vmem:[%s5 + $0x80] sm:$0xf]
        %v4166 = vld [vmem:[%s5 + $0x84] sm:$0xf]
        %v4167 = vld [vmem:[%s5 + $0x88] sm:$0xf]
        %v4168 = vld [vmem:[%s5 + $0x8c] sm:$0xf]
        %v4169 = vld [vmem:[%s5 + $0x90] sm:$0xf]
        %v4170 = vld [vmem:[%s5 + $0x94] sm:$0xf]
        %v4171 = vld [vmem:[%s5 + $0x98] sm:$0xf]
        %v4172 = vld [vmem:[%s5 + $0x9c] sm:$0xf]
        %v4173 = vld [vmem:[%s5 + $0xa0] sm:$0xf]
        %v4174 = vld [vmem:[%s5 + $0xa4] sm:$0xf]
        %v4175 = vld [vmem:[%s5 + $0xa8] sm:$0xf]
        %v4176 = vld [vmem:[%s5 + $0xac] sm:$0xf]
        %v4177 = vld [vmem:[%s5 + $0xb0] sm:$0xf]
        %v4178 = vld [vmem:[%s5 + $0xb4] sm:$0xf]
        %v4179 = vld [vmem:[%s5 + $0xb8] sm:$0xf]
        %v4180 = vld [vmem:[%s5 + $0xbc] sm:$0xf]
        %v4181 = vld [vmem:[%s5 + $0xc0] sm:$0xf]
        %v4182 = vld [vmem:[%s5 + $0xc4] sm:$0xf]
        %v4183 = vld [vmem:[%s5 + $0xc8] sm:$0xf]
        %v4184 = vld [vmem:[%s5 + $0xcc] sm:$0xf]
        %v4185 = vld [vmem:[%s5 + $0xd0] sm:$0xf]
        %v4186 = vld [vmem:[%s5 + $0xd4] sm:$0xf]
        %v4187 = vld [vmem:[%s5 + $0xd8] sm:$0xf]
        %v4188 = vld [vmem:[%s5 + $0xdc] sm:$0xf]
        %v4189 = vld [vmem:[%s5 + $0xe0] sm:$0xf]
        %v4190 = vld [vmem:[%s5 + $0xe4] sm:$0xf]
        %v4191 = vld [vmem:[%s5 + $0xe8] sm:$0xf]
        %v4192 = vld [vmem:[%s5 + $0xec] sm:$0xf]
        %v4193 = vld [vmem:[%s5 + $0xf0] sm:$0xf]
        %v4194 = vld [vmem:[%s5 + $0xf4] sm:$0xf]
        %v4195 = vld [vmem:[%s5 + $0xf8] sm:$0xf]
        %v4196 = vld [vmem:[%s5 + $0xfc] sm:$0xf]
        %v4197 = vld [vmem:[%s5 + $0x100] sm:$0xf]
        %v4198 = vld [vmem:[%s5 + $0x104] sm:$0xf]
        %v4199 = vld [vmem:[%s5 + $0x108] sm:$0xf]
        %v4200 = vld [vmem:[%s5 + $0x10c] sm:$0xf]
        %v4201 = vld [vmem:[%s5 + $0x110] sm:$0xf]
        %v4202 = vld [vmem:[%s5 + $0x114] sm:$0xf]
        %v4203 = vld [vmem:[%s5 + $0x118] sm:$0xf]
        %v4204 = vld [vmem:[%s5 + $0x11c] sm:$0xf]
        %v4205 = vld [vmem:[%s5 + $0x120] sm:$0xf]
        %v4206 = vld [vmem:[%s5 + $0x124] sm:$0xf]
        %v4207 = vld [vmem:[%s5 + $0x128] sm:$0xf]
        %v4208 = vld [vmem:[%s5 + $0x12c] sm:$0xf]
        %v4209 = vld [vmem:[%s5 + $0x130] sm:$0xf]
        %v4210 = vld [vmem:[%s5 + $0x134] sm:$0xf]
        %v4211 = vld [vmem:[%s5 + $0x138] sm:$0xf]
        %v4212 = vld [vmem:[%s5 + $0x13c] sm:$0xf]
        %v4213 = vld [vmem:[%s5 + $0x140] sm:$0xf]
        %v4214 = vld [vmem:[%s5 + $0x144] sm:$0xf]
        %v4215 = vld [vmem:[%s5 + $0x148] sm:$0xf]
        %v4216 = vld [vmem:[%s5 + $0x14c] sm:$0xf]
        %v4217 = vld [vmem:[%s5 + $0x150] sm:$0xf]
        %v4218 = vld [vmem:[%s5 + $0x154] sm:$0xf]
        %v4219 = vld [vmem:[%s5 + $0x158] sm:$0xf]
        %v4220 = vld [vmem:[%s5 + $0x15c] sm:$0xf]
        %v4221 = vld [vmem:[%s5 + $0x160] sm:$0xf]
        %v4222 = vld [vmem:[%s5 + $0x164] sm:$0xf]
        %v4223 = vld [vmem:[%s5 + $0x168] sm:$0xf]
        %v4224 = vld [vmem:[%s5 + $0x16c] sm:$0xf]
        %v4225 = vld [vmem:[%s5 + $0x170] sm:$0xf]
        %v4226 = vld [vmem:[%s5 + $0x174] sm:$0xf]
        %v4227 = vld [vmem:[%s5 + $0x178] sm:$0xf]
        %v4228 = vld [vmem:[%s5 + $0x17c] sm:$0xf]
        %v4229 = vld [vmem:[%s5 + $0x180] sm:$0xf]
        %v4230 = vld [vmem:[%s5 + $0x184] sm:$0xf]
        %v4231 = vld [vmem:[%s5 + $0x188] sm:$0xf]
        %v4232 = vld [vmem:[%s5 + $0x18c] sm:$0xf]
        %v4233 = vld [vmem:[%s5 + $0x190] sm:$0xf]
        %v4234 = vld [vmem:[%s5 + $0x194] sm:$0xf]
        %v4235 = vld [vmem:[%s5 + $0x198] sm:$0xf]
        %v4236 = vld [vmem:[%s5 + $0x19c] sm:$0xf]
        %v4237 = vld [vmem:[%s5 + $0x1a0] sm:$0xf]
        %v4238 = vld [vmem:[%s5 + $0x1a4] sm:$0xf]
        %v4239 = vld [vmem:[%s5 + $0x1a8] sm:$0xf]
        %v4240 = vld [vmem:[%s5 + $0x1ac] sm:$0xf]
        %v4241 = vld [vmem:[%s5 + $0x1b0] sm:$0xf]
        %v4242 = vld [vmem:[%s5 + $0x1b4] sm:$0xf]
        %v4243 = vld [vmem:[%s5 + $0x1b8] sm:$0xf]
        %v4244 = vld [vmem:[%s5 + $0x1bc] sm:$0xf]
        %v4245 = vld [vmem:[%s5 + $0x1c0] sm:$0xf]
        %v4246 = vld [vmem:[%s5 + $0x1c4] sm:$0xf]
        %v4247 = vld [vmem:[%s5 + $0x1c8] sm:$0xf]
        %v4248 = vld [vmem:[%s5 + $0x1cc] sm:$0xf]
        %v4249 = vld [vmem:[%s5 + $0x1d0] sm:$0xf]
        %v4250 = vld [vmem:[%s5 + $0x1d4] sm:$0xf]
        %v4251 = vld [vmem:[%s5 + $0x1d8] sm:$0xf]
        %v4252 = vld [vmem:[%s5 + $0x1dc] sm:$0xf]
        %v4253 = vld [vmem:[%s5 + $0x1e0] sm:$0xf]
        %v4254 = vld [vmem:[%s5 + $0x1e4] sm:$0xf]
        %v4255 = vld [vmem:[%s5 + $0x1e8] sm:$0xf]
        %v4256 = vld [vmem:[%s5 + $0x1ec] sm:$0xf]
        %v4257 = vld [vmem:[%s5 + $0x1f0] sm:$0xf]
        %v4258 = vld [vmem:[%s5 + $0x1f4] sm:$0xf]
        %v4259 = vld [vmem:[%s5 + $0x1f8] sm:$0xf]
        %v4260 = vld [vmem:[%s5 + $0x1fc] sm:$0xf]
        %v4261 = vld [vmem:[%s5 + $0x200] sm:$0xf]
        %v4262 = vld [vmem:[%s5 + $0x204] sm:$0xf]
        %v4263 = vld [vmem:[%s5 + $0x208] sm:$0xf]
        %v4264 = vld [vmem:[%s5 + $0x20c] sm:$0xf]
        %v4265 = vld [vmem:[%s5 + $0x210] sm:$0xf]
        %v4266 = vld [vmem:[%s5 + $0x214] sm:$0xf]
        %v4267 = vld [vmem:[%s5 + $0x218] sm:$0xf]
        %v4268 = vld [vmem:[%s5 + $0x21c] sm:$0xf]
        %v4269 = vld [vmem:[%s5 + $0x220] sm:$0xf]
        %v4270 = vld [vmem:[%s5 + $0x224] sm:$0xf]
        %v4271 = vld [vmem:[%s5 + $0x228] sm:$0xf]
        %v4272 = vld [vmem:[%s5 + $0x22c] sm:$0xf]
        %v4273 = vld [vmem:[%s5 + $0x230] sm:$0xf]
        %v4274 = vld [vmem:[%s5 + $0x234] sm:$0xf]
        %v4275 = vld [vmem:[%s5 + $0x238] sm:$0xf]
        %v4276 = vld [vmem:[%s5 + $0x23c] sm:$0xf]
        %v4277 = vld [vmem:[%s5 + $0x240] sm:$0xf]
        %v4278 = vld [vmem:[%s5 + $0x244] sm:$0xf]
        %v4279 = vld [vmem:[%s5 + $0x248] sm:$0xf]
        %v4280 = vld [vmem:[%s5 + $0x24c] sm:$0xf]
        %v4281 = vld [vmem:[%s5 + $0x250] sm:$0xf]
        %v4282 = vld [vmem:[%s5 + $0x254] sm:$0xf]
        %v4283 = vld [vmem:[%s5 + $0x258] sm:$0xf]
        %v4284 = vld [vmem:[%s5 + $0x25c] sm:$0xf]
        %v4285 = vld [vmem:[%s5 + $0x260] sm:$0xf]
        %v4286 = vld [vmem:[%s5 + $0x264] sm:$0xf]
        %v4287 = vld [vmem:[%s5 + $0x268] sm:$0xf]
        %v4288 = vld [vmem:[%s5 + $0x26c] sm:$0xf]
        %v4289 = vld [vmem:[%s5 + $0x270] sm:$0xf]
        %v4290 = vld [vmem:[%s5 + $0x274] sm:$0xf]
        %v4291 = vld [vmem:[%s5 + $0x278] sm:$0xf]
        %v4292 = vld [vmem:[%s5 + $0x27c] sm:$0xf]
        %v4293 = vld [vmem:[%s5 + $0x280] sm:$0xf]
        %v4294 = vld [vmem:[%s5 + $0x284] sm:$0xf]
        %v4295 = vld [vmem:[%s5 + $0x288] sm:$0xf]
        %v4296 = vld [vmem:[%s5 + $0x28c] sm:$0xf]
        %v4297 = vld [vmem:[%s5 + $0x290] sm:$0xf]
        %v4298 = vld [vmem:[%s5 + $0x294] sm:$0xf]
        %v4299 = vld [vmem:[%s5 + $0x298] sm:$0xf]
        %v4300 = vld [vmem:[%s5 + $0x29c] sm:$0xf]
        %v4301 = vld [vmem:[%s5 + $0x2a0] sm:$0xf]
        %v4302 = vld [vmem:[%s5 + $0x2a4] sm:$0xf]
        %v4303 = vld [vmem:[%s5 + $0x2a8] sm:$0xf]
        %v4304 = vld [vmem:[%s5 + $0x2ac] sm:$0xf]
        %v4305 = vld [vmem:[%s5 + $0x2b0] sm:$0xf]
        %v4306 = vld [vmem:[%s5 + $0x2b4] sm:$0xf]
        %v4307 = vld [vmem:[%s5 + $0x2b8] sm:$0xf]
        %v4308 = vld [vmem:[%s5 + $0x2bc] sm:$0xf]
        %v4309 = vld [vmem:[%s5 + $0x2c0] sm:$0xf]
        %v4310 = vld [vmem:[%s5 + $0x2c4] sm:$0xf]
        %v4311 = vld [vmem:[%s5 + $0x2c8] sm:$0xf]
        %v4312 = vld [vmem:[%s5 + $0x2cc] sm:$0xf]
        %v4313 = vld [vmem:[%s5 + $0x2d0] sm:$0xf]
        %v4314 = vld [vmem:[%s5 + $0x2d4] sm:$0xf]
        %v4315 = vld [vmem:[%s5 + $0x2d8] sm:$0xf]
        %v4316 = vld [vmem:[%s5 + $0x2dc] sm:$0xf]
        %v4317 = vld [vmem:[%s5 + $0x2e0] sm:$0xf]
        %v4318 = vld [vmem:[%s5 + $0x2e4] sm:$0xf]
        %v4319 = vld [vmem:[%s5 + $0x2e8] sm:$0xf]
        %v4320 = vld [vmem:[%s5 + $0x2ec] sm:$0xf]
        %v4321 = vld [vmem:[%s5 + $0x2f0] sm:$0xf]
        %v4322 = vld [vmem:[%s5 + $0x2f4] sm:$0xf]
        %v4323 = vld [vmem:[%s5 + $0x2f8] sm:$0xf]
        %v4324 = vld [vmem:[%s5 + $0x2fc] sm:$0xf]
        %v4325 = vld [vmem:[%s5 + $0x300] sm:$0xf]
        %v4326 = vld [vmem:[%s5 + $0x304] sm:$0xf]
        %v4327 = vld [vmem:[%s5 + $0x308] sm:$0xf]
        %v4328 = vld [vmem:[%s5 + $0x30c] sm:$0xf]
        %v4329 = vld [vmem:[%s5 + $0x310] sm:$0xf]
        %v4330 = vld [vmem:[%s5 + $0x314] sm:$0xf]
        %v4331 = vld [vmem:[%s5 + $0x318] sm:$0xf]
        %v4332 = vld [vmem:[%s5 + $0x31c] sm:$0xf]
        %v4333 = vld [vmem:[%s5 + $0x320] sm:$0xf]
        %v4334 = vld [vmem:[%s5 + $0x324] sm:$0xf]
        %v4335 = vld [vmem:[%s5 + $0x328] sm:$0xf]
        %v4336 = vld [vmem:[%s5 + $0x32c] sm:$0xf]
        %v4337 = vld [vmem:[%s5 + $0x330] sm:$0xf]
        %v4338 = vld [vmem:[%s5 + $0x334] sm:$0xf]
        %v4339 = vld [vmem:[%s5 + $0x338] sm:$0xf]
        %v4340 = vld [vmem:[%s5 + $0x33c] sm:$0xf]
        %v4341 = vld [vmem:[%s5 + $0x340] sm:$0xf]
        %v4342 = vld [vmem:[%s5 + $0x344] sm:$0xf]
        %v4343 = vld [vmem:[%s5 + $0x348] sm:$0xf]
        %v4344 = vld [vmem:[%s5 + $0x34c] sm:$0xf]
        %v4345 = vld [vmem:[%s5 + $0x350] sm:$0xf]
        %v4346 = vld [vmem:[%s5 + $0x354] sm:$0xf]
        %v4347 = vld [vmem:[%s5 + $0x358] sm:$0xf]
        %v4348 = vld [vmem:[%s5 + $0x35c] sm:$0xf]
        %v4349 = vld [vmem:[%s5 + $0x360] sm:$0xf]
        %v4350 = vld [vmem:[%s5 + $0x364] sm:$0xf]
        %v4351 = vld [vmem:[%s5 + $0x368] sm:$0xf]
        %v4352 = vld [vmem:[%s5 + $0x36c] sm:$0xf]
        %v4353 = vld [vmem:[%s5 + $0x370] sm:$0xf]
        %v4354 = vld [vmem:[%s5 + $0x374] sm:$0xf]
        %v4355 = vld [vmem:[%s5 + $0x378] sm:$0xf]
        %v4356 = vld [vmem:[%s5 + $0x37c] sm:$0xf]
        %v4357 = vld [vmem:[%s5 + $0x380] sm:$0xf]
        %v4358 = vld [vmem:[%s5 + $0x384] sm:$0xf]
        %v4359 = vld [vmem:[%s5 + $0x388] sm:$0xf]
        %v4360 = vld [vmem:[%s5 + $0x38c] sm:$0xf]
        %v4361 = vld [vmem:[%s5 + $0x390] sm:$0xf]
        %v4362 = vld [vmem:[%s5 + $0x394] sm:$0xf]
        %v4363 = vld [vmem:[%s5 + $0x398] sm:$0xf]
        %v4364 = vld [vmem:[%s5 + $0x39c] sm:$0xf]
        %v4365 = vld [vmem:[%s5 + $0x3a0] sm:$0xf]
        %v4366 = vld [vmem:[%s5 + $0x3a4] sm:$0xf]
        %v4367 = vld [vmem:[%s5 + $0x3a8] sm:$0xf]
        %v4368 = vld [vmem:[%s5 + $0x3ac] sm:$0xf]
        %v4369 = vld [vmem:[%s5 + $0x3b0] sm:$0xf]
        %v4370 = vld [vmem:[%s5 + $0x3b4] sm:$0xf]
        %v4371 = vld [vmem:[%s5 + $0x3b8] sm:$0xf]
        %v4372 = vld [vmem:[%s5 + $0x3bc] sm:$0xf]
        %v4373 = vld [vmem:[%s5 + $0x3c0] sm:$0xf]
        %v4374 = vld [vmem:[%s5 + $0x3c4] sm:$0xf]
        %v4375 = vld [vmem:[%s5 + $0x3c8] sm:$0xf]
        %v4376 = vld [vmem:[%s5 + $0x3cc] sm:$0xf]
        %v4377 = vld [vmem:[%s5 + $0x3d0] sm:$0xf]
        %v4378 = vld [vmem:[%s5 + $0x3d4] sm:$0xf]
        %v4379 = vld [vmem:[%s5 + $0x3d8] sm:$0xf]
        %v4380 = vld [vmem:[%s5 + $0x3dc] sm:$0xf]
        %v4381 = vld [vmem:[%s5 + $0x3e0] sm:$0xf]
        %v4382 = vld [vmem:[%s5 + $0x3e4] sm:$0xf]
        %v4383 = vld [vmem:[%s5 + $0x3e8] sm:$0xf]
        %v4384 = vld [vmem:[%s5 + $0x3ec] sm:$0xf]
        %v4385 = vld [vmem:[%s5 + $0x3f0] sm:$0xf]
        %v4386 = vld [vmem:[%s5 + $0x3f4] sm:$0xf]
        %v4387 = vld [vmem:[%s5 + $0x3f8] sm:$0xf]
        %v4388 = vld [vmem:[%s5 + $0x3fc] sm:$0xf]
        %v4389 = vld [vmem:[%s6] sm:$0x1]
        %v4391 = vperm.slane %v4389, 0
        %v4649 = vunpack.c.l.b16 %v4133
        %v4650 = vunpack.c.l.b16 %v4134
        %v4651 = vunpack.c.l.b16 %v4135
        %v4652 = vunpack.c.l.b16 %v4136
        %v4653 = vunpack.c.l.b16 %v4137
        %v4654 = vunpack.c.l.b16 %v4138
        %v4655 = vunpack.c.l.b16 %v4139
        %v4656 = vunpack.c.l.b16 %v4140
        %v4657 = vunpack.c.l.b16 %v4141
        %v4658 = vunpack.c.l.b16 %v4142
        %v4659 = vunpack.c.l.b16 %v4143
        %v4660 = vunpack.c.l.b16 %v4144
        %v4661 = vunpack.c.l.b16 %v4145
        %v4662 = vunpack.c.l.b16 %v4146
        %v4663 = vunpack.c.l.b16 %v4147
        %v4664 = vunpack.c.l.b16 %v4148
        %v4665 = vunpack.c.l.b16 %v4149
        %v4666 = vunpack.c.l.b16 %v4150
        %v4667 = vunpack.c.l.b16 %v4151
        %v4668 = vunpack.c.l.b16 %v4152
        %v4669 = vunpack.c.l.b16 %v4153
        %v4670 = vunpack.c.l.b16 %v4154
        %v4671 = vunpack.c.l.b16 %v4155
        %v4672 = vunpack.c.l.b16 %v4156
        %v4673 = vunpack.c.l.b16 %v4157
        %v4674 = vunpack.c.l.b16 %v4158
        %v4675 = vunpack.c.l.b16 %v4159
        %v4676 = vunpack.c.l.b16 %v4160
        %v4677 = vunpack.c.l.b16 %v4161
        %v4678 = vunpack.c.l.b16 %v4162
        %v4679 = vunpack.c.l.b16 %v4163
        %v4680 = vunpack.c.l.b16 %v4164
        %v4681 = vunpack.c.l.b16 %v4165
        %v4682 = vunpack.c.l.b16 %v4166
        %v4683 = vunpack.c.l.b16 %v4167
        %v4684 = vunpack.c.l.b16 %v4168
        %v4685 = vunpack.c.l.b16 %v4169
        %v4686 = vunpack.c.l.b16 %v4170
        %v4687 = vunpack.c.l.b16 %v4171
        %v4688 = vunpack.c.l.b16 %v4172
        %v4689 = vunpack.c.l.b16 %v4173
        %v4690 = vunpack.c.l.b16 %v4174
        %v4691 = vunpack.c.l.b16 %v4175
        %v4692 = vunpack.c.l.b16 %v4176
        %v4693 = vunpack.c.l.b16 %v4177
        %v4694 = vunpack.c.l.b16 %v4178
        %v4695 = vunpack.c.l.b16 %v4179
        %v4696 = vunpack.c.l.b16 %v4180
        %v4697 = vunpack.c.l.b16 %v4181
        %v4698 = vunpack.c.l.b16 %v4182
        %v4699 = vunpack.c.l.b16 %v4183
        %v4700 = vunpack.c.l.b16 %v4184
        %v4701 = vunpack.c.l.b16 %v4185
        %v4702 = vunpack.c.l.b16 %v4186
        %v4703 = vunpack.c.l.b16 %v4187
        %v4704 = vunpack.c.l.b16 %v4188
        %v4705 = vunpack.c.l.b16 %v4189
        %v4706 = vunpack.c.l.b16 %v4190
        %v4707 = vunpack.c.l.b16 %v4191
        %v4708 = vunpack.c.l.b16 %v4192
        %v4709 = vunpack.c.l.b16 %v4193
        %v4710 = vunpack.c.l.b16 %v4194
        %v4711 = vunpack.c.l.b16 %v4195
        %v4712 = vunpack.c.l.b16 %v4196
        %v4713 = vunpack.c.l.b16 %v4197
        %v4714 = vunpack.c.l.b16 %v4198
        %v4715 = vunpack.c.l.b16 %v4199
        %v4716 = vunpack.c.l.b16 %v4200
        %v4717 = vunpack.c.l.b16 %v4201
        %v4718 = vunpack.c.l.b16 %v4202
        %v4719 = vunpack.c.l.b16 %v4203
        %v4720 = vunpack.c.l.b16 %v4204
        %v4721 = vunpack.c.l.b16 %v4205
        %v4722 = vunpack.c.l.b16 %v4206
        %v4723 = vunpack.c.l.b16 %v4207
        %v4724 = vunpack.c.l.b16 %v4208
        %v4725 = vunpack.c.l.b16 %v4209
        %v4726 = vunpack.c.l.b16 %v4210
        %v4727 = vunpack.c.l.b16 %v4211
        %v4728 = vunpack.c.l.b16 %v4212
        %v4729 = vunpack.c.l.b16 %v4213
        %v4730 = vunpack.c.l.b16 %v4214
        %v4731 = vunpack.c.l.b16 %v4215
        %v4732 = vunpack.c.l.b16 %v4216
        %v4733 = vunpack.c.l.b16 %v4217
        %v4734 = vunpack.c.l.b16 %v4218
        %v4735 = vunpack.c.l.b16 %v4219
        %v4736 = vunpack.c.l.b16 %v4220
        %v4737 = vunpack.c.l.b16 %v4221
        %v4738 = vunpack.c.l.b16 %v4222
        %v4739 = vunpack.c.l.b16 %v4223
        %v4740 = vunpack.c.l.b16 %v4224
        %v4741 = vunpack.c.l.b16 %v4225
        %v4742 = vunpack.c.l.b16 %v4226
        %v4743 = vunpack.c.l.b16 %v4227
        %v4744 = vunpack.c.l.b16 %v4228
        %v4745 = vunpack.c.l.b16 %v4229
        %v4746 = vunpack.c.l.b16 %v4230
        %v4747 = vunpack.c.l.b16 %v4231
        %v4748 = vunpack.c.l.b16 %v4232
        %v4749 = vunpack.c.l.b16 %v4233
        %v4750 = vunpack.c.l.b16 %v4234
        %v4751 = vunpack.c.l.b16 %v4235
        %v4752 = vunpack.c.l.b16 %v4236
        %v4753 = vunpack.c.l.b16 %v4237
        %v4754 = vunpack.c.l.b16 %v4238
        %v4755 = vunpack.c.l.b16 %v4239
        %v4756 = vunpack.c.l.b16 %v4240
        %v4757 = vunpack.c.l.b16 %v4241
        %v4758 = vunpack.c.l.b16 %v4242
        %v4759 = vunpack.c.l.b16 %v4243
        %v4760 = vunpack.c.l.b16 %v4244
        %v4761 = vunpack.c.l.b16 %v4245
        %v4762 = vunpack.c.l.b16 %v4246
        %v4763 = vunpack.c.l.b16 %v4247
        %v4764 = vunpack.c.l.b16 %v4248
        %v4765 = vunpack.c.l.b16 %v4249
        %v4766 = vunpack.c.l.b16 %v4250
        %v4767 = vunpack.c.l.b16 %v4251
        %v4768 = vunpack.c.l.b16 %v4252
        %v4769 = vunpack.c.l.b16 %v4253
        %v4770 = vunpack.c.l.b16 %v4254
        %v4771 = vunpack.c.l.b16 %v4255
        %v4772 = vunpack.c.l.b16 %v4256
        %v4773 = vunpack.c.l.b16 %v4257
        %v4774 = vunpack.c.l.b16 %v4258
        %v4775 = vunpack.c.l.b16 %v4259
        %v4776 = vunpack.c.l.b16 %v4260
        %v4777 = vunpack.c.l.b16 %v4261
        %v4778 = vunpack.c.l.b16 %v4262
        %v4779 = vunpack.c.l.b16 %v4263
        %v4780 = vunpack.c.l.b16 %v4264
        %v4781 = vunpack.c.l.b16 %v4265
        %v4782 = vunpack.c.l.b16 %v4266
        %v4783 = vunpack.c.l.b16 %v4267
        %v4784 = vunpack.c.l.b16 %v4268
        %v4785 = vunpack.c.l.b16 %v4269
        %v4786 = vunpack.c.l.b16 %v4270
        %v4787 = vunpack.c.l.b16 %v4271
        %v4788 = vunpack.c.l.b16 %v4272
        %v4789 = vunpack.c.l.b16 %v4273
        %v4790 = vunpack.c.l.b16 %v4274
        %v4791 = vunpack.c.l.b16 %v4275
        %v4792 = vunpack.c.l.b16 %v4276
        %v4793 = vunpack.c.l.b16 %v4277
        %v4794 = vunpack.c.l.b16 %v4278
        %v4795 = vunpack.c.l.b16 %v4279
        %v4796 = vunpack.c.l.b16 %v4280
        %v4797 = vunpack.c.l.b16 %v4281
        %v4798 = vunpack.c.l.b16 %v4282
        %v4799 = vunpack.c.l.b16 %v4283
        %v4800 = vunpack.c.l.b16 %v4284
        %v4801 = vunpack.c.l.b16 %v4285
        %v4802 = vunpack.c.l.b16 %v4286
        %v4803 = vunpack.c.l.b16 %v4287
        %v4804 = vunpack.c.l.b16 %v4288
        %v4805 = vunpack.c.l.b16 %v4289
        %v4806 = vunpack.c.l.b16 %v4290
        %v4807 = vunpack.c.l.b16 %v4291
        %v4808 = vunpack.c.l.b16 %v4292
        %v4809 = vunpack.c.l.b16 %v4293
        %v4810 = vunpack.c.l.b16 %v4294
        %v4811 = vunpack.c.l.b16 %v4295
        %v4812 = vunpack.c.l.b16 %v4296
        %v4813 = vunpack.c.l.b16 %v4297
        %v4814 = vunpack.c.l.b16 %v4298
        %v4815 = vunpack.c.l.b16 %v4299
        %v4816 = vunpack.c.l.b16 %v4300
        %v4817 = vunpack.c.l.b16 %v4301
        %v4818 = vunpack.c.l.b16 %v4302
        %v4819 = vunpack.c.l.b16 %v4303
        %v4820 = vunpack.c.l.b16 %v4304
        %v4821 = vunpack.c.l.b16 %v4305
        %v4822 = vunpack.c.l.b16 %v4306
        %v4823 = vunpack.c.l.b16 %v4307
        %v4824 = vunpack.c.l.b16 %v4308
        %v4825 = vunpack.c.l.b16 %v4309
        %v4826 = vunpack.c.l.b16 %v4310
        %v4827 = vunpack.c.l.b16 %v4311
        %v4828 = vunpack.c.l.b16 %v4312
        %v4829 = vunpack.c.l.b16 %v4313
        %v4830 = vunpack.c.l.b16 %v4314
        %v4831 = vunpack.c.l.b16 %v4315
        %v4832 = vunpack.c.l.b16 %v4316
        %v4833 = vunpack.c.l.b16 %v4317
        %v4834 = vunpack.c.l.b16 %v4318
        %v4835 = vunpack.c.l.b16 %v4319
        %v4836 = vunpack.c.l.b16 %v4320
        %v4837 = vunpack.c.l.b16 %v4321
        %v4838 = vunpack.c.l.b16 %v4322
        %v4839 = vunpack.c.l.b16 %v4323
        %v4840 = vunpack.c.l.b16 %v4324
        %v4841 = vunpack.c.l.b16 %v4325
        %v4842 = vunpack.c.l.b16 %v4326
        %v4843 = vunpack.c.l.b16 %v4327
        %v4844 = vunpack.c.l.b16 %v4328
        %v4845 = vunpack.c.l.b16 %v4329
        %v4846 = vunpack.c.l.b16 %v4330
        %v4847 = vunpack.c.l.b16 %v4331
        %v4848 = vunpack.c.l.b16 %v4332
        %v4849 = vunpack.c.l.b16 %v4333
        %v4850 = vunpack.c.l.b16 %v4334
        %v4851 = vunpack.c.l.b16 %v4335
        %v4852 = vunpack.c.l.b16 %v4336
        %v4853 = vunpack.c.l.b16 %v4337
        %v4854 = vunpack.c.l.b16 %v4338
        %v4855 = vunpack.c.l.b16 %v4339
        %v4856 = vunpack.c.l.b16 %v4340
        %v4857 = vunpack.c.l.b16 %v4341
        %v4858 = vunpack.c.l.b16 %v4342
        %v4859 = vunpack.c.l.b16 %v4343
        %v4860 = vunpack.c.l.b16 %v4344
        %v4861 = vunpack.c.l.b16 %v4345
        %v4862 = vunpack.c.l.b16 %v4346
        %v4863 = vunpack.c.l.b16 %v4347
        %v4864 = vunpack.c.l.b16 %v4348
        %v4865 = vunpack.c.l.b16 %v4349
        %v4866 = vunpack.c.l.b16 %v4350
        %v4867 = vunpack.c.l.b16 %v4351
        %v4868 = vunpack.c.l.b16 %v4352
        %v4869 = vunpack.c.l.b16 %v4353
        %v4870 = vunpack.c.l.b16 %v4354
        %v4871 = vunpack.c.l.b16 %v4355
        %v4872 = vunpack.c.l.b16 %v4356
        %v4873 = vunpack.c.l.b16 %v4357
        %v4874 = vunpack.c.l.b16 %v4358
        %v4875 = vunpack.c.l.b16 %v4359
        %v4876 = vunpack.c.l.b16 %v4360
        %v4877 = vunpack.c.l.b16 %v4361
        %v4878 = vunpack.c.l.b16 %v4362
        %v4879 = vunpack.c.l.b16 %v4363
        %v4880 = vunpack.c.l.b16 %v4364
        %v4881 = vunpack.c.l.b16 %v4365
        %v4882 = vunpack.c.l.b16 %v4366
        %v4883 = vunpack.c.l.b16 %v4367
        %v4884 = vunpack.c.l.b16 %v4368
        %v4885 = vunpack.c.l.b16 %v4369
        %v4886 = vunpack.c.l.b16 %v4370
        %v4887 = vunpack.c.l.b16 %v4371
        %v4888 = vunpack.c.l.b16 %v4372
        %v4889 = vunpack.c.l.b16 %v4373
        %v4890 = vunpack.c.l.b16 %v4374
        %v4891 = vunpack.c.l.b16 %v4375
        %v4892 = vunpack.c.l.b16 %v4376
        %v4893 = vunpack.c.l.b16 %v4377
        %v4894 = vunpack.c.l.b16 %v4378
        %v4895 = vunpack.c.l.b16 %v4379
        %v4896 = vunpack.c.l.b16 %v4380
        %v4897 = vunpack.c.l.b16 %v4381
        %v4898 = vunpack.c.l.b16 %v4382
        %v4899 = vunpack.c.l.b16 %v4383
        %v4900 = vunpack.c.l.b16 %v4384
        %v4901 = vunpack.c.l.b16 %v4385
        %v4902 = vunpack.c.l.b16 %v4386
        %v4903 = vunpack.c.l.b16 %v4387
        %v4904 = vunpack.c.l.b16 %v4388
        %v4905 = vpack.c.b16 %v4650, %v4649
        %v4906 = vpack.c.b16 %v4652, %v4651
        %v4907 = vpack.c.b16 %v4654, %v4653
        %v4908 = vpack.c.b16 %v4656, %v4655
        %v4909 = vpack.c.b16 %v4658, %v4657
        %v4910 = vpack.c.b16 %v4660, %v4659
        %v4911 = vpack.c.b16 %v4662, %v4661
        %v4912 = vpack.c.b16 %v4664, %v4663
        %v4913 = vpack.c.b16 %v4666, %v4665
        %v4914 = vpack.c.b16 %v4668, %v4667
        %v4915 = vpack.c.b16 %v4670, %v4669
        %v4916 = vpack.c.b16 %v4672, %v4671
        %v4917 = vpack.c.b16 %v4674, %v4673
        %v4918 = vpack.c.b16 %v4676, %v4675
        %v4919 = vpack.c.b16 %v4678, %v4677
        %v4920 = vpack.c.b16 %v4680, %v4679
        %v4921 = vpack.c.b16 %v4682, %v4681
        %v4922 = vpack.c.b16 %v4684, %v4683
        %v4923 = vpack.c.b16 %v4686, %v4685
        %v4924 = vpack.c.b16 %v4688, %v4687
        %v4925 = vpack.c.b16 %v4690, %v4689
        %v4926 = vpack.c.b16 %v4692, %v4691
        %v4927 = vpack.c.b16 %v4694, %v4693
        %v4928 = vpack.c.b16 %v4696, %v4695
        %v4929 = vpack.c.b16 %v4698, %v4697
        %v4930 = vpack.c.b16 %v4700, %v4699
        %v4931 = vpack.c.b16 %v4702, %v4701
        %v4932 = vpack.c.b16 %v4704, %v4703
        %v4933 = vpack.c.b16 %v4706, %v4705
        %v4934 = vpack.c.b16 %v4708, %v4707
        %v4935 = vpack.c.b16 %v4710, %v4709
        %v4936 = vpack.c.b16 %v4712, %v4711
        %v4937 = vpack.c.b16 %v4714, %v4713
        %v4938 = vpack.c.b16 %v4716, %v4715
        %v4939 = vpack.c.b16 %v4718, %v4717
        %v4940 = vpack.c.b16 %v4720, %v4719
        %v4941 = vpack.c.b16 %v4722, %v4721
        %v4942 = vpack.c.b16 %v4724, %v4723
        %v4943 = vpack.c.b16 %v4726, %v4725
        %v4944 = vpack.c.b16 %v4728, %v4727
        %v4945 = vpack.c.b16 %v4730, %v4729
        %v4946 = vpack.c.b16 %v4732, %v4731
        %v4947 = vpack.c.b16 %v4734, %v4733
        %v4948 = vpack.c.b16 %v4736, %v4735
        %v4949 = vpack.c.b16 %v4738, %v4737
        %v4950 = vpack.c.b16 %v4740, %v4739
        %v4951 = vpack.c.b16 %v4742, %v4741
        %v4952 = vpack.c.b16 %v4744, %v4743
        %v4953 = vpack.c.b16 %v4746, %v4745
        %v4954 = vpack.c.b16 %v4748, %v4747
        %v4955 = vpack.c.b16 %v4750, %v4749
        %v4956 = vpack.c.b16 %v4752, %v4751
        %v4957 = vpack.c.b16 %v4754, %v4753
        %v4958 = vpack.c.b16 %v4756, %v4755
        %v4959 = vpack.c.b16 %v4758, %v4757
        %v4960 = vpack.c.b16 %v4760, %v4759
        %v4961 = vpack.c.b16 %v4762, %v4761
        %v4962 = vpack.c.b16 %v4764, %v4763
        %v4963 = vpack.c.b16 %v4766, %v4765
        %v4964 = vpack.c.b16 %v4768, %v4767
        %v4965 = vpack.c.b16 %v4770, %v4769
        %v4966 = vpack.c.b16 %v4772, %v4771
        %v4967 = vpack.c.b16 %v4774, %v4773
        %v4968 = vpack.c.b16 %v4776, %v4775
        %v4969 = vpack.c.b16 %v4778, %v4777
        %v4970 = vpack.c.b16 %v4780, %v4779
        %v4971 = vpack.c.b16 %v4782, %v4781
        %v4972 = vpack.c.b16 %v4784, %v4783
        %v4973 = vpack.c.b16 %v4786, %v4785
        %v4974 = vpack.c.b16 %v4788, %v4787
        %v4975 = vpack.c.b16 %v4790, %v4789
        %v4976 = vpack.c.b16 %v4792, %v4791
        %v4977 = vpack.c.b16 %v4794, %v4793
        %v4978 = vpack.c.b16 %v4796, %v4795
        %v4979 = vpack.c.b16 %v4798, %v4797
        %v4980 = vpack.c.b16 %v4800, %v4799
        %v4981 = vpack.c.b16 %v4802, %v4801
        %v4982 = vpack.c.b16 %v4804, %v4803
        %v4983 = vpack.c.b16 %v4806, %v4805
        %v4984 = vpack.c.b16 %v4808, %v4807
        %v4985 = vpack.c.b16 %v4810, %v4809
        %v4986 = vpack.c.b16 %v4812, %v4811
        %v4987 = vpack.c.b16 %v4814, %v4813
        %v4988 = vpack.c.b16 %v4816, %v4815
        %v4989 = vpack.c.b16 %v4818, %v4817
        %v4990 = vpack.c.b16 %v4820, %v4819
        %v4991 = vpack.c.b16 %v4822, %v4821
        %v4992 = vpack.c.b16 %v4824, %v4823
        %v4993 = vpack.c.b16 %v4826, %v4825
        %v4994 = vpack.c.b16 %v4828, %v4827
        %v4995 = vpack.c.b16 %v4830, %v4829
        %v4996 = vpack.c.b16 %v4832, %v4831
        %v4997 = vpack.c.b16 %v4834, %v4833
        %v4998 = vpack.c.b16 %v4836, %v4835
        %v4999 = vpack.c.b16 %v4838, %v4837
        %v5000 = vpack.c.b16 %v4840, %v4839
        %v5001 = vpack.c.b16 %v4842, %v4841
        %v5002 = vpack.c.b16 %v4844, %v4843
        %v5003 = vpack.c.b16 %v4846, %v4845
        %v5004 = vpack.c.b16 %v4848, %v4847
        %v5005 = vpack.c.b16 %v4850, %v4849
        %v5006 = vpack.c.b16 %v4852, %v4851
        %v5007 = vpack.c.b16 %v4854, %v4853
        %v5008 = vpack.c.b16 %v4856, %v4855
        %v5009 = vpack.c.b16 %v4858, %v4857
        %v5010 = vpack.c.b16 %v4860, %v4859
        %v5011 = vpack.c.b16 %v4862, %v4861
        %v5012 = vpack.c.b16 %v4864, %v4863
        %v5013 = vpack.c.b16 %v4866, %v4865
        %v5014 = vpack.c.b16 %v4868, %v4867
        %v5015 = vpack.c.b16 %v4870, %v4869
        %v5016 = vpack.c.b16 %v4872, %v4871
        %v5017 = vpack.c.b16 %v4874, %v4873
        %v5018 = vpack.c.b16 %v4876, %v4875
        %v5019 = vpack.c.b16 %v4878, %v4877
        %v5020 = vpack.c.b16 %v4880, %v4879
        %v5021 = vpack.c.b16 %v4882, %v4881
        %v5022 = vpack.c.b16 %v4884, %v4883
        %v5023 = vpack.c.b16 %v4886, %v4885
        %v5024 = vpack.c.b16 %v4888, %v4887
        %v5025 = vpack.c.b16 %v4890, %v4889
        %v5026 = vpack.c.b16 %v4892, %v4891
        %v5027 = vpack.c.b16 %v4894, %v4893
        %v5028 = vpack.c.b16 %v4896, %v4895
        %v5029 = vpack.c.b16 %v4898, %v4897
        %v5030 = vpack.c.b16 %v4900, %v4899
        %v5031 = vpack.c.b16 %v4902, %v4901
        %v5032 = vpack.c.b16 %v4904, %v4903
        %5161 = vmatpush.bf16.msra.mxu0 %v4912
        %5162 = vmatpush.bf16.msra.mxu0 %v4911
        %5163 = vmatpush.bf16.msra.mxu0 %v4910
        %5164 = vmatpush.bf16.msra.mxu0 %v4909
        %5165 = vmatpush.bf16.msra.mxu0 %v4908
        %5166 = vmatpush.bf16.msra.mxu0 %v4907
        %5167 = vmatpush.bf16.msra.mxu0 %v4906
        %5168 = vmatpush.bf16.msra.mxu0 %v4905
        %5169 = vmatmul.bf16.gmra.mxu0 %v4117
        %v5170 = vpop.f32.mrf.mxu0
        %v5171 = vadd.f32 %v4391, %v5170
        %v5172 = vpop.f32.mrf.mxu0
        %5173 = vdwg.mxu0
        %5174 = vmatpush.bf16.msra.mxu0 %v4920
        %5175 = vmatpush.bf16.msra.mxu0 %v4919
        %5176 = vmatpush.bf16.msra.mxu0 %v4918
        %5177 = vmatpush.bf16.msra.mxu0 %v4917
        %5178 = vmatpush.bf16.msra.mxu0 %v4916
        %5179 = vmatpush.bf16.msra.mxu0 %v4915
        %5180 = vmatpush.bf16.msra.mxu0 %v4914
        %5181 = vmatpush.bf16.msra.mxu0 %v4913
        %5182 = vmatmul.bf16.gmra.mxu0 %v4118
        %v5183 = vpop.f32.mrf.mxu0
        %v5184 = vadd.f32 %v5171, %v5183
        %v5185 = vpop.f32.mrf.mxu0
        %5186 = vdwg.mxu0
        %5187 = vmatpush.bf16.msra.mxu0 %v4928
        %5188 = vmatpush.bf16.msra.mxu0 %v4927
        %5189 = vmatpush.bf16.msra.mxu0 %v4926
        %5190 = vmatpush.bf16.msra.mxu0 %v4925
        %5191 = vmatpush.bf16.msra.mxu0 %v4924
        %5192 = vmatpush.bf16.msra.mxu0 %v4923
        %5193 = vmatpush.bf16.msra.mxu0 %v4922
        %5194 = vmatpush.bf16.msra.mxu0 %v4921
        %5195 = vmatmul.bf16.gmra.mxu0 %v4119
        %v5196 = vpop.f32.mrf.mxu0
        %v5197 = vadd.f32 %v5184, %v5196
        %v5198 = vpop.f32.mrf.mxu0
        %5199 = vdwg.mxu0
        %5200 = vmatpush.bf16.msra.mxu0 %v4936
        %5201 = vmatpush.bf16.msra.mxu0 %v4935
        %5202 = vmatpush.bf16.msra.mxu0 %v4934
        %5203 = vmatpush.bf16.msra.mxu0 %v4933
        %5204 = vmatpush.bf16.msra.mxu0 %v4932
        %5205 = vmatpush.bf16.msra.mxu0 %v4931
        %5206 = vmatpush.bf16.msra.mxu0 %v4930
        %5207 = vmatpush.bf16.msra.mxu0 %v4929
        %5208 = vmatmul.bf16.gmra.mxu0 %v4120
        %v5209 = vpop.f32.mrf.mxu0
        %v5210 = vadd.f32 %v5197, %v5209
        %v5211 = vpop.f32.mrf.mxu0
        %5212 = vdwg.mxu0
        %5213 = vmatpush.bf16.msra.mxu0 %v4944
        %5214 = vmatpush.bf16.msra.mxu0 %v4943
        %5215 = vmatpush.bf16.msra.mxu0 %v4942
        %5216 = vmatpush.bf16.msra.mxu0 %v4941
        %5217 = vmatpush.bf16.msra.mxu0 %v4940
        %5218 = vmatpush.bf16.msra.mxu0 %v4939
        %5219 = vmatpush.bf16.msra.mxu0 %v4938
        %5220 = vmatpush.bf16.msra.mxu0 %v4937
        %5221 = vmatmul.bf16.gmra.mxu0 %v4121
        %v5222 = vpop.f32.mrf.mxu0
        %v5223 = vadd.f32 %v5210, %v5222
        %v5224 = vpop.f32.mrf.mxu0
        %5225 = vdwg.mxu0
        %5226 = vmatpush.bf16.msra.mxu0 %v4952
        %5227 = vmatpush.bf16.msra.mxu0 %v4951
        %5228 = vmatpush.bf16.msra.mxu0 %v4950
        %5229 = vmatpush.bf16.msra.mxu0 %v4949
        %5230 = vmatpush.bf16.msra.mxu0 %v4948
        %5231 = vmatpush.bf16.msra.mxu0 %v4947
        %5232 = vmatpush.bf16.msra.mxu0 %v4946
        %5233 = vmatpush.bf16.msra.mxu0 %v4945
        %5234 = vmatmul.bf16.gmra.mxu0 %v4122
        %v5235 = vpop.f32.mrf.mxu0
        %v5236 = vadd.f32 %v5223, %v5235
        %v5237 = vpop.f32.mrf.mxu0
        %5238 = vdwg.mxu0
        %5239 = vmatpush.bf16.msra.mxu0 %v4960
        %5240 = vmatpush.bf16.msra.mxu0 %v4959
        %5241 = vmatpush.bf16.msra.mxu0 %v4958
        %5242 = vmatpush.bf16.msra.mxu0 %v4957
        %5243 = vmatpush.bf16.msra.mxu0 %v4956
        %5244 = vmatpush.bf16.msra.mxu0 %v4955
        %5245 = vmatpush.bf16.msra.mxu0 %v4954
        %5246 = vmatpush.bf16.msra.mxu0 %v4953
        %5247 = vmatmul.bf16.gmra.mxu0 %v4123
        %v5248 = vpop.f32.mrf.mxu0
        %v5249 = vadd.f32 %v5236, %v5248
        %v5250 = vpop.f32.mrf.mxu0
        %5251 = vdwg.mxu0
        %5252 = vmatpush.bf16.msra.mxu0 %v4968
        %5253 = vmatpush.bf16.msra.mxu0 %v4967
        %5254 = vmatpush.bf16.msra.mxu0 %v4966
        %5255 = vmatpush.bf16.msra.mxu0 %v4965
        %5256 = vmatpush.bf16.msra.mxu0 %v4964
        %5257 = vmatpush.bf16.msra.mxu0 %v4963
        %5258 = vmatpush.bf16.msra.mxu0 %v4962
        %5259 = vmatpush.bf16.msra.mxu0 %v4961
        %5260 = vmatmul.bf16.gmra.mxu0 %v4124
        %v5261 = vpop.f32.mrf.mxu0
        %v5262 = vadd.f32 %v5249, %v5261
        %v5263 = vpop.f32.mrf.mxu0
        %5264 = vdwg.mxu0
        %5265 = vmatpush.bf16.msra.mxu0 %v4976
        %5266 = vmatpush.bf16.msra.mxu0 %v4975
        %5267 = vmatpush.bf16.msra.mxu0 %v4974
        %5268 = vmatpush.bf16.msra.mxu0 %v4973
        %5269 = vmatpush.bf16.msra.mxu0 %v4972
        %5270 = vmatpush.bf16.msra.mxu0 %v4971
        %5271 = vmatpush.bf16.msra.mxu0 %v4970
        %5272 = vmatpush.bf16.msra.mxu0 %v4969
        %5273 = vmatmul.bf16.gmra.mxu0 %v4125
        %v5274 = vpop.f32.mrf.mxu0
        %v5275 = vadd.f32 %v5262, %v5274
        %v5276 = vpop.f32.mrf.mxu0
        %5277 = vdwg.mxu0
        %5278 = vmatpush.bf16.msra.mxu0 %v4984
        %5279 = vmatpush.bf16.msra.mxu0 %v4983
        %5280 = vmatpush.bf16.msra.mxu0 %v4982
        %5281 = vmatpush.bf16.msra.mxu0 %v4981
        %5282 = vmatpush.bf16.msra.mxu0 %v4980
        %5283 = vmatpush.bf16.msra.mxu0 %v4979
        %5284 = vmatpush.bf16.msra.mxu0 %v4978
        %5285 = vmatpush.bf16.msra.mxu0 %v4977
        %5286 = vmatmul.bf16.gmra.mxu0 %v4126
        %v5287 = vpop.f32.mrf.mxu0
        %v5288 = vadd.f32 %v5275, %v5287
        %v5289 = vpop.f32.mrf.mxu0
        %5290 = vdwg.mxu0
        %5291 = vmatpush.bf16.msra.mxu0 %v4992
        %5292 = vmatpush.bf16.msra.mxu0 %v4991
        %5293 = vmatpush.bf16.msra.mxu0 %v4990
        %5294 = vmatpush.bf16.msra.mxu0 %v4989
        %5295 = vmatpush.bf16.msra.mxu0 %v4988
        %5296 = vmatpush.bf16.msra.mxu0 %v4987
        %5297 = vmatpush.bf16.msra.mxu0 %v4986
        %5298 = vmatpush.bf16.msra.mxu0 %v4985
        %5299 = vmatmul.bf16.gmra.mxu0 %v4127
        %v5300 = vpop.f32.mrf.mxu0
        %v5301 = vadd.f32 %v5288, %v5300
        %v5302 = vpop.f32.mrf.mxu0
        %5303 = vdwg.mxu0
        %5304 = vmatpush.bf16.msra.mxu0 %v5000
        %5305 = vmatpush.bf16.msra.mxu0 %v4999
        %5306 = vmatpush.bf16.msra.mxu0 %v4998
        %5307 = vmatpush.bf16.msra.mxu0 %v4997
        %5308 = vmatpush.bf16.msra.mxu0 %v4996
        %5309 = vmatpush.bf16.msra.mxu0 %v4995
        %5310 = vmatpush.bf16.msra.mxu0 %v4994
        %5311 = vmatpush.bf16.msra.mxu0 %v4993
        %5312 = vmatmul.bf16.gmra.mxu0 %v4128
        %v5313 = vpop.f32.mrf.mxu0
        %v5314 = vadd.f32 %v5301, %v5313
        %v5315 = vpop.f32.mrf.mxu0
        %5316 = vdwg.mxu0
        %5317 = vmatpush.bf16.msra.mxu0 %v5008
        %5318 = vmatpush.bf16.msra.mxu0 %v5007
        %5319 = vmatpush.bf16.msra.mxu0 %v5006
        %5320 = vmatpush.bf16.msra.mxu0 %v5005
        %5321 = vmatpush.bf16.msra.mxu0 %v5004
        %5322 = vmatpush.bf16.msra.mxu0 %v5003
        %5323 = vmatpush.bf16.msra.mxu0 %v5002
        %5324 = vmatpush.bf16.msra.mxu0 %v5001
        %5325 = vmatmul.bf16.gmra.mxu0 %v4129
        %v5326 = vpop.f32.mrf.mxu0
        %v5327 = vadd.f32 %v5314, %v5326
        %v5328 = vpop.f32.mrf.mxu0
        %5329 = vdwg.mxu0
        %5330 = vmatpush.bf16.msra.mxu0 %v5016
        %5331 = vmatpush.bf16.msra.mxu0 %v5015
        %5332 = vmatpush.bf16.msra.mxu0 %v5014
        %5333 = vmatpush.bf16.msra.mxu0 %v5013
        %5334 = vmatpush.bf16.msra.mxu0 %v5012
        %5335 = vmatpush.bf16.msra.mxu0 %v5011
        %5336 = vmatpush.bf16.msra.mxu0 %v5010
        %5337 = vmatpush.bf16.msra.mxu0 %v5009
        %5338 = vmatmul.bf16.gmra.mxu0 %v4130
        %v5339 = vpop.f32.mrf.mxu0
        %v5340 = vadd.f32 %v5327, %v5339
        %v5341 = vpop.f32.mrf.mxu0
        %5342 = vdwg.mxu0
        %5343 = vmatpush.bf16.msra.mxu0 %v5024
        %5344 = vmatpush.bf16.msra.mxu0 %v5023
        %5345 = vmatpush.bf16.msra.mxu0 %v5022
        %5346 = vmatpush.bf16.msra.mxu0 %v5021
        %5347 = vmatpush.bf16.msra.mxu0 %v5020
        %5348 = vmatpush.bf16.msra.mxu0 %v5019
        %5349 = vmatpush.bf16.msra.mxu0 %v5018
        %5350 = vmatpush.bf16.msra.mxu0 %v5017
        %5351 = vmatmul.bf16.gmra.mxu0 %v4131
        %v5352 = vpop.f32.mrf.mxu0
        %v5353 = vadd.f32 %v5340, %v5352
        %v5354 = vpop.f32.mrf.mxu0
        %5355 = vdwg.mxu0
        %5356 = vmatpush.bf16.msra.mxu0 %v5032
        %5357 = vmatpush.bf16.msra.mxu0 %v5031
        %5358 = vmatpush.bf16.msra.mxu0 %v5030
        %5359 = vmatpush.bf16.msra.mxu0 %v5029
        %5360 = vmatpush.bf16.msra.mxu0 %v5028
        %5361 = vmatpush.bf16.msra.mxu0 %v5027
        %5362 = vmatpush.bf16.msra.mxu0 %v5026
        %5363 = vmatpush.bf16.msra.mxu0 %v5025
        %5364 = vmatmul.bf16.gmra.mxu0 %v4132
        %v5365 = vpop.f32.mrf.mxu0
        %v5366 = vadd.f32 %v5353, %v5365
        %v5367 = vpop.f32.mrf.mxu0
        %5368 = vdwg.mxu0
        %v5369 = vmax.f32 %v5366, 0.0
        %v5370 = vpack.c.bf16 %v5369, %v5369
        %v5371 = vld [vmem:[%s7] sm:$0xf]
        %v5372 = vld [vmem:[%s7 + $0x4] sm:$0xf]
        %v5373 = vld [vmem:[%s7 + $0x8] sm:$0xf]
        %v5374 = vld [vmem:[%s7 + $0xc] sm:$0xf]
        %v5375 = vld [vmem:[%s7 + $0x10] sm:$0xf]
        %v5376 = vld [vmem:[%s7 + $0x14] sm:$0xf]
        %v5377 = vld [vmem:[%s7 + $0x18] sm:$0xf]
        %v5378 = vld [vmem:[%s7 + $0x1c] sm:$0xf]
        %v5379 = vld [vmem:[%s7 + $0x20] sm:$0xf]
        %v5380 = vld [vmem:[%s7 + $0x24] sm:$0xf]
        %v5381 = vld [vmem:[%s7 + $0x28] sm:$0xf]
        %v5382 = vld [vmem:[%s7 + $0x2c] sm:$0xf]
        %v5383 = vld [vmem:[%s7 + $0x30] sm:$0xf]
        %v5384 = vld [vmem:[%s7 + $0x34] sm:$0xf]
        %v5385 = vld [vmem:[%s7 + $0x38] sm:$0xf]
        %v5386 = vld [vmem:[%s8] sm:$0x1]
        %v5388 = vperm.slane %v5386, 0
        %v5405 = vunpack.c.l.b16 %v5371
        %v5406 = vunpack.c.l.b16 %v5372
        %v5407 = vunpack.c.l.b16 %v5373
        %v5408 = vunpack.c.l.b16 %v5374
        %v5409 = vunpack.c.l.b16 %v5375
        %v5410 = vunpack.c.l.b16 %v5376
        %v5411 = vunpack.c.l.b16 %v5377
        %v5412 = vunpack.c.l.b16 %v5378
        %v5413 = vunpack.c.l.b16 %v5379
        %v5414 = vunpack.c.l.b16 %v5380
        %v5415 = vunpack.c.l.b16 %v5381
        %v5416 = vunpack.c.l.b16 %v5382
        %v5417 = vunpack.c.l.b16 %v5383
        %v5418 = vunpack.c.l.b16 %v5384
        %v5419 = vunpack.c.l.b16 %v5385
        %v5420 = vpack.c.b16 %v5406, %v5405
        %v5421 = vpack.c.b16 %v5408, %v5407
        %v5422 = vpack.c.b16 %v5410, %v5409
        %v5423 = vpack.c.b16 %v5412, %v5411
        %v5424 = vpack.c.b16 %v5414, %v5413
        %v5425 = vpack.c.b16 %v5416, %v5415
        %v5426 = vpack.c.b16 %v5418, %v5417
        %v5427 = vpack.c.b16 %v5419, %v5419
        %vm5435 = vcmask 982016
        %v5437 = vsel %vm5435, %v5370, 0
        %v5440 = vsel %vm2608, %v5427, 0
        %5442 = vmatpush.bf16.msra.mxu0 %v5440
        %5443 = vmatpush.bf16.msra.mxu0 %v5426
        %5444 = vmatpush.bf16.msra.mxu0 %v5425
        %5445 = vmatpush.bf16.msra.mxu0 %v5424
        %5446 = vmatpush.bf16.msra.mxu0 %v5423
        %5447 = vmatpush.bf16.msra.mxu0 %v5422
        %5448 = vmatpush.bf16.msra.mxu0 %v5421
        %5449 = vmatpush.bf16.msra.mxu0 %v5420
        %5450 = vmatmul.bf16.gmra.mxu0 %v5437
        %v5451 = vpop.f32.mrf.mxu0
        %v5452 = vadd.f32 %v5388, %v5451
        %v5453 = vpop.f32.mrf.mxu0
        %5454 = vdwg.mxu0
        %v5455 = vmax.f32 %v5452, 0.0
        %v5456 = vpack.c.bf16 %v5455, %v5455
        %v5457 = vld [vmem:[%s9] sm:$0xf]
        %v5458 = vld [vmem:[%s9 + $0x4] sm:$0xf]
        %v5459 = vld [vmem:[%s9 + $0x8] sm:$0xf]
        %v5460 = vld [vmem:[%s9 + $0xc] sm:$0xf]
        %v5461 = vld [vmem:[%s9 + $0x10] sm:$0xf]
        %v5462 = vld [vmem:[%s9 + $0x14] sm:$0xf]
        %v5463 = vld [vmem:[%s9 + $0x18] sm:$0xf]
        %v5464 = vld [vmem:[%s9 + $0x1c] sm:$0xf]
        %v5465 = vld [vmem:[%s9 + $0x20] sm:$0xf]
        %v5466 = vld [vmem:[%s9 + $0x24] sm:$0xf]
        %v5467 = vld [vmem:[%s9 + $0x28] sm:$0x3]
        %v5468 = vld [vmem:[%s10] sm:$0x1]
        %v5470 = vperm.slane %v5468, 0
        %v5483 = vunpack.c.l.b16 %v5457
        %v5484 = vunpack.c.l.b16 %v5458
        %v5485 = vunpack.c.l.b16 %v5459
        %v5486 = vunpack.c.l.b16 %v5460
        %v5487 = vunpack.c.l.b16 %v5461
        %v5488 = vunpack.c.l.b16 %v5462
        %v5489 = vunpack.c.l.b16 %v5463
        %v5490 = vunpack.c.l.b16 %v5464
        %v5491 = vunpack.c.l.b16 %v5465
        %v5492 = vunpack.c.l.b16 %v5466
        %v5493 = vunpack.c.l.b16 %v5467
        %v5494 = vpack.c.b16 %v5484, %v5483
        %v5495 = vpack.c.b16 %v5486, %v5485
        %v5496 = vpack.c.b16 %v5488, %v5487
        %v5497 = vpack.c.b16 %v5490, %v5489
        %v5498 = vpack.c.b16 %v5492, %v5491
        %v5499 = vpack.c.b16 %v5493, %v5493
        %vm5505 = vcmask 687104
        %v5507 = vsel %vm5505, %v5456, 0
        %v5510 = vsel %vm4084, %v5499, 0
        %5512 = vmatpush.bf16.msra.mxu0 0
        %5513 = vmatpush.bf16.msra.mxu0 0
        %5514 = vmatpush.bf16.msra.mxu0 %v5510
        %5515 = vmatpush.bf16.msra.mxu0 %v5498
        %5516 = vmatpush.bf16.msra.mxu0 %v5497
        %5517 = vmatpush.bf16.msra.mxu0 %v5496
        %5518 = vmatpush.bf16.msra.mxu0 %v5495
        %5519 = vmatpush.bf16.msra.mxu0 %v5494
        %5520 = vmatmul.bf16.gmra.mxu0 %v5507
        %v5521 = vpop.f32.mrf.mxu0
        %v5522 = vadd.f32 %v5470, %v5521
        %v5523 = vpop.f32.mrf.mxu0
        %5524 = vdwg.mxu0
        %5525 = vst [vmem:[%s789] sm:$0xf] %v5522
        %s5526 = sand.u32 %s272, 1
        %s5527 = sand.u32 %s272, 1
        %s5528 = smul.addr %s5527, 256
        %s5529 = scalar_lea.vmem [#allocation3], %s5528
        %s5530 = sand.u32 %s298, 1
        %s5531 = sand.u32 %s298, 1
        %s5532 = smul.addr %s5531, 128
        %s5533 = scalar_lea.vmem [#allocation4], %s5532
        %s5534 = sand.u32 %s324, 1
        %s5535 = scalar_lea.sflag [#allocation6], %s5534
        %s5536 = sand.u32 %s324, 1
        %s5537 = smul.addr %s5536, 4
        %s5538 = scalar_lea.vmem [#allocation5], %s5537
        // Predicated region
        $region88: #{lenet32_forward.1} parent=82 // pred_check
          %p5539 = pneg %p282
        $region89: #{lenet32_forward.1} parent=82 // pred_check_branch
          %5541 = sbr.rel (%p5539) target = $region91
        $region90: #{lenet32_forward.1} parent=82 // pred_region
          %s5542 = smul.u32 8, %s28
          %s5543 = smul.addr %s5542, 8
          %s5544 = scalar_lea.vmem %s11, %s5543
          // Predicated region
          $region92: #{lenet32_forward.1} parent=90 // pred_check
            _
          $region93: #{lenet32_forward.1} parent=90 // pred_check_branch
            %5546 = sbr.rel (0) target = $region95
          $region94: #{lenet32_forward.1} parent=90 // pred_region
            // Predicated region
            $region96: #{lenet32_forward.1} parent=94 // pred_check
              _
            $region97: #{lenet32_forward.1} parent=94 // pred_check_branch
              %5548 = sbr.rel (0) target = $region99
            $region98: #{lenet32_forward.1} parent=94 // pred_region
              loop: start=0, step=1, limit=1
              $region100: #{lenet32_forward.1} parent=98 // loop_pre_header
                _
              $region101: #{lenet32_forward.1} parent=98 // loop_header
                %s5550 = sphi 0, %s5554
                %p5551 = scmp.ge.s32.totalorder %s5550, 1
                %s5555 = sphi %s5529, %s5529
                %s5556 = sphi %s5544, %s5544
              $region102: #{lenet32_forward.1} parent=98 // loop_header_branch
                %5553 = sbr.rel (%p5551) target = $region106
              $region103: #{lenet32_forward.1} parent=98 // loop_body
                %v5557 = vld [vmem:[%s5555] sm:$0xff]
                %5558 = vst [vmem:[%s5556] sm:$0xff] %v5557
                %v5559 = vld [vmem:[%s5555 + $0x8] sm:$0xff]
                %5560 = vst [vmem:[%s5556 + $0x8] sm:$0xff] %v5559
                %v5561 = vld [vmem:[%s5555 + $0x10] sm:$0xff]
                %5562 = vst [vmem:[%s5556 + $0x10] sm:$0xff] %v5561
                %v5563 = vld [vmem:[%s5555 + $0x18] sm:$0xff]
                %5564 = vst [vmem:[%s5556 + $0x18] sm:$0xff] %v5563
                %v5565 = vld [vmem:[%s5555 + $0x20] sm:$0xff]
                %5566 = vst [vmem:[%s5556 + $0x20] sm:$0xff] %v5565
                %v5567 = vld [vmem:[%s5555 + $0x28] sm:$0xff]
                %5568 = vst [vmem:[%s5556 + $0x28] sm:$0xff] %v5567
                %v5569 = vld [vmem:[%s5555 + $0x30] sm:$0xff]
                %5570 = vst [vmem:[%s5556 + $0x30] sm:$0xff] %v5569
                %v5571 = vld [vmem:[%s5555 + $0x38] sm:$0xff]
                %5572 = vst [vmem:[%s5556 + $0x38] sm:$0xff] %v5571
                %v5573 = vld [vmem:[%s5555 + $0x40] sm:$0xff]
                %5574 = vst [vmem:[%s5556 + $0x80] sm:$0xff] %v5573
                %v5575 = vld [vmem:[%s5555 + $0x48] sm:$0xff]
                %5576 = vst [vmem:[%s5556 + $0x88] sm:$0xff] %v5575
                %v5577 = vld [vmem:[%s5555 + $0x50] sm:$0xff]
                %5578 = vst [vmem:[%s5556 + $0x90] sm:$0xff] %v5577
                %v5579 = vld [vmem:[%s5555 + $0x58] sm:$0xff]
                %5580 = vst [vmem:[%s5556 + $0x98] sm:$0xff] %v5579
                %v5581 = vld [vmem:[%s5555 + $0x60] sm:$0xff]
                %5582 = vst [vmem:[%s5556 + $0xa0] sm:$0xff] %v5581
                %v5583 = vld [vmem:[%s5555 + $0x68] sm:$0xff]
                %5584 = vst [vmem:[%s5556 + $0xa8] sm:$0xff] %v5583
                %v5585 = vld [vmem:[%s5555 + $0x70] sm:$0xff]
                %5586 = vst [vmem:[%s5556 + $0xb0] sm:$0xff] %v5585
                %v5587 = vld [vmem:[%s5555 + $0x78] sm:$0xff]
                %5588 = vst [vmem:[%s5556 + $0xb8] sm:$0xff] %v5587
                %v5589 = vld [vmem:[%s5555 + $0x80] sm:$0xff]
                %5590 = vst [vmem:[%s5556 + $0x100] sm:$0xff] %v5589
                %v5591 = vld [vmem:[%s5555 + $0x88] sm:$0xff]
                %5592 = vst [vmem:[%s5556 + $0x108] sm:$0xff] %v5591
                %v5593 = vld [vmem:[%s5555 + $0x90] sm:$0xff]
                %5594 = vst [vmem:[%s5556 + $0x110] sm:$0xff] %v5593
                %v5595 = vld [vmem:[%s5555 + $0x98] sm:$0xff]
                %5596 = vst [vmem:[%s5556 + $0x118] sm:$0xff] %v5595
                %v5597 = vld [vmem:[%s5555 + $0xa0] sm:$0xff]
                %5598 = vst [vmem:[%s5556 + $0x120] sm:$0xff] %v5597
                %v5599 = vld [vmem:[%s5555 + $0xa8] sm:$0xff]
                %5600 = vst [vmem:[%s5556 + $0x128] sm:$0xff] %v5599
                %v5601 = vld [vmem:[%s5555 + $0xb0] sm:$0xff]
                %5602 = vst [vmem:[%s5556 + $0x130] sm:$0xff] %v5601
                %v5603 = vld [vmem:[%s5555 + $0xb8] sm:$0xff]
                %5604 = vst [vmem:[%s5556 + $0x138] sm:$0xff] %v5603
                %v5605 = vld [vmem:[%s5555 + $0xc0] sm:$0xff]
                %5606 = vst [vmem:[%s5556 + $0x180] sm:$0xff] %v5605
                %v5607 = vld [vmem:[%s5555 + $0xc8] sm:$0xff]
                %5608 = vst [vmem:[%s5556 + $0x188] sm:$0xff] %v5607
                %v5609 = vld [vmem:[%s5555 + $0xd0] sm:$0xff]
                %5610 = vst [vmem:[%s5556 + $0x190] sm:$0xff] %v5609
                %v5611 = vld [vmem:[%s5555 + $0xd8] sm:$0xff]
                %5612 = vst [vmem:[%s5556 + $0x198] sm:$0xff] %v5611
                %v5613 = vld [vmem:[%s5555 + $0xe0] sm:$0xff]
                %5614 = vst [vmem:[%s5556 + $0x1a0] sm:$0xff] %v5613
                %v5615 = vld [vmem:[%s5555 + $0xe8] sm:$0xff]
                %5616 = vst [vmem:[%s5556 + $0x1a8] sm:$0xff] %v5615
                %v5617 = vld [vmem:[%s5555 + $0xf0] sm:$0xff]
                %5618 = vst [vmem:[%s5556 + $0x1b0] sm:$0xff] %v5617
                %v5619 = vld [vmem:[%s5555 + $0xf8] sm:$0xff]
                %5620 = vst [vmem:[%s5556 + $0x1b8] sm:$0xff] %v5619
              $region104: #{lenet32_forward.1} parent=98 // loop_footer
                %s5554 = sadd.s32 1, %s5550
              $region105: #{lenet32_forward.1} parent=98 // loop_footer_branch
                %5549 = sbr.rel target = $region101
              $region106: #{lenet32_forward.1} parent=98 // loop_exit
                _
            $region99: #{lenet32_forward.1} parent=94 // pred_fallthru
              _
            // Predicated region
            $region107: #{lenet32_forward.1} parent=94 // pred_check
              _
            $region108: #{lenet32_forward.1} parent=94 // pred_check_branch
              %5622 = sbr.rel target = $region110
            $region109: #{lenet32_forward.1} parent=94 // pred_region
              _
            $region110: #{lenet32_forward.1} parent=94 // pred_fallthru
              _
          $region95: #{lenet32_forward.1} parent=90 // pred_fallthru
            _
          %5623 = vnop
        $region91: #{lenet32_forward.1} parent=82 // pred_fallthru
          _
        // Predicated region
        $region111: #{lenet32_forward.1} parent=82 // pred_check
          %p5624 = pneg %p308
        $region112: #{lenet32_forward.1} parent=82 // pred_check_branch
          %5626 = sbr.rel (%p5624) target = $region114
        $region113: #{lenet32_forward.1} parent=82 // pred_region
          %s5627 = smul.u32 8, %s28
          %s5628 = smul.addr %s5627, 8
          %s5629 = scalar_lea.vmem %s12, %s5628
          // Predicated region
          $region115: #{lenet32_forward.1} parent=113 // pred_check
            _
          $region116: #{lenet32_forward.1} parent=113 // pred_check_branch
            %5631 = sbr.rel (0) target = $region118
          $region117: #{lenet32_forward.1} parent=113 // pred_region
            // Predicated region
            $region119: #{lenet32_forward.1} parent=117 // pred_check
              _
            $region120: #{lenet32_forward.1} parent=117 // pred_check_branch
              %5633 = sbr.rel (0) target = $region122
            $region121: #{lenet32_forward.1} parent=117 // pred_region
              loop: start=0, step=1, limit=1
              $region123: #{lenet32_forward.1} parent=121 // loop_pre_header
                _
              $region124: #{lenet32_forward.1} parent=121 // loop_header
                %s5635 = sphi 0, %s5639
                %p5636 = scmp.ge.s32.totalorder %s5635, 1
                %s5640 = sphi %s5533, %s5533
                %s5641 = sphi %s5629, %s5629
              $region125: #{lenet32_forward.1} parent=121 // loop_header_branch
                %5638 = sbr.rel (%p5636) target = $region129
              $region126: #{lenet32_forward.1} parent=121 // loop_body
                %v5642 = vld [vmem:[%s5640] sm:$0xff]
                %5643 = vst [vmem:[%s5641] sm:$0xff] %v5642
                %v5644 = vld [vmem:[%s5640 + $0x8] sm:$0xff]
                %5645 = vst [vmem:[%s5641 + $0x8] sm:$0xff] %v5644
                %v5646 = vld [vmem:[%s5640 + $0x10] sm:$0xff]
                %5647 = vst [vmem:[%s5641 + $0x10] sm:$0xff] %v5646
                %v5648 = vld [vmem:[%s5640 + $0x18] sm:$0xff]
                %5649 = vst [vmem:[%s5641 + $0x18] sm:$0xff] %v5648
                %v5650 = vld [vmem:[%s5640 + $0x20] sm:$0xff]
                %5651 = vst [vmem:[%s5641 + $0x20] sm:$0xff] %v5650
                %v5652 = vld [vmem:[%s5640 + $0x28] sm:$0xff]
                %5653 = vst [vmem:[%s5641 + $0x28] sm:$0xff] %v5652
                %v5654 = vld [vmem:[%s5640 + $0x30] sm:$0xff]
                %5655 = vst [vmem:[%s5641 + $0x30] sm:$0xff] %v5654
                %v5656 = vld [vmem:[%s5640 + $0x38] sm:$0xff]
                %5657 = vst [vmem:[%s5641 + $0x38] sm:$0xff] %v5656
                %v5658 = vld [vmem:[%s5640 + $0x40] sm:$0xff]
                %5659 = vst [vmem:[%s5641 + $0x80] sm:$0xff] %v5658
                %v5660 = vld [vmem:[%s5640 + $0x48] sm:$0xff]
                %5661 = vst [vmem:[%s5641 + $0x88] sm:$0xff] %v5660
                %v5662 = vld [vmem:[%s5640 + $0x50] sm:$0xff]
                %5663 = vst [vmem:[%s5641 + $0x90] sm:$0xff] %v5662
                %v5664 = vld [vmem:[%s5640 + $0x58] sm:$0xff]
                %5665 = vst [vmem:[%s5641 + $0x98] sm:$0xff] %v5664
                %v5666 = vld [vmem:[%s5640 + $0x60] sm:$0xff]
                %5667 = vst [vmem:[%s5641 + $0xa0] sm:$0xff] %v5666
                %v5668 = vld [vmem:[%s5640 + $0x68] sm:$0xff]
                %5669 = vst [vmem:[%s5641 + $0xa8] sm:$0xff] %v5668
                %v5670 = vld [vmem:[%s5640 + $0x70] sm:$0xff]
                %5671 = vst [vmem:[%s5641 + $0xb0] sm:$0xff] %v5670
                %v5672 = vld [vmem:[%s5640 + $0x78] sm:$0xff]
                %5673 = vst [vmem:[%s5641 + $0xb8] sm:$0xff] %v5672
              $region127: #{lenet32_forward.1} parent=121 // loop_footer
                %s5639 = sadd.s32 1, %s5635
              $region128: #{lenet32_forward.1} parent=121 // loop_footer_branch
                %5634 = sbr.rel target = $region124
              $region129: #{lenet32_forward.1} parent=121 // loop_exit
                _
            $region122: #{lenet32_forward.1} parent=117 // pred_fallthru
              _
            // Predicated region
            $region130: #{lenet32_forward.1} parent=117 // pred_check
              _
            $region131: #{lenet32_forward.1} parent=117 // pred_check_branch
              %5675 = sbr.rel target = $region133
            $region132: #{lenet32_forward.1} parent=117 // pred_region
              _
            $region133: #{lenet32_forward.1} parent=117 // pred_fallthru
              _
          $region118: #{lenet32_forward.1} parent=113 // pred_fallthru
            _
          %5676 = vnop
        $region114: #{lenet32_forward.1} parent=82 // pred_fallthru
          _
        // Predicated region
        $region134: #{lenet32_forward.1} parent=82 // pred_check
          %p5677 = pneg %p334
        $region135: #{lenet32_forward.1} parent=82 // pred_check_branch
          %5679 = sbr.rel (%p5677) target = $region137
        $region136: #{lenet32_forward.1} parent=82 // pred_region
          %5681 = vsyncadd %s5535, 0
          %s5682 = smul.addr %s28, 4
          %s5683 = scalar_lea.hbm %s13, %s5682
          %s5685 = sshll.u32 %s5538, 4
          %s5686 = int_to_ptr.vmem [resolvable:$true] %s5685
          %s5687 = sshll.u32 %s5683, 4
          %s5688 = int_to_ptr.hbm [resolvable:$true] %s5687
          %5690 = dma.vmem_to_hbm [thread:$0]  %s5686, 64, %s5688, %s5535
        $region137: #{lenet32_forward.1} parent=82 // pred_fallthru
          _
      $region83: #{lenet32_forward.1} parent=5 // pred_fallthru
        _
      %p5691 = scmp.le.s32.totalorder 2, %s23
      // Predicated region
      $region138: #{lenet32_forward.1} parent=5 // pred_check
        %p5692 = pneg %p5691
      $region139: #{lenet32_forward.1} parent=5 // pred_check_branch
        %5694 = sbr.rel (%p5692) target = $region141
      $region140: #{lenet32_forward.1} parent=5 // pred_region
        %s5695 = ssub.s32 %s23, 2
        // Predicated region
        $region142: #{lenet32_forward.1} parent=140 // pred_check
          %p5696 = pneg %p288
        $region143: #{lenet32_forward.1} parent=140 // pred_check_branch
          %5698 = sbr.rel (%p5696) target = $region145
        $region144: #{lenet32_forward.1} parent=140 // pred_region
          %s5699 = sand.u32 %s273, 1
          %s5700 = sand.u32 %s273, 1
          %s5701 = smul.addr %s5700, 256
          %s5702 = scalar_lea.vmem [#allocation3], %s5701
        $region145: #{lenet32_forward.1} parent=140 // pred_fallthru
          _
        // Predicated region
        $region146: #{lenet32_forward.1} parent=140 // pred_check
          %p5703 = pneg %p314
        $region147: #{lenet32_forward.1} parent=140 // pred_check_branch
          %5705 = sbr.rel (%p5703) target = $region149
        $region148: #{lenet32_forward.1} parent=140 // pred_region
          %s5706 = sand.u32 %s299, 1
          %s5707 = sand.u32 %s299, 1
          %s5708 = smul.addr %s5707, 128
          %s5709 = scalar_lea.vmem [#allocation4], %s5708
        $region149: #{lenet32_forward.1} parent=140 // pred_fallthru
          _
        // Predicated region
        $region150: #{lenet32_forward.1} parent=140 // pred_check
          %p5710 = pneg %p340
        $region151: #{lenet32_forward.1} parent=140 // pred_check_branch
          %5712 = sbr.rel (%p5710) target = $region153
        $region152: #{lenet32_forward.1} parent=140 // pred_region
          %s5713 = sand.u32 %s325, 1
          %s5714 = scalar_lea.sflag [#allocation6], %s5713
          %s5715 = sand.u32 %s325, 1
          %s5716 = smul.addr %s5715, 4
          %s5717 = scalar_lea.vmem [#allocation5], %s5716
          %5719 = dma.done %s5714, 64
        $region153: #{lenet32_forward.1} parent=140 // pred_fallthru
          _
      $region141: #{lenet32_forward.1} parent=5 // pred_fallthru
        _
    $region6: #{lenet32_forward.1} parent=1 // loop_footer
      %s27 = sadd.s32 1, %s23
    $region7: #{lenet32_forward.1} parent=1 // loop_footer_branch
      %22 = sbr.rel target = $region3
    $region8: #{lenet32_forward.1} parent=1 // loop_exit
      _
    %5720 = vsyncpa [#allocation6], 1
    %s5721 = scalar_lea.sflag [#allocation6], 1
    %5722 = vsyncpa %s5721, 1

</llo_original>
